<compile_context>
chip_gen: v7x
topology: tpu7x:2x2x1
jax: 0.10.0
libtpu: 0.0.40
codegen_flags: <defaults>
</compile_context>

<pallas_src>
import functools

import jax
import jax.numpy as jnp
from jax.experimental import pallas as pl
from jax.experimental.pallas import tpu as pltpu

F32 = jnp.float32
# Matmul operand dtype.  Set to jnp.bfloat16 on v6e/v7x for ~2x MXU throughput
# (accumulation stays f32 via preferred_element_type); kept f32 here so the
# forward stays numerically closest to the PyTorch reference.
MM_DTYPE = jnp.float32

_VMEM = pl.BlockSpec(memory_space=pltpu.MemorySpace.VMEM)
_VMEM_LIMIT = 48 * 1024 * 1024
_NOGRID_PARAMS = pltpu.CompilerParams(vmem_limit_bytes=_VMEM_LIMIT)


def _mm(a, b):
    return jnp.dot(a.astype(MM_DTYPE), b.astype(MM_DTYPE),
                   preferred_element_type=F32)


def _bn(y, gamma, beta, count):
    """BatchNorm1d training-mode forward, single pass (sum & sum-of-squares).

    y: [C, N] with batch*time flattened on the lane axis; gamma/beta: [C, 1].
    """
    s = jnp.sum(y, axis=1, keepdims=True)
    ss = jnp.sum(y * y, axis=1, keepdims=True)
    mean = s / count
    var = jnp.maximum(ss / count - mean * mean, 0.0)
    return (y - mean) * jax.lax.rsqrt(var + 1e-5) * gamma + beta


# --------------------------------------------------------------------------
# Kernel A: conv bank + maxpool + projection convs + residual
# --------------------------------------------------------------------------
def _conv_stack_kernel(x_ref, *refs, K, B, T, maxpad):
    """x_ref: [Cin, B*Tpad] channel-major, each batch segment zero-padded by
    `maxpad` on both sides (Tpad = T + 2*maxpad).

    refs = K * (w_flat [C, k*Cin], gamma [C,1], beta [C,1])       conv bank
           + (w1_flat [P0, 3*K*C], gamma, beta)                   conv_project1
           + (w2_flat [P1, 3*P0],  gamma, beta)                   conv_project2
           + out_ref [P1, B*T]
    """
    bank_refs = refs[:3 * K]
    (w1_ref, g1_ref, be1_ref, w2_ref, g2_ref, be2_ref, out_ref) = refs[3 * K:]

    tpad = T + 2 * maxpad
    x = x_ref[...].astype(F32)                               # [Cin, B*Tpad]

    # ---- conv1d bank: one im2col matmul per kernel width ----
    branch_outs = []
    for idx in range(K):
        k = idx + 1
        pad = k // 2
        lout = T + 2 * pad - k + 1                           # T (odd k) / T+1 (even k)
        off = maxpad - pad
        w_flat = bank_refs[3 * idx][...]                     # [C, k*Cin]
        gamma = bank_refs[3 * idx + 1][...]
        beta = bank_refs[3 * idx + 2][...]
        # im2col: rows = (tap j, cin), cols = (b, t) flattened b-major.
        per_b = []
        for b in range(B):
            base = b * tpad + off
            taps = [x[:, base + j:base + j + lout] for j in range(k)]
            per_b.append(jnp.concatenate(taps, axis=0))      # [k*Cin, lout]
        xcol = jnp.concatenate(per_b, axis=1)                # [k*Cin, B*lout]
        y = jnp.maximum(_mm(w_flat, xcol), 0.0)              # conv + ReLU
        y = _bn(y, gamma, beta, float(B * lout))             # BN over full conv output
        # c[:, :, :seq_len]: slice each batch segment back to T columns.
        branch_outs.append(
            jnp.concatenate([y[:, b * lout:b * lout + T] for b in range(B)], axis=1))
    bank = jnp.concatenate(branch_outs, axis=0)              # [K*C, B*T]
    kc = bank.shape[0]

    # ---- maxpool(k=2, s=1, p=1)[:, :, :T] + conv_project1 im2col ----
    neg = jnp.full((kc, 1), -jnp.inf, F32)
    zp1 = jnp.zeros((kc, 1), F32)
    cols1 = []
    for b in range(B):
        seg = bank[:, b * T:(b + 1) * T]
        pooled = jnp.maximum(seg, jnp.concatenate([neg, seg[:, :T - 1]], axis=1))
        padded = jnp.concatenate([zp1, pooled, zp1], axis=1)  # [K*C, T+2]
        cols1.append(jnp.concatenate([padded[:, j:j + T] for j in range(3)], axis=0))
    xcol1 = jnp.concatenate(cols1, axis=1)                   # [3*K*C, B*T]
    y1 = jnp.maximum(_mm(w1_ref[...], xcol1), 0.0)
    y1 = _bn(y1, g1_ref[...], be1_ref[...], float(B * T))    # [P0, B*T]

    # ---- conv_project2 (no ReLU) ----
    p0 = y1.shape[0]
    zp2 = jnp.zeros((p0, 1), F32)
    cols2 = []
    for b in range(B):
        seg = y1[:, b * T:(b + 1) * T]
        padded = jnp.concatenate([zp2, seg, zp2], axis=1)
        cols2.append(jnp.concatenate([padded[:, j:j + T] for j in range(3)], axis=0))
    xcol2 = jnp.concatenate(cols2, axis=1)                   # [3*P0, B*T]
    y2 = _bn(_mm(w2_ref[...], xcol2), g2_ref[...], be2_ref[...], float(B * T))

    # ---- residual add (requires proj_channels[-1] == in_channels) ----
    res = jnp.concatenate(
        [x[:, b * tpad + maxpad:b * tpad + maxpad + T] for b in range(B)], axis=1)
    out_ref[...] = (y2 + res).astype(out_ref.dtype)


# --------------------------------------------------------------------------
# Kernel B: pre_highway + highway stack + hoisted GRU input projection
# --------------------------------------------------------------------------
def _highway_gx_kernel(*refs, num_highways, mismatch):
    """Channel-major activations [C, tile] over a tile of B*T columns.

    refs = xr [P1, tile], (wp [C, P1])?, num_highways * (w1, b1, w2, b2),
           wih6 [6H, C], bih6 [6H, 1], out [tile, 6H].
    """
    i = 0
    x_ref = refs[i]; i += 1
    wp_ref = None
    if mismatch:
        wp_ref = refs[i]; i += 1
    hw_refs = refs[i:i + 4 * num_highways]; i += 4 * num_highways
    wih_ref, bih_ref, out_ref = refs[i], refs[i + 1], refs[i + 2]

    h = x_ref[...].astype(F32)                               # [P1, tile]
    if mismatch:
        h = _mm(wp_ref[...], h)                              # [C, tile]
    for l in range(num_highways):
        w1 = hw_refs[4 * l][...]
        b1 = hw_refs[4 * l + 1][...]
        w2 = hw_refs[4 * l + 2][...]
        b2 = hw_refs[4 * l + 3][...]
        x1 = _mm(w1, h) + b1
        x2 = _mm(w2, h) + b2
        g = jax.nn.sigmoid(x2)
        h = g * jnp.maximum(x1, 0.0) + (1.0 - g) * h
    gx = _mm(wih_ref[...], h) + bih_ref[...]                 # [6H, tile]
    out_ref[...] = gx.T.astype(out_ref.dtype)                # [tile, 6H]


# --------------------------------------------------------------------------
# Kernel C: bidirectional GRU recurrence (input projections precomputed)
# --------------------------------------------------------------------------
def _gru_kernel(gx_ref, whh_f_ref, bhh_f_ref, whh_b_ref, bhh_b_ref,
                out_f_ref, out_b_ref, hf_ref, hb_ref):
    """gx_ref: [T, B, 6H] = x @ W_ih^T + b_ih for (forward | backward).
    PyTorch gate order r|z|n, zero initial state."""
    T = gx_ref.shape[0]
    H = hf_ref.shape[-1]
    hf_ref[...] = jnp.zeros(hf_ref.shape, F32)
    hb_ref[...] = jnp.zeros(hb_ref.shape, F32)

    whh_f = whh_f_ref[...]; bhh_f = bhh_f_ref[...]
    whh_b = whh_b_ref[...]; bhh_b = bhh_b_ref[...]

    def cell(gx, h, whh, bhh):
        gh = _mm(h, whh) + bhh
        r = jax.nn.sigmoid(gx[:, :H] + gh[:, :H])
        z = jax.nn.sigmoid(gx[:, H:2 * H] + gh[:, H:2 * H])
        n = jnp.tanh(gx[:, 2 * H:] + r * gh[:, 2 * H:])
        return (1.0 - z) * n + z * h

    @pl.loop(0, T)
    def _(t):
        # forward direction
        h_f = cell(gx_ref[t][:, :3 * H].astype(F32), hf_ref[...], whh_f, bhh_f)
        hf_ref[...] = h_f
        out_f_ref[t] = h_f.astype(out_f_ref.dtype)
        # backward direction
        tb = T - 1 - t
        h_b = cell(gx_ref[tb][:, 3 * H:].astype(F32), hb_ref[...], whh_b, bhh_b)
        hb_ref[...] = h_b
        out_b_ref[tb] = h_b.astype(out_b_ref.dtype)


# --------------------------------------------------------------------------
# Wrappers
# --------------------------------------------------------------------------
def conv_stack(xflat, bank, proj1, proj2, *, K, B, T, maxpad):
    args = [xflat]
    for p in bank:
        args += [p["wf"], p["gamma"], p["beta"]]
    args += [proj1["wf"], proj1["gamma"], proj1["beta"],
             proj2["wf"], proj2["gamma"], proj2["beta"]]
    out_c = proj2["wf"].shape[0]
    kern = functools.partial(_conv_stack_kernel, K=K, B=B, T=T, maxpad=maxpad)
    return pl.pallas_call(
        kern,
        out_shape=jax.ShapeDtypeStruct((out_c, B * T), F32),
        in_specs=[_VMEM] * len(args),
        out_specs=_VMEM,
        compiler_params=_NOGRID_PARAMS,
    )(*args)


def highway_gx(xr, wp, highways, wih6, bih6):
    p1, bt = xr.shape
    six_h = wih6.shape[0]
    tile = bt if bt <= 512 else 512
    grid = (pl.cdiv(bt, tile),)
    mismatch = wp is not None

    args = [xr]
    in_specs = [pl.BlockSpec((p1, tile), lambda i: (0, i))]

    def add_full(a):
        args.append(a)
        in_specs.append(pl.BlockSpec(a.shape, lambda i: (0, 0)))

    if mismatch:
        add_full(wp)
    for hp in highways:
        add_full(hp["w1"]); add_full(hp["b1"])
        add_full(hp["w2"]); add_full(hp["b2"])
    add_full(wih6)
    add_full(bih6)

    kern = functools.partial(_highway_gx_kernel,
                             num_highways=len(highways), mismatch=mismatch)
    return pl.pallas_call(
        kern,
        out_shape=jax.ShapeDtypeStruct((bt, six_h), F32),
        grid=grid,
        in_specs=in_specs,
        out_specs=pl.BlockSpec((tile, six_h), lambda i: (i, 0)),
        compiler_params=pltpu.CompilerParams(
            dimension_semantics=("parallel",),
            vmem_limit_bytes=_VMEM_LIMIT),
    )(*args)


def bigru(gx_tm, whh_f, bhh_f, whh_b, bhh_b):
    T, B, _ = gx_tm.shape
    H = whh_f.shape[0]
    out_f, out_b = pl.pallas_call(
        _gru_kernel,
        out_shape=(jax.ShapeDtypeStruct((T, B, H), F32),
                   jax.ShapeDtypeStruct((T, B, H), F32)),
        in_specs=[_VMEM] * 5,
        out_specs=(_VMEM, _VMEM),
        scratch_shapes=[pltpu.VMEM((B, H), F32), pltpu.VMEM((B, H), F32)],
        compiler_params=_NOGRID_PARAMS,
    )(gx_tm, whh_f, bhh_f, whh_b, bhh_b)
    return out_f, out_b


def _flatten_conv_w(w):
    """[Cout, Cin, k] -> [Cout, k*Cin], column index = tap*Cin + cin (matches
    the in-kernel im2col row order)."""
    co, ci, k = w.shape
    return jnp.transpose(w, (0, 2, 1)).reshape(co, k * ci)


# --------------------------------------------------------------------------
# Parameter init (deterministic, mirrors nn.Module shapes / layouts)
# --------------------------------------------------------------------------
def init_cbhg_params(key, K, in_channels, channels, proj_channels, num_highways):
    keys = iter(jax.random.split(key, 256))

    def u(shape, scale=0.1):
        return jax.random.uniform(next(keys), shape, F32, -scale, scale)

    params = {}
    params["bank"] = [
        dict(w=u((channels, in_channels, k)),            # Conv1d weight [Cout, Cin, k]
             gamma=1.0 + u((channels, 1)),
             beta=u((channels, 1)))
        for k in range(1, K + 1)
    ]
    params["proj1"] = dict(w=u((proj_channels[0], K * channels, 3)),
                           gamma=1.0 + u((proj_channels[0], 1)),
                           beta=u((proj_channels[0], 1)))
    params["proj2"] = dict(w=u((proj_channels[1], proj_channels[0], 3)),
                           gamma=1.0 + u((proj_channels[1], 1)),
                           beta=u((proj_channels[1], 1)))
    if proj_channels[-1] != channels:                    # highway_mismatch == True
        params["pre_highway"] = u((channels, proj_channels[-1]))   # W (y = W @ x_cm)
    params["highways"] = [
        dict(w1=u((channels, channels)),                 # PyTorch [out, in] layout
             b1=jnp.zeros((channels, 1), F32),           # W1.bias.data.fill_(0.0)
             w2=u((channels, channels)),
             b2=u((channels, 1)))
        for _ in range(num_highways)
    ]
    H = channels
    for d in ("f", "b"):                                 # forward / reverse directions
        params[f"gru_wih_{d}"] = u((3 * H, channels))    # W_ih [3H, C], gate order r|z|n
        params[f"gru_whh_{d}"] = u((H, 3 * H))           # (W_hh)^T for h @ W
        params[f"gru_bih_{d}"] = u((3 * H, 1))
        params[f"gru_bhh_{d}"] = u((1, 3 * H))
    return params


# --------------------------------------------------------------------------
# CBHG forward
# --------------------------------------------------------------------------
def cbhg_forward(params, x, *, K, channels, proj_channels, num_highways):
    B, cin, T = x.shape
    maxpad = K // 2
    H = channels

    # channel-major input, per-batch zero padding, time flattened onto lanes.
    xcbt = jnp.transpose(x, (1, 0, 2))                       # [Cin, B, T]
    xpad = jnp.pad(xcbt, ((0, 0), (0, 0), (maxpad, maxpad)))
    xflat = xpad.reshape(cin, B * (T + 2 * maxpad))

    bank = [dict(wf=_flatten_conv_w(p["w"]), gamma=p["gamma"], beta=p["beta"])
            for p in params["bank"]]
    proj1 = dict(wf=_flatten_conv_w(params["proj1"]["w"]),
                 gamma=params["proj1"]["gamma"], beta=params["proj1"]["beta"])
    proj2 = dict(wf=_flatten_conv_w(params["proj2"]["w"]),
                 gamma=params["proj2"]["gamma"], beta=params["proj2"]["beta"])

    # Kernel A: conv bank + maxpool + projections + residual  -> [P1, B*T]
    xr = conv_stack(xflat, bank, proj1, proj2, K=K, B=B, T=T, maxpad=maxpad)

    # Kernel B: pre_highway + highways + hoisted GRU input projection.
    wih6 = jnp.concatenate([params["gru_wih_f"], params["gru_wih_b"]], axis=0)
    bih6 = jnp.concatenate([params["gru_bih_f"], params["gru_bih_b"]], axis=0)
    gx_rows = highway_gx(xr, params.get("pre_highway", None),
                         params["highways"], wih6, bih6)     # [B*T, 6H]

    # Reorder (b, t)-major rows to time-major for the sequential recurrence.
    gx_tm = jnp.transpose(gx_rows.reshape(B, T, 6 * H), (1, 0, 2))   # [T, B, 6H]

    # Kernel C: bidirectional GRU recurrence.
    out_f, out_b = bigru(gx_tm, params["gru_whh_f"], params["gru_bhh_f"],
                         params["gru_whh_b"], params["gru_bhh_b"])
    out = jnp.concatenate([out_f, out_b], axis=-1)           # [T, B, 2H]
    return jnp.transpose(out, (1, 0, 2))                     # [B, T, 2H] (batch_first)


# --------------------------------------------------------------------------
if __name__ == "__main__":
    K = 4
    B, in_channels, T = 2, 16, 16
    channels = 32
    proj_channels = (64, 16)       # proj_channels[-1] == in_channels (residual add)
    num_highways = 2               # 16 != 32 -> highway_mismatch path exercised

    key = jax.random.PRNGKey(0)
    pkey, xkey = jax.random.split(key)
    params = init_cbhg_params(pkey, K, in_channels, channels, proj_channels, num_highways)
    x = jax.random.normal(xkey, (B, in_channels, T), F32)    # PyTorch NCW input

    fwd = jax.jit(functools.partial(
        cbhg_forward, K=K, channels=channels,
        proj_channels=proj_channels, num_highways=num_highways))
    out = fwd(params, x)
    jax.block_until_ready(out)
    assert out.shape == (B, T, 2 * channels), out.shape
    assert bool(jnp.all(jnp.isfinite(out)))
    print("KERNEL_OK")
</pallas_src>

<mosaic_0001>
module attributes {stable_mosaic.version = 11 : i64} {
  func.func @_conv_stack_kernel(%arg0: memref<16x40xf32, #tpu.memory_space<vmem>>, %arg1: memref<32x16xf32, #tpu.memory_space<vmem>>, %arg2: memref<32x1xf32, #tpu.memory_space<vmem>>, %arg3: memref<32x1xf32, #tpu.memory_space<vmem>>, %arg4: memref<32x32xf32, #tpu.memory_space<vmem>>, %arg5: memref<32x1xf32, #tpu.memory_space<vmem>>, %arg6: memref<32x1xf32, #tpu.memory_space<vmem>>, %arg7: memref<32x48xf32, #tpu.memory_space<vmem>>, %arg8: memref<32x1xf32, #tpu.memory_space<vmem>>, %arg9: memref<32x1xf32, #tpu.memory_space<vmem>>, %arg10: memref<32x64xf32, #tpu.memory_space<vmem>>, %arg11: memref<32x1xf32, #tpu.memory_space<vmem>>, %arg12: memref<32x1xf32, #tpu.memory_space<vmem>>, %arg13: memref<64x384xf32, #tpu.memory_space<vmem>>, %arg14: memref<64x1xf32, #tpu.memory_space<vmem>>, %arg15: memref<64x1xf32, #tpu.memory_space<vmem>>, %arg16: memref<16x192xf32, #tpu.memory_space<vmem>>, %arg17: memref<16x1xf32, #tpu.memory_space<vmem>>, %arg18: memref<16x1xf32, #tpu.memory_space<vmem>>, %arg19: memref<16x32xf32, #tpu.memory_space<vmem>>) attributes {dimension_semantics = [], scalar_prefetch = 0 : i64, scratch_operands = 0 : i64, tpu.core_type = #tpu.core_type<tc>} {
    %c0 = arith.constant 0 : index
    %c0_0 = arith.constant 0 : index
    %0 = vector.load %arg0[%c0, %c0_0] : memref<16x40xf32, #tpu.memory_space<vmem>>, vector<16x40xf32>
    %c0_1 = arith.constant 0 : index
    %c0_2 = arith.constant 0 : index
    %1 = vector.load %arg1[%c0_1, %c0_2] : memref<32x16xf32, #tpu.memory_space<vmem>>, vector<32x16xf32>
    %c0_3 = arith.constant 0 : index
    %c0_4 = arith.constant 0 : index
    %2 = vector.load %arg2[%c0_3, %c0_4] : memref<32x1xf32, #tpu.memory_space<vmem>>, vector<32x1xf32>
    %c0_5 = arith.constant 0 : index
    %c0_6 = arith.constant 0 : index
    %3 = vector.load %arg3[%c0_5, %c0_6] : memref<32x1xf32, #tpu.memory_space<vmem>>, vector<32x1xf32>
    %4 = vector.extract_strided_slice %0 {offsets = [0, 2], sizes = [16, 16], strides = [1, 1]} : vector<16x40xf32> to vector<16x16xf32>
    %5 = vector.extract_strided_slice %0 {offsets = [0, 22], sizes = [16, 16], strides = [1, 1]} : vector<16x40xf32> to vector<16x16xf32>
    %6 = tpu.concatenate %4, %5 in 1 : vector<16x16xf32>, vector<16x16xf32> -> vector<16x32xf32>
    %cst = arith.constant dense<0.000000e+00> : vector<32x32xf32>
    %7 = tpu.matmul %1, %6, %cst {dimension_numbers = #tpu.dot_dimension_numbers<[1], [0], [0], [1], [0, 0, 1, 1], [], []>} : vector<32x16xf32>, vector<16x32xf32>, vector<32x32xf32> -> vector<32x32xf32>
    %cst_7 = arith.constant 0.000000e+00 : f32
    %8 = vector.broadcast %cst_7 : f32 to vector<32x32xf32>
    %9 = arith.maximumf %7, %8 : vector<32x32xf32>
    %cst_8 = arith.constant dense<0.000000e+00> : vector<32xf32>
    %10 = vector.multi_reduction <add>, %9, %cst_8 [1] : vector<32x32xf32> to vector<32xf32>
    %11 = vector.shape_cast %10 : vector<32xf32> to vector<32x1xf32>
    %12 = arith.mulf %9, %9 : vector<32x32xf32>
    %cst_9 = arith.constant dense<0.000000e+00> : vector<32xf32>
    %13 = vector.multi_reduction <add>, %12, %cst_9 [1] : vector<32x32xf32> to vector<32xf32>
    %14 = vector.shape_cast %13 : vector<32xf32> to vector<32x1xf32>
    %cst_10 = arith.constant 3.200000e+01 : f32
    %15 = vector.broadcast %cst_10 : f32 to vector<32x1xf32>
    %16 = arith.divf %11, %15 : vector<32x1xf32>
    %cst_11 = arith.constant 3.200000e+01 : f32
    %17 = vector.broadcast %cst_11 : f32 to vector<32x1xf32>
    %18 = arith.divf %14, %17 : vector<32x1xf32>
    %19 = arith.mulf %16, %16 : vector<32x1xf32>
    %20 = arith.subf %18, %19 : vector<32x1xf32>
    %cst_12 = arith.constant 0.000000e+00 : f32
    %21 = vector.broadcast %cst_12 : f32 to vector<32x1xf32>
    %22 = arith.maximumf %20, %21 : vector<32x1xf32>
    %23 = vector.broadcast %16 : vector<32x1xf32> to vector<32x32xf32>
    %24 = arith.subf %9, %23 : vector<32x32xf32>
    %cst_13 = arith.constant 9.99999974E-6 : f32
    %25 = vector.broadcast %cst_13 : f32 to vector<32x1xf32>
    %26 = arith.addf %22, %25 : vector<32x1xf32>
    %27 = math.rsqrt %26 : vector<32x1xf32>
    %28 = vector.broadcast %27 : vector<32x1xf32> to vector<32x32xf32>
    %29 = arith.mulf %24, %28 : vector<32x32xf32>
    %30 = vector.broadcast %2 : vector<32x1xf32> to vector<32x32xf32>
    %31 = arith.mulf %29, %30 : vector<32x32xf32>
    %32 = vector.broadcast %3 : vector<32x1xf32> to vector<32x32xf32>
    %33 = arith.addf %31, %32 : vector<32x32xf32>
    %34 = vector.extract_strided_slice %33 {offsets = [0, 0], sizes = [32, 16], strides = [1, 1]} : vector<32x32xf32> to vector<32x16xf32>
    %35 = vector.extract_strided_slice %33 {offsets = [0, 16], sizes = [32, 16], strides = [1, 1]} : vector<32x32xf32> to vector<32x16xf32>
    %36 = tpu.concatenate %34, %35 in 1 : vector<32x16xf32>, vector<32x16xf32> -> vector<32x32xf32>
    %c0_14 = arith.constant 0 : index
    %c0_15 = arith.constant 0 : index
    %37 = vector.load %arg4[%c0_14, %c0_15] : memref<32x32xf32, #tpu.memory_space<vmem>>, vector<32x32xf32>
    %c0_16 = arith.constant 0 : index
    %c0_17 = arith.constant 0 : index
    %38 = vector.load %arg5[%c0_16, %c0_17] : memref<32x1xf32, #tpu.memory_space<vmem>>, vector<32x1xf32>
    %c0_18 = arith.constant 0 : index
    %c0_19 = arith.constant 0 : index
    %39 = vector.load %arg6[%c0_18, %c0_19] : memref<32x1xf32, #tpu.memory_space<vmem>>, vector<32x1xf32>
    %40 = vector.extract_strided_slice %0 {offsets = [0, 1], sizes = [16, 17], strides = [1, 1]} : vector<16x40xf32> to vector<16x17xf32>
    %41 = vector.extract_strided_slice %0 {offsets = [0, 2], sizes = [16, 17], strides = [1, 1]} : vector<16x40xf32> to vector<16x17xf32>
    %42 = tpu.concatenate %40, %41 in 0 : vector<16x17xf32>, vector<16x17xf32> -> vector<32x17xf32>
    %43 = vector.extract_strided_slice %0 {offsets = [0, 21], sizes = [16, 17], strides = [1, 1]} : vector<16x40xf32> to vector<16x17xf32>
    %44 = vector.extract_strided_slice %0 {offsets = [0, 22], sizes = [16, 17], strides = [1, 1]} : vector<16x40xf32> to vector<16x17xf32>
    %45 = tpu.concatenate %43, %44 in 0 : vector<16x17xf32>, vector<16x17xf32> -> vector<32x17xf32>
    %46 = tpu.concatenate %42, %45 in 1 : vector<32x17xf32>, vector<32x17xf32> -> vector<32x34xf32>
    %cst_20 = arith.constant dense<0.000000e+00> : vector<32x34xf32>
    %47 = tpu.matmul %37, %46, %cst_20 {dimension_numbers = #tpu.dot_dimension_numbers<[1], [0], [0], [1], [0, 0, 1, 1], [], []>} : vector<32x32xf32>, vector<32x34xf32>, vector<32x34xf32> -> vector<32x34xf32>
    %cst_21 = arith.constant 0.000000e+00 : f32
    %48 = vector.broadcast %cst_21 : f32 to vector<32x34xf32>
    %49 = arith.maximumf %47, %48 : vector<32x34xf32>
    %cst_22 = arith.constant dense<0.000000e+00> : vector<32xf32>
    %50 = vector.multi_reduction <add>, %49, %cst_22 [1] : vector<32x34xf32> to vector<32xf32>
    %51 = vector.shape_cast %50 : vector<32xf32> to vector<32x1xf32>
    %52 = arith.mulf %49, %49 : vector<32x34xf32>
    %cst_23 = arith.constant dense<0.000000e+00> : vector<32xf32>
    %53 = vector.multi_reduction <add>, %52, %cst_23 [1] : vector<32x34xf32> to vector<32xf32>
    %54 = vector.shape_cast %53 : vector<32xf32> to vector<32x1xf32>
    %cst_24 = arith.constant 3.400000e+01 : f32
    %55 = vector.broadcast %cst_24 : f32 to vector<32x1xf32>
    %56 = arith.divf %51, %55 : vector<32x1xf32>
    %cst_25 = arith.constant 3.400000e+01 : f32
    %57 = vector.broadcast %cst_25 : f32 to vector<32x1xf32>
    %58 = arith.divf %54, %57 : vector<32x1xf32>
    %59 = arith.mulf %56, %56 : vector<32x1xf32>
    %60 = arith.subf %58, %59 : vector<32x1xf32>
    %cst_26 = arith.constant 0.000000e+00 : f32
    %61 = vector.broadcast %cst_26 : f32 to vector<32x1xf32>
    %62 = arith.maximumf %60, %61 : vector<32x1xf32>
    %63 = vector.broadcast %56 : vector<32x1xf32> to vector<32x34xf32>
    %64 = arith.subf %49, %63 : vector<32x34xf32>
    %cst_27 = arith.constant 9.99999974E-6 : f32
    %65 = vector.broadcast %cst_27 : f32 to vector<32x1xf32>
    %66 = arith.addf %62, %65 : vector<32x1xf32>
    %67 = math.rsqrt %66 : vector<32x1xf32>
    %68 = vector.broadcast %67 : vector<32x1xf32> to vector<32x34xf32>
    %69 = arith.mulf %64, %68 : vector<32x34xf32>
    %70 = vector.broadcast %38 : vector<32x1xf32> to vector<32x34xf32>
    %71 = arith.mulf %69, %70 : vector<32x34xf32>
    %72 = vector.broadcast %39 : vector<32x1xf32> to vector<32x34xf32>
    %73 = arith.addf %71, %72 : vector<32x34xf32>
    %74 = vector.extract_strided_slice %73 {offsets = [0, 0], sizes = [32, 16], strides = [1, 1]} : vector<32x34xf32> to vector<32x16xf32>
    %75 = vector.extract_strided_slice %73 {offsets = [0, 17], sizes = [32, 16], strides = [1, 1]} : vector<32x34xf32> to vector<32x16xf32>
    %76 = tpu.concatenate %74, %75 in 1 : vector<32x16xf32>, vector<32x16xf32> -> vector<32x32xf32>
    %c0_28 = arith.constant 0 : index
    %c0_29 = arith.constant 0 : index
    %77 = vector.load %arg7[%c0_28, %c0_29] : memref<32x48xf32, #tpu.memory_space<vmem>>, vector<32x48xf32>
    %c0_30 = arith.constant 0 : index
    %c0_31 = arith.constant 0 : index
    %78 = vector.load %arg8[%c0_30, %c0_31] : memref<32x1xf32, #tpu.memory_space<vmem>>, vector<32x1xf32>
    %c0_32 = arith.constant 0 : index
    %c0_33 = arith.constant 0 : index
    %79 = vector.load %arg9[%c0_32, %c0_33] : memref<32x1xf32, #tpu.memory_space<vmem>>, vector<32x1xf32>
    %80 = vector.extract_strided_slice %0 {offsets = [0, 1], sizes = [16, 16], strides = [1, 1]} : vector<16x40xf32> to vector<16x16xf32>
    %81 = vector.extract_strided_slice %0 {offsets = [0, 2], sizes = [16, 16], strides = [1, 1]} : vector<16x40xf32> to vector<16x16xf32>
    %82 = vector.extract_strided_slice %0 {offsets = [0, 3], sizes = [16, 16], strides = [1, 1]} : vector<16x40xf32> to vector<16x16xf32>
    %83 = tpu.concatenate %80, %81, %82 in 0 : vector<16x16xf32>, vector<16x16xf32>, vector<16x16xf32> -> vector<48x16xf32>
    %84 = vector.extract_strided_slice %0 {offsets = [0, 21], sizes = [16, 16], strides = [1, 1]} : vector<16x40xf32> to vector<16x16xf32>
    %85 = vector.extract_strided_slice %0 {offsets = [0, 22], sizes = [16, 16], strides = [1, 1]} : vector<16x40xf32> to vector<16x16xf32>
    %86 = vector.extract_strided_slice %0 {offsets = [0, 23], sizes = [16, 16], strides = [1, 1]} : vector<16x40xf32> to vector<16x16xf32>
    %87 = tpu.concatenate %84, %85, %86 in 0 : vector<16x16xf32>, vector<16x16xf32>, vector<16x16xf32> -> vector<48x16xf32>
    %88 = tpu.concatenate %83, %87 in 1 : vector<48x16xf32>, vector<48x16xf32> -> vector<48x32xf32>
    %cst_34 = arith.constant dense<0.000000e+00> : vector<32x32xf32>
    %89 = tpu.matmul %77, %88, %cst_34 {dimension_numbers = #tpu.dot_dimension_numbers<[1], [0], [0], [1], [0, 0, 1, 1], [], []>} : vector<32x48xf32>, vector<48x32xf32>, vector<32x32xf32> -> vector<32x32xf32>
    %cst_35 = arith.constant 0.000000e+00 : f32
    %90 = vector.broadcast %cst_35 : f32 to vector<32x32xf32>
    %91 = arith.maximumf %89, %90 : vector<32x32xf32>
    %cst_36 = arith.constant dense<0.000000e+00> : vector<32xf32>
    %92 = vector.multi_reduction <add>, %91, %cst_36 [1] : vector<32x32xf32> to vector<32xf32>
    %93 = vector.shape_cast %92 : vector<32xf32> to vector<32x1xf32>
    %94 = arith.mulf %91, %91 : vector<32x32xf32>
    %cst_37 = arith.constant dense<0.000000e+00> : vector<32xf32>
    %95 = vector.multi_reduction <add>, %94, %cst_37 [1] : vector<32x32xf32> to vector<32xf32>
    %96 = vector.shape_cast %95 : vector<32xf32> to vector<32x1xf32>
    %cst_38 = arith.constant 3.200000e+01 : f32
    %97 = vector.broadcast %cst_38 : f32 to vector<32x1xf32>
    %98 = arith.divf %93, %97 : vector<32x1xf32>
    %cst_39 = arith.constant 3.200000e+01 : f32
    %99 = vector.broadcast %cst_39 : f32 to vector<32x1xf32>
    %100 = arith.divf %96, %99 : vector<32x1xf32>
    %101 = arith.mulf %98, %98 : vector<32x1xf32>
    %102 = arith.subf %100, %101 : vector<32x1xf32>
    %cst_40 = arith.constant 0.000000e+00 : f32
    %103 = vector.broadcast %cst_40 : f32 to vector<32x1xf32>
    %104 = arith.maximumf %102, %103 : vector<32x1xf32>
    %105 = vector.broadcast %98 : vector<32x1xf32> to vector<32x32xf32>
    %106 = arith.subf %91, %105 : vector<32x32xf32>
    %cst_41 = arith.constant 9.99999974E-6 : f32
    %107 = vector.broadcast %cst_41 : f32 to vector<32x1xf32>
    %108 = arith.addf %104, %107 : vector<32x1xf32>
    %109 = math.rsqrt %108 : vector<32x1xf32>
    %110 = vector.broadcast %109 : vector<32x1xf32> to vector<32x32xf32>
    %111 = arith.mulf %106, %110 : vector<32x32xf32>
    %112 = vector.broadcast %78 : vector<32x1xf32> to vector<32x32xf32>
    %113 = arith.mulf %111, %112 : vector<32x32xf32>
    %114 = vector.broadcast %79 : vector<32x1xf32> to vector<32x32xf32>
    %115 = arith.addf %113, %114 : vector<32x32xf32>
    %116 = vector.extract_strided_slice %115 {offsets = [0, 0], sizes = [32, 16], strides = [1, 1]} : vector<32x32xf32> to vector<32x16xf32>
    %117 = vector.extract_strided_slice %115 {offsets = [0, 16], sizes = [32, 16], strides = [1, 1]} : vector<32x32xf32> to vector<32x16xf32>
    %118 = tpu.concatenate %116, %117 in 1 : vector<32x16xf32>, vector<32x16xf32> -> vector<32x32xf32>
    %c0_42 = arith.constant 0 : index
    %c0_43 = arith.constant 0 : index
    %119 = vector.load %arg10[%c0_42, %c0_43] : memref<32x64xf32, #tpu.memory_space<vmem>>, vector<32x64xf32>
    %c0_44 = arith.constant 0 : index
    %c0_45 = arith.constant 0 : index
    %120 = vector.load %arg11[%c0_44, %c0_45] : memref<32x1xf32, #tpu.memory_space<vmem>>, vector<32x1xf32>
    %c0_46 = arith.constant 0 : index
    %c0_47 = arith.constant 0 : index
    %121 = vector.load %arg12[%c0_46, %c0_47] : memref<32x1xf32, #tpu.memory_space<vmem>>, vector<32x1xf32>
    %122 = vector.extract_strided_slice %0 {offsets = [0, 0], sizes = [16, 17], strides = [1, 1]} : vector<16x40xf32> to vector<16x17xf32>
    %123 = vector.extract_strided_slice %0 {offsets = [0, 1], sizes = [16, 17], strides = [1, 1]} : vector<16x40xf32> to vector<16x17xf32>
    %124 = vector.extract_strided_slice %0 {offsets = [0, 2], sizes = [16, 17], strides = [1, 1]} : vector<16x40xf32> to vector<16x17xf32>
    %125 = vector.extract_strided_slice %0 {offsets = [0, 3], sizes = [16, 17], strides = [1, 1]} : vector<16x40xf32> to vector<16x17xf32>
    %126 = tpu.concatenate %122, %123, %124, %125 in 0 : vector<16x17xf32>, vector<16x17xf32>, vector<16x17xf32>, vector<16x17xf32> -> vector<64x17xf32>
    %127 = vector.extract_strided_slice %0 {offsets = [0, 20], sizes = [16, 17], strides = [1, 1]} : vector<16x40xf32> to vector<16x17xf32>
    %128 = vector.extract_strided_slice %0 {offsets = [0, 21], sizes = [16, 17], strides = [1, 1]} : vector<16x40xf32> to vector<16x17xf32>
    %129 = vector.extract_strided_slice %0 {offsets = [0, 22], sizes = [16, 17], strides = [1, 1]} : vector<16x40xf32> to vector<16x17xf32>
    %130 = vector.extract_strided_slice %0 {offsets = [0, 23], sizes = [16, 17], strides = [1, 1]} : vector<16x40xf32> to vector<16x17xf32>
    %131 = tpu.concatenate %127, %128, %129, %130 in 0 : vector<16x17xf32>, vector<16x17xf32>, vector<16x17xf32>, vector<16x17xf32> -> vector<64x17xf32>
    %132 = tpu.concatenate %126, %131 in 1 : vector<64x17xf32>, vector<64x17xf32> -> vector<64x34xf32>
    %cst_48 = arith.constant dense<0.000000e+00> : vector<32x34xf32>
    %133 = tpu.matmul %119, %132, %cst_48 {dimension_numbers = #tpu.dot_dimension_numbers<[1], [0], [0], [1], [0, 0, 1, 1], [], []>} : vector<32x64xf32>, vector<64x34xf32>, vector<32x34xf32> -> vector<32x34xf32>
    %cst_49 = arith.constant 0.000000e+00 : f32
    %134 = vector.broadcast %cst_49 : f32 to vector<32x34xf32>
    %135 = arith.maximumf %133, %134 : vector<32x34xf32>
    %cst_50 = arith.constant dense<0.000000e+00> : vector<32xf32>
    %136 = vector.multi_reduction <add>, %135, %cst_50 [1] : vector<32x34xf32> to vector<32xf32>
    %137 = vector.shape_cast %136 : vector<32xf32> to vector<32x1xf32>
    %138 = arith.mulf %135, %135 : vector<32x34xf32>
    %cst_51 = arith.constant dense<0.000000e+00> : vector<32xf32>
    %139 = vector.multi_reduction <add>, %138, %cst_51 [1] : vector<32x34xf32> to vector<32xf32>
    %140 = vector.shape_cast %139 : vector<32xf32> to vector<32x1xf32>
    %cst_52 = arith.constant 3.400000e+01 : f32
    %141 = vector.broadcast %cst_52 : f32 to vector<32x1xf32>
    %142 = arith.divf %137, %141 : vector<32x1xf32>
    %cst_53 = arith.constant 3.400000e+01 : f32
    %143 = vector.broadcast %cst_53 : f32 to vector<32x1xf32>
    %144 = arith.divf %140, %143 : vector<32x1xf32>
    %145 = arith.mulf %142, %142 : vector<32x1xf32>
    %146 = arith.subf %144, %145 : vector<32x1xf32>
    %cst_54 = arith.constant 0.000000e+00 : f32
    %147 = vector.broadcast %cst_54 : f32 to vector<32x1xf32>
    %148 = arith.maximumf %146, %147 : vector<32x1xf32>
    %149 = vector.broadcast %142 : vector<32x1xf32> to vector<32x34xf32>
    %150 = arith.subf %135, %149 : vector<32x34xf32>
    %cst_55 = arith.constant 9.99999974E-6 : f32
    %151 = vector.broadcast %cst_55 : f32 to vector<32x1xf32>
    %152 = arith.addf %148, %151 : vector<32x1xf32>
    %153 = math.rsqrt %152 : vector<32x1xf32>
    %154 = vector.broadcast %153 : vector<32x1xf32> to vector<32x34xf32>
    %155 = arith.mulf %150, %154 : vector<32x34xf32>
    %156 = vector.broadcast %120 : vector<32x1xf32> to vector<32x34xf32>
    %157 = arith.mulf %155, %156 : vector<32x34xf32>
    %158 = vector.broadcast %121 : vector<32x1xf32> to vector<32x34xf32>
    %159 = arith.addf %157, %158 : vector<32x34xf32>
    %160 = vector.extract_strided_slice %159 {offsets = [0, 0], sizes = [32, 16], strides = [1, 1]} : vector<32x34xf32> to vector<32x16xf32>
    %161 = vector.extract_strided_slice %159 {offsets = [0, 17], sizes = [32, 16], strides = [1, 1]} : vector<32x34xf32> to vector<32x16xf32>
    %162 = tpu.concatenate %160, %161 in 1 : vector<32x16xf32>, vector<32x16xf32> -> vector<32x32xf32>
    %163 = tpu.concatenate %36, %76, %118, %162 in 0 : vector<32x32xf32>, vector<32x32xf32>, vector<32x32xf32>, vector<32x32xf32> -> vector<128x32xf32>
    %cst_56 = arith.constant 0xFF800000 : f32
    %164 = vector.broadcast %cst_56 : f32 to vector<128x1xf32>
    %cst_57 = arith.constant 0.000000e+00 : f32
    %165 = vector.broadcast %cst_57 : f32 to vector<128x1xf32>
    %166 = vector.extract_strided_slice %163 {offsets = [0, 0], sizes = [128, 16], strides = [1, 1]} : vector<128x32xf32> to vector<128x16xf32>
    %167 = vector.extract_strided_slice %166 {offsets = [0, 0], sizes = [128, 15], strides = [1, 1]} : vector<128x16xf32> to vector<128x15xf32>
    %168 = tpu.concatenate %164, %167 in 1 : vector<128x1xf32>, vector<128x15xf32> -> vector<128x16xf32>
    %169 = arith.maximumf %166, %168 : vector<128x16xf32>
    %170 = tpu.concatenate %165, %169, %165 in 1 : vector<128x1xf32>, vector<128x16xf32>, vector<128x1xf32> -> vector<128x18xf32>
    %171 = vector.extract_strided_slice %170 {offsets = [0, 0], sizes = [128, 16], strides = [1, 1]} : vector<128x18xf32> to vector<128x16xf32>
    %172 = vector.extract_strided_slice %170 {offsets = [0, 1], sizes = [128, 16], strides = [1, 1]} : vector<128x18xf32> to vector<128x16xf32>
    %173 = vector.extract_strided_slice %170 {offsets = [0, 2], sizes = [128, 16], strides = [1, 1]} : vector<128x18xf32> to vector<128x16xf32>
    %174 = tpu.concatenate %171, %172, %173 in 0 : vector<128x16xf32>, vector<128x16xf32>, vector<128x16xf32> -> vector<384x16xf32>
    %175 = vector.extract_strided_slice %163 {offsets = [0, 16], sizes = [128, 16], strides = [1, 1]} : vector<128x32xf32> to vector<128x16xf32>
    %176 = vector.extract_strided_slice %175 {offsets = [0, 0], sizes = [128, 15], strides = [1, 1]} : vector<128x16xf32> to vector<128x15xf32>
    %177 = tpu.concatenate %164, %176 in 1 : vector<128x1xf32>, vector<128x15xf32> -> vector<128x16xf32>
    %178 = arith.maximumf %175, %177 : vector<128x16xf32>
    %179 = tpu.concatenate %165, %178, %165 in 1 : vector<128x1xf32>, vector<128x16xf32>, vector<128x1xf32> -> vector<128x18xf32>
    %180 = vector.extract_strided_slice %179 {offsets = [0, 0], sizes = [128, 16], strides = [1, 1]} : vector<128x18xf32> to vector<128x16xf32>
    %181 = vector.extract_strided_slice %179 {offsets = [0, 1], sizes = [128, 16], strides = [1, 1]} : vector<128x18xf32> to vector<128x16xf32>
    %182 = vector.extract_strided_slice %179 {offsets = [0, 2], sizes = [128, 16], strides = [1, 1]} : vector<128x18xf32> to vector<128x16xf32>
    %183 = tpu.concatenate %180, %181, %182 in 0 : vector<128x16xf32>, vector<128x16xf32>, vector<128x16xf32> -> vector<384x16xf32>
    %184 = tpu.concatenate %174, %183 in 1 : vector<384x16xf32>, vector<384x16xf32> -> vector<384x32xf32>
    %c0_58 = arith.constant 0 : index
    %c0_59 = arith.constant 0 : index
    %185 = vector.load %arg13[%c0_58, %c0_59] : memref<64x384xf32, #tpu.memory_space<vmem>>, vector<64x384xf32>
    %cst_60 = arith.constant dense<0.000000e+00> : vector<64x32xf32>
    %186 = tpu.matmul %185, %184, %cst_60 {dimension_numbers = #tpu.dot_dimension_numbers<[1], [0], [0], [1], [0, 0, 1, 1], [], []>} : vector<64x384xf32>, vector<384x32xf32>, vector<64x32xf32> -> vector<64x32xf32>
    %cst_61 = arith.constant 0.000000e+00 : f32
    %187 = vector.broadcast %cst_61 : f32 to vector<64x32xf32>
    %188 = arith.maximumf %186, %187 : vector<64x32xf32>
    %c0_62 = arith.constant 0 : index
    %c0_63 = arith.constant 0 : index
    %189 = vector.load %arg14[%c0_62, %c0_63] : memref<64x1xf32, #tpu.memory_space<vmem>>, vector<64x1xf32>
    %c0_64 = arith.constant 0 : index
    %c0_65 = arith.constant 0 : index
    %190 = vector.load %arg15[%c0_64, %c0_65] : memref<64x1xf32, #tpu.memory_space<vmem>>, vector<64x1xf32>
    %cst_66 = arith.constant dense<0.000000e+00> : vector<64xf32>
    %191 = vector.multi_reduction <add>, %188, %cst_66 [1] : vector<64x32xf32> to vector<64xf32>
    %192 = vector.shape_cast %191 : vector<64xf32> to vector<64x1xf32>
    %193 = arith.mulf %188, %188 : vector<64x32xf32>
    %cst_67 = arith.constant dense<0.000000e+00> : vector<64xf32>
    %194 = vector.multi_reduction <add>, %193, %cst_67 [1] : vector<64x32xf32> to vector<64xf32>
    %195 = vector.shape_cast %194 : vector<64xf32> to vector<64x1xf32>
    %cst_68 = arith.constant 3.200000e+01 : f32
    %196 = vector.broadcast %cst_68 : f32 to vector<64x1xf32>
    %197 = arith.divf %192, %196 : vector<64x1xf32>
    %cst_69 = arith.constant 3.200000e+01 : f32
    %198 = vector.broadcast %cst_69 : f32 to vector<64x1xf32>
    %199 = arith.divf %195, %198 : vector<64x1xf32>
    %200 = arith.mulf %197, %197 : vector<64x1xf32>
    %201 = arith.subf %199, %200 : vector<64x1xf32>
    %cst_70 = arith.constant 0.000000e+00 : f32
    %202 = vector.broadcast %cst_70 : f32 to vector<64x1xf32>
    %203 = arith.maximumf %201, %202 : vector<64x1xf32>
    %204 = vector.broadcast %197 : vector<64x1xf32> to vector<64x32xf32>
    %205 = arith.subf %188, %204 : vector<64x32xf32>
    %cst_71 = arith.constant 9.99999974E-6 : f32
    %206 = vector.broadcast %cst_71 : f32 to vector<64x1xf32>
    %207 = arith.addf %203, %206 : vector<64x1xf32>
    %208 = math.rsqrt %207 : vector<64x1xf32>
    %209 = vector.broadcast %208 : vector<64x1xf32> to vector<64x32xf32>
    %210 = arith.mulf %205, %209 : vector<64x32xf32>
    %211 = vector.broadcast %189 : vector<64x1xf32> to vector<64x32xf32>
    %212 = arith.mulf %210, %211 : vector<64x32xf32>
    %213 = vector.broadcast %190 : vector<64x1xf32> to vector<64x32xf32>
    %214 = arith.addf %212, %213 : vector<64x32xf32>
    %cst_72 = arith.constant 0.000000e+00 : f32
    %215 = vector.broadcast %cst_72 : f32 to vector<64x1xf32>
    %216 = vector.extract_strided_slice %214 {offsets = [0, 0], sizes = [64, 16], strides = [1, 1]} : vector<64x32xf32> to vector<64x16xf32>
    %217 = tpu.concatenate %215, %216, %215 in 1 : vector<64x1xf32>, vector<64x16xf32>, vector<64x1xf32> -> vector<64x18xf32>
    %218 = vector.extract_strided_slice %217 {offsets = [0, 0], sizes = [64, 16], strides = [1, 1]} : vector<64x18xf32> to vector<64x16xf32>
    %219 = vector.extract_strided_slice %217 {offsets = [0, 1], sizes = [64, 16], strides = [1, 1]} : vector<64x18xf32> to vector<64x16xf32>
    %220 = vector.extract_strided_slice %217 {offsets = [0, 2], sizes = [64, 16], strides = [1, 1]} : vector<64x18xf32> to vector<64x16xf32>
    %221 = tpu.concatenate %218, %219, %220 in 0 : vector<64x16xf32>, vector<64x16xf32>, vector<64x16xf32> -> vector<192x16xf32>
    %222 = vector.extract_strided_slice %214 {offsets = [0, 16], sizes = [64, 16], strides = [1, 1]} : vector<64x32xf32> to vector<64x16xf32>
    %223 = tpu.concatenate %215, %222, %215 in 1 : vector<64x1xf32>, vector<64x16xf32>, vector<64x1xf32> -> vector<64x18xf32>
    %224 = vector.extract_strided_slice %223 {offsets = [0, 0], sizes = [64, 16], strides = [1, 1]} : vector<64x18xf32> to vector<64x16xf32>
    %225 = vector.extract_strided_slice %223 {offsets = [0, 1], sizes = [64, 16], strides = [1, 1]} : vector<64x18xf32> to vector<64x16xf32>
    %226 = vector.extract_strided_slice %223 {offsets = [0, 2], sizes = [64, 16], strides = [1, 1]} : vector<64x18xf32> to vector<64x16xf32>
    %227 = tpu.concatenate %224, %225, %226 in 0 : vector<64x16xf32>, vector<64x16xf32>, vector<64x16xf32> -> vector<192x16xf32>
    %228 = tpu.concatenate %221, %227 in 1 : vector<192x16xf32>, vector<192x16xf32> -> vector<192x32xf32>
    %c0_73 = arith.constant 0 : index
    %c0_74 = arith.constant 0 : index
    %229 = vector.load %arg16[%c0_73, %c0_74] : memref<16x192xf32, #tpu.memory_space<vmem>>, vector<16x192xf32>
    %cst_75 = arith.constant dense<0.000000e+00> : vector<16x32xf32>
    %230 = tpu.matmul %229, %228, %cst_75 {dimension_numbers = #tpu.dot_dimension_numbers<[1], [0], [0], [1], [0, 0, 1, 1], [], []>} : vector<16x192xf32>, vector<192x32xf32>, vector<16x32xf32> -> vector<16x32xf32>
    %c0_76 = arith.constant 0 : index
    %c0_77 = arith.constant 0 : index
    %231 = vector.load %arg17[%c0_76, %c0_77] : memref<16x1xf32, #tpu.memory_space<vmem>>, vector<16x1xf32>
    %c0_78 = arith.constant 0 : index
    %c0_79 = arith.constant 0 : index
    %232 = vector.load %arg18[%c0_78, %c0_79] : memref<16x1xf32, #tpu.memory_space<vmem>>, vector<16x1xf32>
    %cst_80 = arith.constant dense<0.000000e+00> : vector<16xf32>
    %233 = vector.multi_reduction <add>, %230, %cst_80 [1] : vector<16x32xf32> to vector<16xf32>
    %234 = vector.shape_cast %233 : vector<16xf32> to vector<16x1xf32>
    %235 = arith.mulf %230, %230 : vector<16x32xf32>
    %cst_81 = arith.constant dense<0.000000e+00> : vector<16xf32>
    %236 = vector.multi_reduction <add>, %235, %cst_81 [1] : vector<16x32xf32> to vector<16xf32>
    %237 = vector.shape_cast %236 : vector<16xf32> to vector<16x1xf32>
    %cst_82 = arith.constant 3.200000e+01 : f32
    %238 = vector.broadcast %cst_82 : f32 to vector<16x1xf32>
    %239 = arith.divf %234, %238 : vector<16x1xf32>
    %cst_83 = arith.constant 3.200000e+01 : f32
    %240 = vector.broadcast %cst_83 : f32 to vector<16x1xf32>
    %241 = arith.divf %237, %240 : vector<16x1xf32>
    %242 = arith.mulf %239, %239 : vector<16x1xf32>
    %243 = arith.subf %241, %242 : vector<16x1xf32>
    %cst_84 = arith.constant 0.000000e+00 : f32
    %244 = vector.broadcast %cst_84 : f32 to vector<16x1xf32>
    %245 = arith.maximumf %243, %244 : vector<16x1xf32>
    %246 = vector.broadcast %239 : vector<16x1xf32> to vector<16x32xf32>
    %247 = arith.subf %230, %246 : vector<16x32xf32>
    %cst_85 = arith.constant 9.99999974E-6 : f32
    %248 = vector.broadcast %cst_85 : f32 to vector<16x1xf32>
    %249 = arith.addf %245, %248 : vector<16x1xf32>
    %250 = math.rsqrt %249 : vector<16x1xf32>
    %251 = vector.broadcast %250 : vector<16x1xf32> to vector<16x32xf32>
    %252 = arith.mulf %247, %251 : vector<16x32xf32>
    %253 = vector.broadcast %231 : vector<16x1xf32> to vector<16x32xf32>
    %254 = arith.mulf %252, %253 : vector<16x32xf32>
    %255 = vector.broadcast %232 : vector<16x1xf32> to vector<16x32xf32>
    %256 = arith.addf %254, %255 : vector<16x32xf32>
    %257 = vector.extract_strided_slice %0 {offsets = [0, 2], sizes = [16, 16], strides = [1, 1]} : vector<16x40xf32> to vector<16x16xf32>
    %258 = vector.extract_strided_slice %0 {offsets = [0, 22], sizes = [16, 16], strides = [1, 1]} : vector<16x40xf32> to vector<16x16xf32>
    %259 = tpu.concatenate %257, %258 in 1 : vector<16x16xf32>, vector<16x16xf32> -> vector<16x32xf32>
    %260 = arith.addf %256, %259 : vector<16x32xf32>
    %c0_86 = arith.constant 0 : index
    %c0_87 = arith.constant 0 : index
    %261 = vector.load %arg19[%c0_86, %c0_87] : memref<16x32xf32, #tpu.memory_space<vmem>>, vector<16x32xf32>
    tpu.vector_store %arg19[%c0_86, %c0_87], %260 {strides = array<i32>} : memref<16x32xf32, #tpu.memory_space<vmem>>, vector<16x32xf32>,
    return
  }
}

module attributes {stable_mosaic.version = 11 : i64} {
  func.func @_highway_gx_kernel(%arg0: i32, %arg1: memref<16x32xf32, #tpu.memory_space<vmem>>, %arg2: memref<32x16xf32, #tpu.memory_space<vmem>>, %arg3: memref<32x32xf32, #tpu.memory_space<vmem>>, %arg4: memref<32x1xf32, #tpu.memory_space<vmem>>, %arg5: memref<32x32xf32, #tpu.memory_space<vmem>>, %arg6: memref<32x1xf32, #tpu.memory_space<vmem>>, %arg7: memref<32x32xf32, #tpu.memory_space<vmem>>, %arg8: memref<32x1xf32, #tpu.memory_space<vmem>>, %arg9: memref<32x32xf32, #tpu.memory_space<vmem>>, %arg10: memref<32x1xf32, #tpu.memory_space<vmem>>, %arg11: memref<192x32xf32, #tpu.memory_space<vmem>>, %arg12: memref<192x1xf32, #tpu.memory_space<vmem>>, %arg13: memref<32x192xf32, #tpu.memory_space<vmem>>) attributes {dimension_semantics = [#tpu.dimension_semantics<parallel>], iteration_bounds = array<i64: 1>, scalar_prefetch = 0 : i64, scratch_operands = 0 : i64, tpu.core_type = #tpu.core_type<tc>, window_params = [{transform_indices = @transform_0, window_bounds = array<i64: 16, 32>}, {pipeline_mode = #tpu.pipeline_mode<synchronous>, transform_indices = @transform_1, window_bounds = array<i64: 32, 16>}, {pipeline_mode = #tpu.pipeline_mode<synchronous>, transform_indices = @transform_2, window_bounds = array<i64: 32, 32>}, {pipeline_mode = #tpu.pipeline_mode<synchronous>, transform_indices = @transform_3, window_bounds = array<i64: 32, 1>}, {pipeline_mode = #tpu.pipeline_mode<synchronous>, transform_indices = @transform_4, window_bounds = array<i64: 32, 32>}, {pipeline_mode = #tpu.pipeline_mode<synchronous>, transform_indices = @transform_5, window_bounds = array<i64: 32, 1>}, {pipeline_mode = #tpu.pipeline_mode<synchronous>, transform_indices = @transform_6, window_bounds = array<i64: 32, 32>}, {pipeline_mode = #tpu.pipeline_mode<synchronous>, transform_indices = @transform_7, window_bounds = array<i64: 32, 1>}, {pipeline_mode = #tpu.pipeline_mode<synchronous>, transform_indices = @transform_8, window_bounds = array<i64: 32, 32>}, {pipeline_mode = #tpu.pipeline_mode<synchronous>, transform_indices = @transform_9, window_bounds = array<i64: 32, 1>}, {pipeline_mode = #tpu.pipeline_mode<synchronous>, transform_indices = @transform_10, window_bounds = array<i64: 192, 32>}, {pipeline_mode = #tpu.pipeline_mode<synchronous>, transform_indices = @transform_11, window_bounds = array<i64: 192, 1>}, {transform_indices = @transform_12, window_bounds = array<i64: 32, 192>}]} {
    %c0 = arith.constant 0 : index
    %c0_0 = arith.constant 0 : index
    %0 = vector.load %arg1[%c0, %c0_0] : memref<16x32xf32, #tpu.memory_space<vmem>>, vector<16x32xf32>
    %c0_1 = arith.constant 0 : index
    %c0_2 = arith.constant 0 : index
    %1 = vector.load %arg2[%c0_1, %c0_2] : memref<32x16xf32, #tpu.memory_space<vmem>>, vector<32x16xf32>
    %cst = arith.constant dense<0.000000e+00> : vector<32x32xf32>
    %2 = tpu.matmul %1, %0, %cst {dimension_numbers = #tpu.dot_dimension_numbers<[1], [0], [0], [1], [0, 0, 1, 1], [], []>} : vector<32x16xf32>, vector<16x32xf32>, vector<32x32xf32> -> vector<32x32xf32>
    %c0_3 = arith.constant 0 : index
    %c0_4 = arith.constant 0 : index
    %3 = vector.load %arg3[%c0_3, %c0_4] : memref<32x32xf32, #tpu.memory_space<vmem>>, vector<32x32xf32>
    %c0_5 = arith.constant 0 : index
    %c0_6 = arith.constant 0 : index
    %4 = vector.load %arg4[%c0_5, %c0_6] : memref<32x1xf32, #tpu.memory_space<vmem>>, vector<32x1xf32>
    %c0_7 = arith.constant 0 : index
    %c0_8 = arith.constant 0 : index
    %5 = vector.load %arg5[%c0_7, %c0_8] : memref<32x32xf32, #tpu.memory_space<vmem>>, vector<32x32xf32>
    %c0_9 = arith.constant 0 : index
    %c0_10 = arith.constant 0 : index
    %6 = vector.load %arg6[%c0_9, %c0_10] : memref<32x1xf32, #tpu.memory_space<vmem>>, vector<32x1xf32>
    %cst_11 = arith.constant dense<0.000000e+00> : vector<32x32xf32>
    %7 = tpu.matmul %3, %2, %cst_11 {dimension_numbers = #tpu.dot_dimension_numbers<[1], [0], [0], [1], [0, 0, 1, 1], [], []>} : vector<32x32xf32>, vector<32x32xf32>, vector<32x32xf32> -> vector<32x32xf32>
    %8 = vector.broadcast %4 : vector<32x1xf32> to vector<32x32xf32>
    %9 = arith.addf %7, %8 : vector<32x32xf32>
    %cst_12 = arith.constant dense<0.000000e+00> : vector<32x32xf32>
    %10 = tpu.matmul %5, %2, %cst_12 {dimension_numbers = #tpu.dot_dimension_numbers<[1], [0], [0], [1], [0, 0, 1, 1], [], []>} : vector<32x32xf32>, vector<32x32xf32>, vector<32x32xf32> -> vector<32x32xf32>
    %11 = vector.broadcast %6 : vector<32x1xf32> to vector<32x32xf32>
    %12 = arith.addf %10, %11 : vector<32x32xf32>
    %13 = arith.negf %12 : vector<32x32xf32>
    %14 = math.exp %13 : vector<32x32xf32>
    %cst_13 = arith.constant 1.000000e+00 : f32
    %15 = vector.broadcast %cst_13 : f32 to vector<32x32xf32>
    %16 = arith.addf %15, %14 : vector<32x32xf32>
    %17 = arith.divf %15, %16 : vector<32x32xf32>
    %cst_14 = arith.constant 0.000000e+00 : f32
    %18 = vector.broadcast %cst_14 : f32 to vector<32x32xf32>
    %19 = arith.maximumf %9, %18 : vector<32x32xf32>
    %20 = arith.mulf %17, %19 : vector<32x32xf32>
    %cst_15 = arith.constant 1.000000e+00 : f32
    %21 = vector.broadcast %cst_15 : f32 to vector<32x32xf32>
    %22 = arith.subf %21, %17 : vector<32x32xf32>
    %23 = arith.mulf %22, %2 : vector<32x32xf32>
    %24 = arith.addf %20, %23 : vector<32x32xf32>
    %c0_16 = arith.constant 0 : index
    %c0_17 = arith.constant 0 : index
    %25 = vector.load %arg7[%c0_16, %c0_17] : memref<32x32xf32, #tpu.memory_space<vmem>>, vector<32x32xf32>
    %c0_18 = arith.constant 0 : index
    %c0_19 = arith.constant 0 : index
    %26 = vector.load %arg8[%c0_18, %c0_19] : memref<32x1xf32, #tpu.memory_space<vmem>>, vector<32x1xf32>
    %c0_20 = arith.constant 0 : index
    %c0_21 = arith.constant 0 : index
    %27 = vector.load %arg9[%c0_20, %c0_21] : memref<32x32xf32, #tpu.memory_space<vmem>>, vector<32x32xf32>
    %c0_22 = arith.constant 0 : index
    %c0_23 = arith.constant 0 : index
    %28 = vector.load %arg10[%c0_22, %c0_23] : memref<32x1xf32, #tpu.memory_space<vmem>>, vector<32x1xf32>
    %cst_24 = arith.constant dense<0.000000e+00> : vector<32x32xf32>
    %29 = tpu.matmul %25, %24, %cst_24 {dimension_numbers = #tpu.dot_dimension_numbers<[1], [0], [0], [1], [0, 0, 1, 1], [], []>} : vector<32x32xf32>, vector<32x32xf32>, vector<32x32xf32> -> vector<32x32xf32>
    %30 = vector.broadcast %26 : vector<32x1xf32> to vector<32x32xf32>
    %31 = arith.addf %29, %30 : vector<32x32xf32>
    %cst_25 = arith.constant dense<0.000000e+00> : vector<32x32xf32>
    %32 = tpu.matmul %27, %24, %cst_25 {dimension_numbers = #tpu.dot_dimension_numbers<[1], [0], [0], [1], [0, 0, 1, 1], [], []>} : vector<32x32xf32>, vector<32x32xf32>, vector<32x32xf32> -> vector<32x32xf32>
    %33 = vector.broadcast %28 : vector<32x1xf32> to vector<32x32xf32>
    %34 = arith.addf %32, %33 : vector<32x32xf32>
    %35 = arith.negf %34 : vector<32x32xf32>
    %36 = math.exp %35 : vector<32x32xf32>
    %cst_26 = arith.constant 1.000000e+00 : f32
    %37 = vector.broadcast %cst_26 : f32 to vector<32x32xf32>
    %38 = arith.addf %37, %36 : vector<32x32xf32>
    %39 = arith.divf %37, %38 : vector<32x32xf32>
    %cst_27 = arith.constant 0.000000e+00 : f32
    %40 = vector.broadcast %cst_27 : f32 to vector<32x32xf32>
    %41 = arith.maximumf %31, %40 : vector<32x32xf32>
    %42 = arith.mulf %39, %41 : vector<32x32xf32>
    %cst_28 = arith.constant 1.000000e+00 : f32
    %43 = vector.broadcast %cst_28 : f32 to vector<32x32xf32>
    %44 = arith.subf %43, %39 : vector<32x32xf32>
    %45 = arith.mulf %44, %24 : vector<32x32xf32>
    %46 = arith.addf %42, %45 : vector<32x32xf32>
    %c0_29 = arith.constant 0 : index
    %c0_30 = arith.constant 0 : index
    %47 = vector.load %arg11[%c0_29, %c0_30] : memref<192x32xf32, #tpu.memory_space<vmem>>, vector<192x32xf32>
    %cst_31 = arith.constant dense<0.000000e+00> : vector<192x32xf32>
    %48 = tpu.matmul %47, %46, %cst_31 {dimension_numbers = #tpu.dot_dimension_numbers<[1], [0], [0], [1], [0, 0, 1, 1], [], []>} : vector<192x32xf32>, vector<32x32xf32>, vector<192x32xf32> -> vector<192x32xf32>
    %c0_32 = arith.constant 0 : index
    %c0_33 = arith.constant 0 : index
    %49 = vector.load %arg12[%c0_32, %c0_33] : memref<192x1xf32, #tpu.memory_space<vmem>>, vector<192x1xf32>
    %50 = vector.broadcast %49 : vector<192x1xf32> to vector<192x32xf32>
    %51 = arith.addf %48, %50 : vector<192x32xf32>
    %52 = tpu.transpose %51, [1, 0] : vector<192x32xf32> -> vector<32x192xf32>
    %c0_34 = arith.constant 0 : index
    %c0_35 = arith.constant 0 : index
    %53 = vector.load %arg13[%c0_34, %c0_35] : memref<32x192xf32, #tpu.memory_space<vmem>>, vector<32x192xf32>
    tpu.vector_store %arg13[%c0_34, %c0_35], %52 {strides = array<i32>} : memref<32x192xf32, #tpu.memory_space<vmem>>, vector<32x192xf32>,
    return
  }
  func.func @transform_0(%arg0: i32) -> (i32, i32) {
    %c0_i32 = arith.constant 0 : i32
    %c0_i32_0 = arith.constant 0 : i32
    return %c0_i32, %arg0 : i32, i32
  }
  func.func @transform_1(%arg0: i32) -> (i32, i32) {
    %c0_i32 = arith.constant 0 : i32
    %c0_i32_0 = arith.constant 0 : i32
    %c0_i32_1 = arith.constant 0 : i32
    return %c0_i32, %c0_i32_0 : i32, i32
  }
  func.func @transform_2(%arg0: i32) -> (i32, i32) {
    %c0_i32 = arith.constant 0 : i32
    %c0_i32_0 = arith.constant 0 : i32
    %c0_i32_1 = arith.constant 0 : i32
    return %c0_i32, %c0_i32_0 : i32, i32
  }
  func.func @transform_3(%arg0: i32) -> (i32, i32) {
    %c0_i32 = arith.constant 0 : i32
    %c0_i32_0 = arith.constant 0 : i32
    %c0_i32_1 = arith.constant 0 : i32
    return %c0_i32, %c0_i32_0 : i32, i32
  }
  func.func @transform_4(%arg0: i32) -> (i32, i32) {
    %c0_i32 = arith.constant 0 : i32
    %c0_i32_0 = arith.constant 0 : i32
    %c0_i32_1 = arith.constant 0 : i32
    return %c0_i32, %c0_i32_0 : i32, i32
  }
  func.func @transform_5(%arg0: i32) -> (i32, i32) {
    %c0_i32 = arith.constant 0 : i32
    %c0_i32_0 = arith.constant 0 : i32
    %c0_i32_1 = arith.constant 0 : i32
    return %c0_i32, %c0_i32_0 : i32, i32
  }
  func.func @transform_6(%arg0: i32) -> (i32, i32) {
    %c0_i32 = arith.constant 0 : i32
    %c0_i32_0 = arith.constant 0 : i32
    %c0_i32_1 = arith.constant 0 : i32
    return %c0_i32, %c0_i32_0 : i32, i32
  }
  func.func @transform_7(%arg0: i32) -> (i32, i32) {
    %c0_i32 = arith.constant 0 : i32
    %c0_i32_0 = arith.constant 0 : i32
    %c0_i32_1 = arith.constant 0 : i32
    return %c0_i32, %c0_i32_0 : i32, i32
  }
  func.func @transform_8(%arg0: i32) -> (i32, i32) {
    %c0_i32 = arith.constant 0 : i32
    %c0_i32_0 = arith.constant 0 : i32
    %c0_i32_1 = arith.constant 0 : i32
    return %c0_i32, %c0_i32_0 : i32, i32
  }
  func.func @transform_9(%arg0: i32) -> (i32, i32) {
    %c0_i32 = arith.constant 0 : i32
    %c0_i32_0 = arith.constant 0 : i32
    %c0_i32_1 = arith.constant 0 : i32
    return %c0_i32, %c0_i32_0 : i32, i32
  }
  func.func @transform_10(%arg0: i32) -> (i32, i32) {
    %c0_i32 = arith.constant 0 : i32
    %c0_i32_0 = arith.constant 0 : i32
    %c0_i32_1 = arith.constant 0 : i32
    return %c0_i32, %c0_i32_0 : i32, i32
  }
  func.func @transform_11(%arg0: i32) -> (i32, i32) {
    %c0_i32 = arith.constant 0 : i32
    %c0_i32_0 = arith.constant 0 : i32
    %c0_i32_1 = arith.constant 0 : i32
    return %c0_i32, %c0_i32_0 : i32, i32
  }
  func.func @transform_12(%arg0: i32) -> (i32, i32) {
    %c0_i32 = arith.constant 0 : i32
    %c0_i32_0 = arith.constant 0 : i32
    return %arg0, %c0_i32 : i32, i32
  }
}

module attributes {stable_mosaic.version = 11 : i64} {
  func.func @_gru_kernel(%arg0: memref<16x2x192xf32, #tpu.memory_space<vmem>>, %arg1: memref<32x96xf32, #tpu.memory_space<vmem>>, %arg2: memref<1x96xf32, #tpu.memory_space<vmem>>, %arg3: memref<32x96xf32, #tpu.memory_space<vmem>>, %arg4: memref<1x96xf32, #tpu.memory_space<vmem>>, %arg5: memref<16x2x32xf32, #tpu.memory_space<vmem>>, %arg6: memref<16x2x32xf32, #tpu.memory_space<vmem>>, %arg7: memref<2x32xf32, #tpu.memory_space<vmem>>, %arg8: memref<2x32xf32, #tpu.memory_space<vmem>>) attributes {dimension_semantics = [], scalar_prefetch = 0 : i64, scratch_operands = 2 : i64, tpu.core_type = #tpu.core_type<tc>} {
    %cst = arith.constant 0.000000e+00 : f32
    %0 = vector.broadcast %cst : f32 to vector<2x32xf32>
    %c0 = arith.constant 0 : index
    %c0_0 = arith.constant 0 : index
    %1 = vector.load %arg7[%c0, %c0_0] : memref<2x32xf32, #tpu.memory_space<vmem>>, vector<2x32xf32>
    tpu.vector_store %arg7[%c0, %c0_0], %0 {strides = array<i32>} : memref<2x32xf32, #tpu.memory_space<vmem>>, vector<2x32xf32>,
    %cst_1 = arith.constant 0.000000e+00 : f32
    %2 = vector.broadcast %cst_1 : f32 to vector<2x32xf32>
    %c0_2 = arith.constant 0 : index
    %c0_3 = arith.constant 0 : index
    %3 = vector.load %arg8[%c0_2, %c0_3] : memref<2x32xf32, #tpu.memory_space<vmem>>, vector<2x32xf32>
    tpu.vector_store %arg8[%c0_2, %c0_3], %2 {strides = array<i32>} : memref<2x32xf32, #tpu.memory_space<vmem>>, vector<2x32xf32>,
    %c0_4 = arith.constant 0 : index
    %c0_5 = arith.constant 0 : index
    %4 = vector.load %arg1[%c0_4, %c0_5] : memref<32x96xf32, #tpu.memory_space<vmem>>, vector<32x96xf32>
    %c0_6 = arith.constant 0 : index
    %c0_7 = arith.constant 0 : index
    %5 = vector.load %arg2[%c0_6, %c0_7] : memref<1x96xf32, #tpu.memory_space<vmem>>, vector<1x96xf32>
    %c0_8 = arith.constant 0 : index
    %c0_9 = arith.constant 0 : index
    %6 = vector.load %arg3[%c0_8, %c0_9] : memref<32x96xf32, #tpu.memory_space<vmem>>, vector<32x96xf32>
    %c0_10 = arith.constant 0 : index
    %c0_11 = arith.constant 0 : index
    %7 = vector.load %arg4[%c0_10, %c0_11] : memref<1x96xf32, #tpu.memory_space<vmem>>, vector<1x96xf32>
    %c0_i32 = arith.constant 0 : i32
    %c16_i32 = arith.constant 16 : i32
    %8 = arith.addi %c0_i32, %c16_i32 : i32
    %c1_i32 = arith.constant 1 : i32
    scf.for %arg9 = %c0_i32 to %8 step %c1_i32  : i32 {
      %c1_i32_13 = arith.constant 1 : i32
      %9 = arith.muli %arg9, %c1_i32_13 : i32
      %c0_i32_14 = arith.constant 0 : i32
      %10 = arith.addi %c0_i32_14, %9 : i32
      %11 = arith.index_cast %10 : i32 to index
      %c0_15 = arith.constant 0 : index
      %c0_16 = arith.constant 0 : index
      %12 = vector.load %arg0[%11, %c0_15, %c0_16] : memref<16x2x192xf32, #tpu.memory_space<vmem>>, vector<1x2x192xf32>
      %13 = vector.shape_cast %12 : vector<1x2x192xf32> to vector<2x192xf32>
      %14 = vector.extract_strided_slice %13 {offsets = [0, 0], sizes = [2, 96], strides = [1, 1]} : vector<2x192xf32> to vector<2x96xf32>
      %c0_17 = arith.constant 0 : index
      %c0_18 = arith.constant 0 : index
      %15 = vector.load %arg7[%c0_17, %c0_18] : memref<2x32xf32, #tpu.memory_space<vmem>>, vector<2x32xf32>
      %cst_19 = arith.constant dense<0.000000e+00> : vector<2x96xf32>
      %16 = tpu.matmul %15, %4, %cst_19 {dimension_numbers = #tpu.dot_dimension_numbers<[1], [0], [0], [1], [0, 0, 1, 1], [], []>} : vector<2x32xf32>, vector<32x96xf32>, vector<2x96xf32> -> vector<2x96xf32>
      %17 = vector.broadcast %5 : vector<1x96xf32> to vector<2x96xf32>
      %18 = arith.addf %16, %17 : vector<2x96xf32>
      %19 = vector.extract_strided_slice %14 {offsets = [0, 0], sizes = [2, 32], strides = [1, 1]} : vector<2x96xf32> to vector<2x32xf32>
      %20 = vector.extract_strided_slice %18 {offsets = [0, 0], sizes = [2, 32], strides = [1, 1]} : vector<2x96xf32> to vector<2x32xf32>
      %21 = arith.addf %19, %20 : vector<2x32xf32>
      %22 = arith.negf %21 : vector<2x32xf32>
      %23 = math.exp %22 : vector<2x32xf32>
      %cst_20 = arith.constant 1.000000e+00 : f32
      %24 = vector.broadcast %cst_20 : f32 to vector<2x32xf32>
      %25 = arith.addf %24, %23 : vector<2x32xf32>
      %26 = arith.divf %24, %25 : vector<2x32xf32>
      %27 = vector.extract_strided_slice %14 {offsets = [0, 32], sizes = [2, 32], strides = [1, 1]} : vector<2x96xf32> to vector<2x32xf32>
      %28 = vector.extract_strided_slice %18 {offsets = [0, 32], sizes = [2, 32], strides = [1, 1]} : vector<2x96xf32> to vector<2x32xf32>
      %29 = arith.addf %27, %28 : vector<2x32xf32>
      %30 = arith.negf %29 : vector<2x32xf32>
      %31 = math.exp %30 : vector<2x32xf32>
      %cst_21 = arith.constant 1.000000e+00 : f32
      %32 = vector.broadcast %cst_21 : f32 to vector<2x32xf32>
      %33 = arith.addf %32, %31 : vector<2x32xf32>
      %34 = arith.divf %32, %33 : vector<2x32xf32>
      %35 = vector.extract_strided_slice %14 {offsets = [0, 64], sizes = [2, 32], strides = [1, 1]} : vector<2x96xf32> to vector<2x32xf32>
      %36 = vector.extract_strided_slice %18 {offsets = [0, 64], sizes = [2, 32], strides = [1, 1]} : vector<2x96xf32> to vector<2x32xf32>
      %37 = arith.mulf %26, %36 : vector<2x32xf32>
      %38 = arith.addf %35, %37 : vector<2x32xf32>
      %39 = math.tanh %38 : vector<2x32xf32>
      %cst_22 = arith.constant 1.000000e+00 : f32
      %40 = vector.broadcast %cst_22 : f32 to vector<2x32xf32>
      %41 = arith.subf %40, %34 : vector<2x32xf32>
      %42 = arith.mulf %41, %39 : vector<2x32xf32>
      %43 = arith.mulf %34, %15 : vector<2x32xf32>
      %44 = arith.addf %42, %43 : vector<2x32xf32>
      %c0_23 = arith.constant 0 : index
      %c0_24 = arith.constant 0 : index
      %45 = vector.load %arg7[%c0_23, %c0_24] : memref<2x32xf32, #tpu.memory_space<vmem>>, vector<2x32xf32>
      tpu.vector_store %arg7[%c0_23, %c0_24], %44 {strides = array<i32>} : memref<2x32xf32, #tpu.memory_space<vmem>>, vector<2x32xf32>,
      %46 = arith.index_cast %10 : i32 to index
      %c0_25 = arith.constant 0 : index
      %c0_26 = arith.constant 0 : index
      %47 = vector.load %arg5[%46, %c0_25, %c0_26] : memref<16x2x32xf32, #tpu.memory_space<vmem>>, vector<1x2x32xf32>
      %48 = vector.shape_cast %47 : vector<1x2x32xf32> to vector<2x32xf32>
      %49 = vector.shape_cast %44 : vector<2x32xf32> to vector<1x2x32xf32>
      tpu.vector_store %arg5[%46, %c0_25, %c0_26], %49 {strides = array<i32>} : memref<16x2x32xf32, #tpu.memory_space<vmem>>, vector<1x2x32xf32>,
      %c15_i32 = arith.constant 15 : i32
      %50 = arith.subi %c15_i32, %10 : i32
      %51 = arith.index_cast %50 : i32 to index
      %c0_27 = arith.constant 0 : index
      %c0_28 = arith.constant 0 : index
      %52 = vector.load %arg0[%51, %c0_27, %c0_28] : memref<16x2x192xf32, #tpu.memory_space<vmem>>, vector<1x2x192xf32>
      %53 = vector.shape_cast %52 : vector<1x2x192xf32> to vector<2x192xf32>
      %54 = vector.extract_strided_slice %53 {offsets = [0, 96], sizes = [2, 96], strides = [1, 1]} : vector<2x192xf32> to vector<2x96xf32>
      %c0_29 = arith.constant 0 : index
      %c0_30 = arith.constant 0 : index
      %55 = vector.load %arg8[%c0_29, %c0_30] : memref<2x32xf32, #tpu.memory_space<vmem>>, vector<2x32xf32>
      %cst_31 = arith.constant dense<0.000000e+00> : vector<2x96xf32>
      %56 = tpu.matmul %55, %6, %cst_31 {dimension_numbers = #tpu.dot_dimension_numbers<[1], [0], [0], [1], [0, 0, 1, 1], [], []>} : vector<2x32xf32>, vector<32x96xf32>, vector<2x96xf32> -> vector<2x96xf32>
      %57 = vector.broadcast %7 : vector<1x96xf32> to vector<2x96xf32>
      %58 = arith.addf %56, %57 : vector<2x96xf32>
      %59 = vector.extract_strided_slice %54 {offsets = [0, 0], sizes = [2, 32], strides = [1, 1]} : vector<2x96xf32> to vector<2x32xf32>
      %60 = vector.extract_strided_slice %58 {offsets = [0, 0], sizes = [2, 32], strides = [1, 1]} : vector<2x96xf32> to vector<2x32xf32>
      %61 = arith.addf %59, %60 : vector<2x32xf32>
      %62 = arith.negf %61 : vector<2x32xf32>
      %63 = math.exp %62 : vector<2x32xf32>
      %cst_32 = arith.constant 1.000000e+00 : f32
      %64 = vector.broadcast %cst_32 : f32 to vector<2x32xf32>
      %65 = arith.addf %64, %63 : vector<2x32xf32>
      %66 = arith.divf %64, %65 : vector<2x32xf32>
      %67 = vector.extract_strided_slice %54 {offsets = [0, 32], sizes = [2, 32], strides = [1, 1]} : vector<2x96xf32> to vector<2x32xf32>
      %68 = vector.extract_strided_slice %58 {offsets = [0, 32], sizes = [2, 32], strides = [1, 1]} : vector<2x96xf32> to vector<2x32xf32>
      %69 = arith.addf %67, %68 : vector<2x32xf32>
      %70 = arith.negf %69 : vector<2x32xf32>
      %71 = math.exp %70 : vector<2x32xf32>
      %cst_33 = arith.constant 1.000000e+00 : f32
      %72 = vector.broadcast %cst_33 : f32 to vector<2x32xf32>
      %73 = arith.addf %72, %71 : vector<2x32xf32>
      %74 = arith.divf %72, %73 : vector<2x32xf32>
      %75 = vector.extract_strided_slice %54 {offsets = [0, 64], sizes = [2, 32], strides = [1, 1]} : vector<2x96xf32> to vector<2x32xf32>
      %76 = vector.extract_strided_slice %58 {offsets = [0, 64], sizes = [2, 32], strides = [1, 1]} : vector<2x96xf32> to vector<2x32xf32>
      %77 = arith.mulf %66, %76 : vector<2x32xf32>
      %78 = arith.addf %75, %77 : vector<2x32xf32>
      %79 = math.tanh %78 : vector<2x32xf32>
      %cst_34 = arith.constant 1.000000e+00 : f32
      %80 = vector.broadcast %cst_34 : f32 to vector<2x32xf32>
      %81 = arith.subf %80, %74 : vector<2x32xf32>
      %82 = arith.mulf %81, %79 : vector<2x32xf32>
      %83 = arith.mulf %74, %55 : vector<2x32xf32>
      %84 = arith.addf %82, %83 : vector<2x32xf32>
      %c0_35 = arith.constant 0 : index
      %c0_36 = arith.constant 0 : index
      %85 = vector.load %arg8[%c0_35, %c0_36] : memref<2x32xf32, #tpu.memory_space<vmem>>, vector<2x32xf32>
      tpu.vector_store %arg8[%c0_35, %c0_36], %84 {strides = array<i32>} : memref<2x32xf32, #tpu.memory_space<vmem>>, vector<2x32xf32>,
      %86 = arith.index_cast %50 : i32 to index
      %c0_37 = arith.constant 0 : index
      %c0_38 = arith.constant 0 : index
      %87 = vector.load %arg6[%86, %c0_37, %c0_38] : memref<16x2x32xf32, #tpu.memory_space<vmem>>, vector<1x2x32xf32>
      %88 = vector.shape_cast %87 : vector<1x2x32xf32> to vector<2x32xf32>
      %89 = vector.shape_cast %84 : vector<2x32xf32> to vector<1x2x32xf32>
      tpu.vector_store %arg6[%86, %c0_37, %c0_38], %89 {strides = array<i32>} : memref<16x2x32xf32, #tpu.memory_space<vmem>>, vector<1x2x32xf32>,
    }
    %c16_i32_12 = arith.constant 16 : i32
    return
  }
}

</mosaic_0001>

<llo_original>
// kernel: cbhg_forward.5
$region0: #{cbhg_forward.5}
  #allocation0 [shape = 'u32[]', space=smem, size = 0x4, offset = 0x4, fixed_abs, tag = 'smem constant byte address 0x4 - core index']
  #allocation1 [shape = 'u32[144,128]{1,0:T(1,128)}', space=vmem, size = 0x12000, scoped, tag = 'internal scratch']
  #allocation2 [shape = 'f32[2,32]{1,0:T(2,128)}', space=vmem, size = 0x400, scoped, tag = 'scratch operand']
  #allocation3 [shape = 'f32[2,32]{1,0:T(2,128)}', space=vmem, size = 0x400, scoped, tag = 'scratch operand']
  %s0 = inlined_call_operand.vmem [shape: f32[16,2,192], index: 0, kind: input, shape index: {}]
  %s1 = inlined_call_operand.vmem [shape: f32[32,96], index: 1, kind: input, shape index: {}]
  %s2 = inlined_call_operand.vmem [shape: f32[1,96], index: 2, kind: input, shape index: {}]
  %s3 = inlined_call_operand.vmem [shape: f32[32,96], index: 3, kind: input, shape index: {}]
  %s4 = inlined_call_operand.vmem [shape: f32[1,96], index: 4, kind: input, shape index: {}]
  %s5 = inlined_call_operand.vmem [shape: f32[16,2,32], index: 5, kind: output, shape index: {0}]
  %s6 = inlined_call_operand.vmem [shape: f32[16,2,32], index: 6, kind: output, shape index: {1}]
  %7 = xla_tuple %s5, %s6
  %s8 = sld [smem:[#allocation0]]
  $region45: #{cbhg_forward.5} parent=0
    _
  %s10 = ssub.s32 1, %s8
  %s11 = scalar_select 0, %s10, %s8
  // Predicated region
  $region2: #{cbhg_forward.5} parent=0 // pred_check
    _
  $region3: #{cbhg_forward.5} parent=0 // pred_check_branch
    %13 = sbr.rel (0) target = $region5
  $region4: #{cbhg_forward.5} parent=0 // pred_region
    _
  $region5: #{cbhg_forward.5} parent=0 // pred_fallthru
    _
  // Predicated region
  $region6: #{cbhg_forward.5} parent=0 // pred_check
    _
  $region7: #{cbhg_forward.5} parent=0 // pred_check_branch
    %15 = sbr.rel (0) target = $region9
  $region8: #{cbhg_forward.5} parent=0 // pred_region
    _
  $region9: #{cbhg_forward.5} parent=0 // pred_fallthru
    _
  // Predicated region
  $region10: #{cbhg_forward.5} parent=0 // pred_check
    _
  $region11: #{cbhg_forward.5} parent=0 // pred_check_branch
    %17 = sbr.rel (0) target = $region13
  $region12: #{cbhg_forward.5} parent=0 // pred_region
    _
  $region13: #{cbhg_forward.5} parent=0 // pred_fallthru
    _
  // Predicated region
  $region14: #{cbhg_forward.5} parent=0 // pred_check
    _
  $region15: #{cbhg_forward.5} parent=0 // pred_check_branch
    %19 = sbr.rel (0) target = $region17
  $region16: #{cbhg_forward.5} parent=0 // pred_region
    _
  $region17: #{cbhg_forward.5} parent=0 // pred_fallthru
    _
  // Predicated region
  $region18: #{cbhg_forward.5} parent=0 // pred_check
    _
  $region19: #{cbhg_forward.5} parent=0 // pred_check_branch
    %21 = sbr.rel (0) target = $region21
  $region20: #{cbhg_forward.5} parent=0 // pred_region
    _
  $region21: #{cbhg_forward.5} parent=0 // pred_fallthru
    _
  %vm22 = vcmask 254976
  %23 = vst.msk [vmem:[#allocation2] sm:$0x3] %vm22, 0.0
  %24 = vst.msk [vmem:[#allocation3] sm:$0x3] %vm22, 0.0
  %v25 = vld [vmem:[%s1] sm:$0xff]
  %v26 = vld [vmem:[%s1 + $0x8] sm:$0xff]
  %v27 = vld [vmem:[%s1 + $0x10] sm:$0xff]
  %v28 = vld [vmem:[%s1 + $0x18] sm:$0xff]
  %v29 = vld [vmem:[%s2] sm:$0x1]
  %v30 = vld [vmem:[%s3] sm:$0xff]
  %v31 = vld [vmem:[%s3 + $0x8] sm:$0xff]
  %v32 = vld [vmem:[%s3 + $0x10] sm:$0xff]
  %v33 = vld [vmem:[%s3 + $0x18] sm:$0xff]
  %v34 = vld [vmem:[%s4] sm:$0x1]
  loop: start=0, step=1, limit=16
  $region22: #{cbhg_forward.5} parent=0 // loop_pre_header
    _
  $region23: #{cbhg_forward.5} parent=0 // loop_header
    %s36 = sphi 0, %s40
    %p37 = scmp.ge.s32.totalorder %s36, 16
  $region24: #{cbhg_forward.5} parent=0 // loop_header_branch
    %39 = sbr.rel (%p37) target = $region28
  $region25: #{cbhg_forward.5} parent=0 // loop_body
    %s41 = smul.u32 %s36, 2
    %s42 = smul.addr %s41, 2
    %s43 = scalar_lea.vmem %s0, %s42
    %v44 = vld [vmem:[%s43] sm:$0xf]
    %v45 = vld [vmem:[#allocation2] sm:$0x3]
    %v47 = vlaneseq
    %v48 = vshrl.u32 %v47, 7
    %v49 = vsub.s32 0, %v48
    %v50 = vrot.slane %v29, %v49
    %vm52 = vcmask 261120
    %v54 = vsel %vm52, %v45, 0
    %56 = vmatprep.subr.mxu0 0.0
    %57 = vmatpush1.msra.mxu0 %v25
    %58 = vmatprep.subr.mxu0 0.0
    %59 = vmatpush1.msra.mxu0 %v26
    %60 = vmatprep.subr.mxu0 0.0
    %61 = vmatpush1.msra.mxu0 %v27
    %62 = vmatprep.subr.mxu0 0.0
    %63 = vmatpush1.msra.mxu0 %v28
    %64 = vmatprep.subr.mxu0 0.0
    %65 = vmatpush1.msra.mxu0 0.0
    %66 = vmatprep.subr.mxu0 0.0
    %67 = vmatpush1.msra.mxu0 0.0
    %68 = vmatprep.subr.mxu0 0.0
    %69 = vmatpush1.msra.mxu0 0.0
    %70 = vmatprep.subr.mxu0 0.0
    %71 = vmatpush1.msra.mxu0 0.0
    %72 = vmatprep.subr.mxu0 0.0
    %73 = vmatpush1.msra.mxu0 0.0
    %74 = vmatprep.subr.mxu0 0.0
    %75 = vmatpush1.msra.mxu0 0.0
    %76 = vmatprep.subr.mxu0 0.0
    %77 = vmatpush1.msra.mxu0 0.0
    %78 = vmatprep.subr.mxu0 0.0
    %79 = vmatpush1.msra.mxu0 0.0
    %80 = vmatprep.subr.mxu0 0.0
    %81 = vmatpush1.msra.mxu0 0.0
    %82 = vmatprep.subr.mxu0 0.0
    %83 = vmatpush1.msra.mxu0 0.0
    %84 = vmatprep.subr.mxu0 0.0
    %85 = vmatpush1.msra.mxu0 0.0
    %86 = vmatprep.subr.mxu0 0.0
    %87 = vmatpush1.msra.mxu0 0.0
    %88 = vmatprep.subr.mxu0 0.0
    %89 = vmatpush1.msra.mxu0 0.0
    %90 = vmatprep.subr.mxu0 0.0
    %91 = vmatpush1.msra.mxu0 0.0
    %92 = vmatprep.subr.mxu0 0.0
    %93 = vmatpush1.msra.mxu0 0.0
    %94 = vmatprep.subr.mxu0 0.0
    %95 = vmatpush1.msra.mxu0 0.0
    %96 = vmatprep.subr.mxu0 0.0
    %97 = vmatpush1.msra.mxu0 0.0
    %98 = vmatprep.subr.mxu0 0.0
    %99 = vmatpush1.msra.mxu0 0.0
    %100 = vmatprep.subr.mxu0 0.0
    %101 = vmatpush1.msra.mxu0 0.0
    %102 = vmatprep.subr.mxu0 0.0
    %103 = vmatpush1.msra.mxu0 0.0
    %104 = vmatprep.subr.mxu0 0.0
    %105 = vmatpush1.msra.mxu0 0.0
    %106 = vmatprep.subr.mxu0 0.0
    %107 = vmatpush1.msra.mxu0 0.0
    %108 = vmatprep.subr.mxu0 0.0
    %109 = vmatpush1.msra.mxu0 0.0
    %110 = vmatprep.subr.mxu0 0.0
    %111 = vmatpush1.msra.mxu0 0.0
    %112 = vmatprep.subr.mxu0 0.0
    %113 = vmatpush1.msra.mxu0 0.0
    %114 = vmatprep.subr.mxu0 0.0
    %115 = vmatpush1.msra.mxu0 0.0
    %116 = vmatprep.subr.mxu0 0.0
    %117 = vmatpush1.msra.mxu0 0.0
    %118 = vmatprep.subr.mxu0 0.0
    %119 = vmatpush1.msra.mxu0 0.0
    %120 = vmatprep.mubr.f32.mxu0 0.0
    %121 = vmatmul.mubr.f32.gmra.mrb[0].mxu0 %v54
    %v122 = vpop.f32.mrb[0].mxu0
    %v123 = vadd.f32 %v50, %v122
    %v124 = vpop.f32.mrb[0].mxu0
    %125 = vdwg.mxu0
    %v126 = vadd.f32 %v44, %v123
    %v127 = vxor.u32 %v126, 2147483648
    %v128 = vmul.f32 %v127, 1.442695
    %v129 = vpow.pop %v128
    %v130 = vadd.f32 %v129, 1.0
    %v131 = vrcp.pop %v130
    %v132 = vmul.f32 1.0, %v131
    %v135 = vunpack.c.l.s4 1983009808
    %v136 = vunpack.c.0.s8 %v135
    %v137 = vlaneseq
    %v138 = vshrl.u32 %v137, 7
    %v139 = vsub.s32 %v136, %v138
    %v140 = vrot.slane %v123, %v139
    %141 = vrot.lane.b32.xlu0 %v140, 64
    %v142 = vpop.permute.xlu0 %141
    %v144 = vmul.f32 %v132, %v142
    %146 = vrot.lane.b32.xlu0 %v144, 64
    %v147 = vpop.permute.xlu0 %146
    %v149 = vadd.f32 %v44, %v147
    %v150 = vtanh.pop %v149
    %v151 = vsub.f32 1.0, %v132
    %153 = vrot.lane.b32.xlu0 %v150, 96
    %v154 = vpop.permute.xlu0 %153
    %v156 = vmul.f32 %v151, %v154
    %v158 = vunpack.c.l.s4 1983009808
    %v159 = vunpack.c.0.s8 %v158
    %v160 = vlaneseq
    %v161 = vshrl.u32 %v160, 7
    %v162 = vsub.s32 %v159, %v161
    %v163 = vrot.slane %v45, %v162
    %164 = vrot.lane.b32.xlu0 %v163, 32
    %v165 = vpop.permute.xlu0 %164
    %v167 = vmul.f32 %v132, %v165
    %v168 = vadd.f32 %v156, %v167
    %v171 = vunpack.c.l.s4 1983009808
    %v172 = vunpack.c.0.s8 %v171
    %v173 = vlaneseq
    %v174 = vshrl.u32 %v173, 7
    %v175 = vsub.s32 %v172, %v174
    %v176 = vrot.slane %v168, %v175
    %177 = vrot.lane.b32.xlu0 %v176, 96
    %v178 = vpop.permute.xlu0 %177
    %180 = vst.msk [vmem:[#allocation2] sm:$0x3] %vm22, %v178
    %s181 = scalar_lea.vmem %s5, %s41
    %182 = vst.msk [vmem:[%s181] sm:$0x3] %vm22, %v178
    %s183 = ssub.s32 15, %s36
    %s184 = smul.u32 %s183, 2
    %s185 = smul.addr %s184, 2
    %s186 = scalar_lea.vmem %s0, %s185
    %v187 = vld [vmem:[%s186] sm:$0xf]
    %v188 = vld [vmem:[#allocation3] sm:$0x3]
    %v190 = vlaneseq
    %v191 = vshrl.u32 %v190, 7
    %v192 = vsub.s32 0, %v191
    %v193 = vrot.slane %v34, %v192
    %v196 = vsel %vm52, %v188, 0
    %198 = vmatprep.subr.mxu0 0.0
    %199 = vmatpush1.msra.mxu0 %v30
    %200 = vmatprep.subr.mxu0 0.0
    %201 = vmatpush1.msra.mxu0 %v31
    %202 = vmatprep.subr.mxu0 0.0
    %203 = vmatpush1.msra.mxu0 %v32
    %204 = vmatprep.subr.mxu0 0.0
    %205 = vmatpush1.msra.mxu0 %v33
    %206 = vmatprep.subr.mxu0 0.0
    %207 = vmatpush1.msra.mxu0 0.0
    %208 = vmatprep.subr.mxu0 0.0
    %209 = vmatpush1.msra.mxu0 0.0
    %210 = vmatprep.subr.mxu0 0.0
    %211 = vmatpush1.msra.mxu0 0.0
    %212 = vmatprep.subr.mxu0 0.0
    %213 = vmatpush1.msra.mxu0 0.0
    %214 = vmatprep.subr.mxu0 0.0
    %215 = vmatpush1.msra.mxu0 0.0
    %216 = vmatprep.subr.mxu0 0.0
    %217 = vmatpush1.msra.mxu0 0.0
    %218 = vmatprep.subr.mxu0 0.0
    %219 = vmatpush1.msra.mxu0 0.0
    %220 = vmatprep.subr.mxu0 0.0
    %221 = vmatpush1.msra.mxu0 0.0
    %222 = vmatprep.subr.mxu0 0.0
    %223 = vmatpush1.msra.mxu0 0.0
    %224 = vmatprep.subr.mxu0 0.0
    %225 = vmatpush1.msra.mxu0 0.0
    %226 = vmatprep.subr.mxu0 0.0
    %227 = vmatpush1.msra.mxu0 0.0
    %228 = vmatprep.subr.mxu0 0.0
    %229 = vmatpush1.msra.mxu0 0.0
    %230 = vmatprep.subr.mxu0 0.0
    %231 = vmatpush1.msra.mxu0 0.0
    %232 = vmatprep.subr.mxu0 0.0
    %233 = vmatpush1.msra.mxu0 0.0
    %234 = vmatprep.subr.mxu0 0.0
    %235 = vmatpush1.msra.mxu0 0.0
    %236 = vmatprep.subr.mxu0 0.0
    %237 = vmatpush1.msra.mxu0 0.0
    %238 = vmatprep.subr.mxu0 0.0
    %239 = vmatpush1.msra.mxu0 0.0
    %240 = vmatprep.subr.mxu0 0.0
    %241 = vmatpush1.msra.mxu0 0.0
    %242 = vmatprep.subr.mxu0 0.0
    %243 = vmatpush1.msra.mxu0 0.0
    %244 = vmatprep.subr.mxu0 0.0
    %245 = vmatpush1.msra.mxu0 0.0
    %246 = vmatprep.subr.mxu0 0.0
    %247 = vmatpush1.msra.mxu0 0.0
    %248 = vmatprep.subr.mxu0 0.0
    %249 = vmatpush1.msra.mxu0 0.0
    %250 = vmatprep.subr.mxu0 0.0
    %251 = vmatpush1.msra.mxu0 0.0
    %252 = vmatprep.subr.mxu0 0.0
    %253 = vmatpush1.msra.mxu0 0.0
    %254 = vmatprep.subr.mxu0 0.0
    %255 = vmatpush1.msra.mxu0 0.0
    %256 = vmatprep.subr.mxu0 0.0
    %257 = vmatpush1.msra.mxu0 0.0
    %258 = vmatprep.subr.mxu0 0.0
    %259 = vmatpush1.msra.mxu0 0.0
    %260 = vmatprep.subr.mxu0 0.0
    %261 = vmatpush1.msra.mxu0 0.0
    %262 = vmatprep.mubr.f32.mxu0 0.0
    %263 = vmatmul.mubr.f32.gmra.mrb[0].mxu0 %v196
    %v264 = vpop.f32.mrb[0].mxu0
    %v265 = vadd.f32 %v193, %v264
    %v266 = vpop.f32.mrb[0].mxu0
    %267 = vdwg.mxu0
    %v270 = vunpack.c.l.s4 1983009808
    %v271 = vunpack.c.0.s8 %v270
    %v272 = vlaneseq
    %v273 = vshrl.u32 %v272, 7
    %v274 = vsub.s32 %v271, %v273
    %v275 = vrot.slane %v265, %v274
    %276 = vrot.lane.b32.xlu0 %v275, 96
    %v277 = vpop.permute.xlu0 %276
    %v279 = vadd.f32 %v187, %v277
    %v280 = vxor.u32 %v279, 2147483648
    %v281 = vmul.f32 %v280, 1.442695
    %v282 = vpow.pop %v281
    %v283 = vadd.f32 %v282, 1.0
    %v284 = vrcp.pop %v283
    %v285 = vmul.f32 1.0, %v284
    %v287 = vrot.slane %v187, 2
    %v289 = vadd.f32 %v287, %v277
    %v290 = vxor.u32 %v289, 2147483648
    %v291 = vmul.f32 %v290, 1.442695
    %v292 = vpow.pop %v291
    %v293 = vadd.f32 %v292, 1.0
    %v294 = vrcp.pop %v293
    %v295 = vmul.f32 1.0, %v294
    %296 = vrot.lane.b32.xlu0 %v275, 32
    %v297 = vpop.permute.xlu0 %296
    %v299 = vmul.f32 %v285, %v297
    %300 = vrot.lane.b32.xlu0 %v187, 96
    %v301 = vpop.permute.xlu0 %300
    %v302 = vrot.slane %v301, 2
    %305 = vrot.lane.b32.xlu0 %v299, 32
    %v306 = vpop.permute.xlu0 %305
    %v308 = vadd.f32 %v302, %v306
    %v309 = vtanh.pop %v308
    %v310 = vsub.f32 1.0, %v295
    %v311 = vmul.f32 %v310, %v309
    %v312 = vmul.f32 %v295, %v188
    %v313 = vadd.f32 %v311, %v312
    %314 = vst.msk [vmem:[#allocation3] sm:$0x3] %vm22, %v313
    %s315 = scalar_lea.vmem %s6, %s184
    %316 = vst.msk [vmem:[%s315] sm:$0x3] %vm22, %v313
  $region26: #{cbhg_forward.5} parent=0 // loop_footer
    %s40 = sadd.s32 1, %s36
  $region27: #{cbhg_forward.5} parent=0 // loop_footer_branch
    %35 = sbr.rel target = $region23
  $region28: #{cbhg_forward.5} parent=0 // loop_exit
    _
  // Predicated region
  $region29: #{cbhg_forward.5} parent=0 // pred_check
    _
  $region30: #{cbhg_forward.5} parent=0 // pred_check_branch
    %318 = sbr.rel (0) target = $region32
  $region31: #{cbhg_forward.5} parent=0 // pred_region
    _
  $region32: #{cbhg_forward.5} parent=0 // pred_fallthru
    _
  // Predicated region
  $region33: #{cbhg_forward.5} parent=0 // pred_check
    _
  $region34: #{cbhg_forward.5} parent=0 // pred_check_branch
    %320 = sbr.rel (0) target = $region36
  $region35: #{cbhg_forward.5} parent=0 // pred_region
    _
  $region36: #{cbhg_forward.5} parent=0 // pred_fallthru
    _
  // Predicated region
  $region37: #{cbhg_forward.5} parent=0 // pred_check
    _
  $region38: #{cbhg_forward.5} parent=0 // pred_check_branch
    %322 = sbr.rel (0) target = $region40
  $region39: #{cbhg_forward.5} parent=0 // pred_region
    _
  $region40: #{cbhg_forward.5} parent=0 // pred_fallthru
    _
  // Predicated region
  $region41: #{cbhg_forward.5} parent=0 // pred_check
    _
  $region42: #{cbhg_forward.5} parent=0 // pred_check_branch
    %324 = sbr.rel (0) target = $region44
  $region43: #{cbhg_forward.5} parent=0 // pred_region
    _
  $region44: #{cbhg_forward.5} parent=0 // pred_fallthru
    _

// kernel: cbhg_forward.4
$region0: #{cbhg_forward.4}
  #allocation0 [shape = 'u32[]', space=smem, size = 0x4, offset = 0x4, fixed_abs, tag = 'smem constant byte address 0x4 - core index']
  #allocation1 [shape = 'u32[144,128]{1,0:T(1,128)}', space=vmem, size = 0x12000, scoped, tag = 'internal scratch']
  %s0 = inlined_call_operand.vmem [shape: f32[16,32], index: 0, kind: input, shape index: {}]
  %s1 = inlined_call_operand.vmem [shape: f32[32,16], index: 1, kind: input, shape index: {}]
  %s2 = inlined_call_operand.vmem [shape: f32[32,32], index: 2, kind: input, shape index: {}]
  %s3 = inlined_call_operand.vmem [shape: f32[32,1], index: 3, kind: input, shape index: {}]
  %s4 = inlined_call_operand.vmem [shape: f32[32,32], index: 4, kind: input, shape index: {}]
  %s5 = inlined_call_operand.vmem [shape: f32[32,1], index: 5, kind: input, shape index: {}]
  %s6 = inlined_call_operand.vmem [shape: f32[32,32], index: 6, kind: input, shape index: {}]
  %s7 = inlined_call_operand.vmem [shape: f32[32,1], index: 7, kind: input, shape index: {}]
  %s8 = inlined_call_operand.vmem [shape: f32[32,32], index: 8, kind: input, shape index: {}]
  %s9 = inlined_call_operand.vmem [shape: f32[32,1], index: 9, kind: input, shape index: {}]
  %s10 = inlined_call_operand.vmem [shape: f32[192,32], index: 10, kind: input, shape index: {}]
  %s11 = inlined_call_operand.vmem [shape: f32[192,1], index: 11, kind: input, shape index: {}]
  %s12 = inlined_call_operand.vmem [shape: f32[32,192], index: 12, kind: output, shape index: {}]
  %s13 = sld [smem:[#allocation0]]
  $region58: #{cbhg_forward.4} parent=0
    _
  %s15 = ssub.s32 1, %s13
  %s16 = scalar_select 0, %s15, %s13
  // Predicated region
  $region2: #{cbhg_forward.4} parent=0 // pred_check
    _
  $region3: #{cbhg_forward.4} parent=0 // pred_check_branch
    %18 = sbr.rel (0) target = $region5
  $region4: #{cbhg_forward.4} parent=0 // pred_region
    _
  $region5: #{cbhg_forward.4} parent=0 // pred_fallthru
    _
  // Predicated region
  $region6: #{cbhg_forward.4} parent=0 // pred_check
    _
  $region7: #{cbhg_forward.4} parent=0 // pred_check_branch
    %20 = sbr.rel (0) target = $region9
  $region8: #{cbhg_forward.4} parent=0 // pred_region
    _
  $region9: #{cbhg_forward.4} parent=0 // pred_fallthru
    _
  // Predicated region
  $region10: #{cbhg_forward.4} parent=0 // pred_check
    _
  $region11: #{cbhg_forward.4} parent=0 // pred_check_branch
    %22 = sbr.rel (0) target = $region13
  $region12: #{cbhg_forward.4} parent=0 // pred_region
    _
  $region13: #{cbhg_forward.4} parent=0 // pred_fallthru
    _
  // Predicated region
  $region14: #{cbhg_forward.4} parent=0 // pred_check
    _
  $region15: #{cbhg_forward.4} parent=0 // pred_check_branch
    %24 = sbr.rel (0) target = $region17
  $region16: #{cbhg_forward.4} parent=0 // pred_region
    _
  $region17: #{cbhg_forward.4} parent=0 // pred_fallthru
    _
  // Predicated region
  $region18: #{cbhg_forward.4} parent=0 // pred_check
    _
  $region19: #{cbhg_forward.4} parent=0 // pred_check_branch
    %26 = sbr.rel (0) target = $region21
  $region20: #{cbhg_forward.4} parent=0 // pred_region
    _
  $region21: #{cbhg_forward.4} parent=0 // pred_fallthru
    _
  // Predicated region
  $region22: #{cbhg_forward.4} parent=0 // pred_check
    _
  $region23: #{cbhg_forward.4} parent=0 // pred_check_branch
    %28 = sbr.rel (0) target = $region25
  $region24: #{cbhg_forward.4} parent=0 // pred_region
    _
  $region25: #{cbhg_forward.4} parent=0 // pred_fallthru
    _
  // Predicated region
  $region26: #{cbhg_forward.4} parent=0 // pred_check
    _
  $region27: #{cbhg_forward.4} parent=0 // pred_check_branch
    %30 = sbr.rel (0) target = $region29
  $region28: #{cbhg_forward.4} parent=0 // pred_region
    _
  $region29: #{cbhg_forward.4} parent=0 // pred_fallthru
    _
  // Predicated region
  $region30: #{cbhg_forward.4} parent=0 // pred_check
    _
  $region31: #{cbhg_forward.4} parent=0 // pred_check_branch
    %32 = sbr.rel (0) target = $region33
  $region32: #{cbhg_forward.4} parent=0 // pred_region
    _
  $region33: #{cbhg_forward.4} parent=0 // pred_fallthru
    _
  // Predicated region
  $region34: #{cbhg_forward.4} parent=0 // pred_check
    _
  $region35: #{cbhg_forward.4} parent=0 // pred_check_branch
    %34 = sbr.rel (0) target = $region37
  $region36: #{cbhg_forward.4} parent=0 // pred_region
    _
  $region37: #{cbhg_forward.4} parent=0 // pred_fallthru
    _
  // Predicated region
  $region38: #{cbhg_forward.4} parent=0 // pred_check
    _
  $region39: #{cbhg_forward.4} parent=0 // pred_check_branch
    %36 = sbr.rel (0) target = $region41
  $region40: #{cbhg_forward.4} parent=0 // pred_region
    _
  $region41: #{cbhg_forward.4} parent=0 // pred_fallthru
    _
  // Predicated region
  $region42: #{cbhg_forward.4} parent=0 // pred_check
    _
  $region43: #{cbhg_forward.4} parent=0 // pred_check_branch
    %38 = sbr.rel (0) target = $region45
  $region44: #{cbhg_forward.4} parent=0 // pred_region
    _
  $region45: #{cbhg_forward.4} parent=0 // pred_fallthru
    _
  // Predicated region
  $region46: #{cbhg_forward.4} parent=0 // pred_check
    _
  $region47: #{cbhg_forward.4} parent=0 // pred_check_branch
    %40 = sbr.rel (0) target = $region49
  $region48: #{cbhg_forward.4} parent=0 // pred_region
    _
  $region49: #{cbhg_forward.4} parent=0 // pred_fallthru
    _
  %v41 = vld [vmem:[%s0] sm:$0xff]
  %v42 = vld [vmem:[%s0 + $0x8] sm:$0xff]
  %v43 = vld [vmem:[%s1] sm:$0xff]
  %v44 = vld [vmem:[%s1 + $0x8] sm:$0xff]
  %v45 = vld [vmem:[%s1 + $0x10] sm:$0xff]
  %v46 = vld [vmem:[%s1 + $0x18] sm:$0xff]
  %vm47 = vcmask 130048
  %v49 = vsel %vm47, %v43, 0
  %v52 = vsel %vm47, %v44, 0
  %v55 = vsel %vm47, %v45, 0
  %v58 = vsel %vm47, %v46, 0
  %60 = vmatprep.subr.mxu0 0.0
  %61 = vmatpush1.msra.mxu0 %v41
  %62 = vmatprep.subr.mxu0 0.0
  %63 = vmatpush1.msra.mxu0 %v42
  %64 = vmatprep.subr.mxu0 0.0
  %65 = vmatpush1.msra.mxu0 0.0
  %66 = vmatprep.subr.mxu0 0.0
  %67 = vmatpush1.msra.mxu0 0.0
  %68 = vmatprep.subr.mxu0 0.0
  %69 = vmatpush1.msra.mxu0 0.0
  %70 = vmatprep.subr.mxu0 0.0
  %71 = vmatpush1.msra.mxu0 0.0
  %72 = vmatprep.subr.mxu0 0.0
  %73 = vmatpush1.msra.mxu0 0.0
  %74 = vmatprep.subr.mxu0 0.0
  %75 = vmatpush1.msra.mxu0 0.0
  %76 = vmatprep.subr.mxu0 0.0
  %77 = vmatpush1.msra.mxu0 0.0
  %78 = vmatprep.subr.mxu0 0.0
  %79 = vmatpush1.msra.mxu0 0.0
  %80 = vmatprep.subr.mxu0 0.0
  %81 = vmatpush1.msra.mxu0 0.0
  %82 = vmatprep.subr.mxu0 0.0
  %83 = vmatpush1.msra.mxu0 0.0
  %84 = vmatprep.subr.mxu0 0.0
  %85 = vmatpush1.msra.mxu0 0.0
  %86 = vmatprep.subr.mxu0 0.0
  %87 = vmatpush1.msra.mxu0 0.0
  %88 = vmatprep.subr.mxu0 0.0
  %89 = vmatpush1.msra.mxu0 0.0
  %90 = vmatprep.subr.mxu0 0.0
  %91 = vmatpush1.msra.mxu0 0.0
  %92 = vmatprep.subr.mxu0 0.0
  %93 = vmatpush1.msra.mxu0 0.0
  %94 = vmatprep.subr.mxu0 0.0
  %95 = vmatpush1.msra.mxu0 0.0
  %96 = vmatprep.subr.mxu0 0.0
  %97 = vmatpush1.msra.mxu0 0.0
  %98 = vmatprep.subr.mxu0 0.0
  %99 = vmatpush1.msra.mxu0 0.0
  %100 = vmatprep.subr.mxu0 0.0
  %101 = vmatpush1.msra.mxu0 0.0
  %102 = vmatprep.subr.mxu0 0.0
  %103 = vmatpush1.msra.mxu0 0.0
  %104 = vmatprep.subr.mxu0 0.0
  %105 = vmatpush1.msra.mxu0 0.0
  %106 = vmatprep.subr.mxu0 0.0
  %107 = vmatpush1.msra.mxu0 0.0
  %108 = vmatprep.subr.mxu0 0.0
  %109 = vmatpush1.msra.mxu0 0.0
  %110 = vmatprep.subr.mxu0 0.0
  %111 = vmatpush1.msra.mxu0 0.0
  %112 = vmatprep.subr.mxu0 0.0
  %113 = vmatpush1.msra.mxu0 0.0
  %114 = vmatprep.subr.mxu0 0.0
  %115 = vmatpush1.msra.mxu0 0.0
  %116 = vmatprep.subr.mxu0 0.0
  %117 = vmatpush1.msra.mxu0 0.0
  %118 = vmatprep.subr.mxu0 0.0
  %119 = vmatpush1.msra.mxu0 0.0
  %120 = vmatprep.subr.mxu0 0.0
  %121 = vmatpush1.msra.mxu0 0.0
  %122 = vmatprep.subr.mxu0 0.0
  %123 = vmatpush1.msra.mxu0 0.0
  %124 = vmatprep.mubr.f32.mxu0 0.0
  %125 = vmatmul.mubr.f32.gmra.mrb[0].mxu0 %v49
  %v126 = vpop.f32.mrb[0].mxu0
  %v127 = vadd.f32 0.0, %v126
  %v128 = vpop.f32.mrb[0].mxu0
  %129 = vmatprep.mubr.f32.mxu0 0.0
  %130 = vmatmul.mubr.f32.gmra.mrb[0].mxu0 %v52
  %v131 = vpop.f32.mrb[0].mxu0
  %v132 = vadd.f32 0.0, %v131
  %v133 = vpop.f32.mrb[0].mxu0
  %134 = vmatprep.mubr.f32.mxu0 0.0
  %135 = vmatmul.mubr.f32.gmra.mrb[0].mxu0 %v55
  %v136 = vpop.f32.mrb[0].mxu0
  %v137 = vadd.f32 0.0, %v136
  %v138 = vpop.f32.mrb[0].mxu0
  %139 = vmatprep.mubr.f32.mxu0 0.0
  %140 = vmatmul.mubr.f32.gmra.mrb[0].mxu0 %v58
  %v141 = vpop.f32.mrb[0].mxu0
  %v142 = vadd.f32 0.0, %v141
  %v143 = vpop.f32.mrb[0].mxu0
  %144 = vdwg.mxu0
  %v145 = vld [vmem:[%s2] sm:$0xff]
  %v146 = vld [vmem:[%s2 + $0x8] sm:$0xff]
  %v147 = vld [vmem:[%s2 + $0x10] sm:$0xff]
  %v148 = vld [vmem:[%s2 + $0x18] sm:$0xff]
  %v149 = vld [vmem:[%s3] sm:$0xff]
  %v150 = vld [vmem:[%s3 + $0x8] sm:$0xff]
  %v151 = vld [vmem:[%s3 + $0x10] sm:$0xff]
  %v152 = vld [vmem:[%s3 + $0x18] sm:$0xff]
  %v153 = vld [vmem:[%s4] sm:$0xff]
  %v154 = vld [vmem:[%s4 + $0x8] sm:$0xff]
  %v155 = vld [vmem:[%s4 + $0x10] sm:$0xff]
  %v156 = vld [vmem:[%s4 + $0x18] sm:$0xff]
  %v157 = vld [vmem:[%s5] sm:$0xff]
  %v158 = vld [vmem:[%s5 + $0x8] sm:$0xff]
  %v159 = vld [vmem:[%s5 + $0x10] sm:$0xff]
  %v160 = vld [vmem:[%s5 + $0x18] sm:$0xff]
  %162 = vset.pattern.permute.xlu0 0
  %163 = vperm.xlu0 %162, %v149
  %v164 = vpop.permute.xlu0 %163
  %167 = vset.pattern.permute.xlu0 0
  %168 = vperm.xlu0 %167, %v150
  %v169 = vpop.permute.xlu0 %168
  %172 = vset.pattern.permute.xlu0 0
  %173 = vperm.xlu0 %172, %v151
  %v174 = vpop.permute.xlu0 %173
  %177 = vset.pattern.permute.xlu0 0
  %178 = vperm.xlu0 %177, %v152
  %v179 = vpop.permute.xlu0 %178
  %vm181 = vcmask 261120
  %v183 = vsel %vm181, %v145, 0
  %v186 = vsel %vm181, %v146, 0
  %v189 = vsel %vm181, %v147, 0
  %v192 = vsel %vm181, %v148, 0
  %194 = vmatprep.subr.mxu0 0.0
  %195 = vmatpush1.msra.mxu0 %v127
  %196 = vmatprep.subr.mxu0 0.0
  %197 = vmatpush1.msra.mxu0 %v132
  %198 = vmatprep.subr.mxu0 0.0
  %199 = vmatpush1.msra.mxu0 %v137
  %200 = vmatprep.subr.mxu0 0.0
  %201 = vmatpush1.msra.mxu0 %v142
  %202 = vmatprep.subr.mxu0 0.0
  %203 = vmatpush1.msra.mxu0 0.0
  %204 = vmatprep.subr.mxu0 0.0
  %205 = vmatpush1.msra.mxu0 0.0
  %206 = vmatprep.subr.mxu0 0.0
  %207 = vmatpush1.msra.mxu0 0.0
  %208 = vmatprep.subr.mxu0 0.0
  %209 = vmatpush1.msra.mxu0 0.0
  %210 = vmatprep.subr.mxu0 0.0
  %211 = vmatpush1.msra.mxu0 0.0
  %212 = vmatprep.subr.mxu0 0.0
  %213 = vmatpush1.msra.mxu0 0.0
  %214 = vmatprep.subr.mxu0 0.0
  %215 = vmatpush1.msra.mxu0 0.0
  %216 = vmatprep.subr.mxu0 0.0
  %217 = vmatpush1.msra.mxu0 0.0
  %218 = vmatprep.subr.mxu0 0.0
  %219 = vmatpush1.msra.mxu0 0.0
  %220 = vmatprep.subr.mxu0 0.0
  %221 = vmatpush1.msra.mxu0 0.0
  %222 = vmatprep.subr.mxu0 0.0
  %223 = vmatpush1.msra.mxu0 0.0
  %224 = vmatprep.subr.mxu0 0.0
  %225 = vmatpush1.msra.mxu0 0.0
  %226 = vmatprep.subr.mxu0 0.0
  %227 = vmatpush1.msra.mxu0 0.0
  %228 = vmatprep.subr.mxu0 0.0
  %229 = vmatpush1.msra.mxu0 0.0
  %230 = vmatprep.subr.mxu0 0.0
  %231 = vmatpush1.msra.mxu0 0.0
  %232 = vmatprep.subr.mxu0 0.0
  %233 = vmatpush1.msra.mxu0 0.0
  %234 = vmatprep.subr.mxu0 0.0
  %235 = vmatpush1.msra.mxu0 0.0
  %236 = vmatprep.subr.mxu0 0.0
  %237 = vmatpush1.msra.mxu0 0.0
  %238 = vmatprep.subr.mxu0 0.0
  %239 = vmatpush1.msra.mxu0 0.0
  %240 = vmatprep.subr.mxu0 0.0
  %241 = vmatpush1.msra.mxu0 0.0
  %242 = vmatprep.subr.mxu0 0.0
  %243 = vmatpush1.msra.mxu0 0.0
  %244 = vmatprep.subr.mxu0 0.0
  %245 = vmatpush1.msra.mxu0 0.0
  %246 = vmatprep.subr.mxu0 0.0
  %247 = vmatpush1.msra.mxu0 0.0
  %248 = vmatprep.subr.mxu0 0.0
  %249 = vmatpush1.msra.mxu0 0.0
  %250 = vmatprep.subr.mxu0 0.0
  %251 = vmatpush1.msra.mxu0 0.0
  %252 = vmatprep.subr.mxu0 0.0
  %253 = vmatpush1.msra.mxu0 0.0
  %254 = vmatprep.subr.mxu0 0.0
  %255 = vmatpush1.msra.mxu0 0.0
  %256 = vmatprep.subr.mxu0 0.0
  %257 = vmatpush1.msra.mxu0 0.0
  %258 = vmatprep.mubr.f32.mxu0 0.0
  %259 = vmatmul.mubr.f32.gmra.mrb[0].mxu0 %v183
  %v260 = vpop.f32.mrb[0].mxu0
  %v261 = vadd.f32 %v164, %v260
  %v262 = vpop.f32.mrb[0].mxu0
  %263 = vmatprep.mubr.f32.mxu0 0.0
  %264 = vmatmul.mubr.f32.gmra.mrb[0].mxu0 %v186
  %v265 = vpop.f32.mrb[0].mxu0
  %v266 = vadd.f32 %v169, %v265
  %v267 = vpop.f32.mrb[0].mxu0
  %268 = vmatprep.mubr.f32.mxu0 0.0
  %269 = vmatmul.mubr.f32.gmra.mrb[0].mxu0 %v189
  %v270 = vpop.f32.mrb[0].mxu0
  %v271 = vadd.f32 %v174, %v270
  %v272 = vpop.f32.mrb[0].mxu0
  %273 = vmatprep.mubr.f32.mxu0 0.0
  %274 = vmatmul.mubr.f32.gmra.mrb[0].mxu0 %v192
  %v275 = vpop.f32.mrb[0].mxu0
  %v276 = vadd.f32 %v179, %v275
  %v277 = vpop.f32.mrb[0].mxu0
  %278 = vdwg.mxu0
  %280 = vset.pattern.permute.xlu0 0
  %281 = vperm.xlu0 %280, %v157
  %v282 = vpop.permute.xlu0 %281
  %285 = vset.pattern.permute.xlu0 0
  %286 = vperm.xlu0 %285, %v158
  %v287 = vpop.permute.xlu0 %286
  %290 = vset.pattern.permute.xlu0 0
  %291 = vperm.xlu0 %290, %v159
  %v292 = vpop.permute.xlu0 %291
  %295 = vset.pattern.permute.xlu0 0
  %296 = vperm.xlu0 %295, %v160
  %v297 = vpop.permute.xlu0 %296
  %v300 = vsel %vm181, %v153, 0
  %v303 = vsel %vm181, %v154, 0
  %v306 = vsel %vm181, %v155, 0
  %v309 = vsel %vm181, %v156, 0
  %311 = vmatprep.subr.mxu0 0.0
  %312 = vmatpush1.msra.mxu0 %v127
  %313 = vmatprep.subr.mxu0 0.0
  %314 = vmatpush1.msra.mxu0 %v132
  %315 = vmatprep.subr.mxu0 0.0
  %316 = vmatpush1.msra.mxu0 %v137
  %317 = vmatprep.subr.mxu0 0.0
  %318 = vmatpush1.msra.mxu0 %v142
  %319 = vmatprep.subr.mxu0 0.0
  %320 = vmatpush1.msra.mxu0 0.0
  %321 = vmatprep.subr.mxu0 0.0
  %322 = vmatpush1.msra.mxu0 0.0
  %323 = vmatprep.subr.mxu0 0.0
  %324 = vmatpush1.msra.mxu0 0.0
  %325 = vmatprep.subr.mxu0 0.0
  %326 = vmatpush1.msra.mxu0 0.0
  %327 = vmatprep.subr.mxu0 0.0
  %328 = vmatpush1.msra.mxu0 0.0
  %329 = vmatprep.subr.mxu0 0.0
  %330 = vmatpush1.msra.mxu0 0.0
  %331 = vmatprep.subr.mxu0 0.0
  %332 = vmatpush1.msra.mxu0 0.0
  %333 = vmatprep.subr.mxu0 0.0
  %334 = vmatpush1.msra.mxu0 0.0
  %335 = vmatprep.subr.mxu0 0.0
  %336 = vmatpush1.msra.mxu0 0.0
  %337 = vmatprep.subr.mxu0 0.0
  %338 = vmatpush1.msra.mxu0 0.0
  %339 = vmatprep.subr.mxu0 0.0
  %340 = vmatpush1.msra.mxu0 0.0
  %341 = vmatprep.subr.mxu0 0.0
  %342 = vmatpush1.msra.mxu0 0.0
  %343 = vmatprep.subr.mxu0 0.0
  %344 = vmatpush1.msra.mxu0 0.0
  %345 = vmatprep.subr.mxu0 0.0
  %346 = vmatpush1.msra.mxu0 0.0
  %347 = vmatprep.subr.mxu0 0.0
  %348 = vmatpush1.msra.mxu0 0.0
  %349 = vmatprep.subr.mxu0 0.0
  %350 = vmatpush1.msra.mxu0 0.0
  %351 = vmatprep.subr.mxu0 0.0
  %352 = vmatpush1.msra.mxu0 0.0
  %353 = vmatprep.subr.mxu0 0.0
  %354 = vmatpush1.msra.mxu0 0.0
  %355 = vmatprep.subr.mxu0 0.0
  %356 = vmatpush1.msra.mxu0 0.0
  %357 = vmatprep.subr.mxu0 0.0
  %358 = vmatpush1.msra.mxu0 0.0
  %359 = vmatprep.subr.mxu0 0.0
  %360 = vmatpush1.msra.mxu0 0.0
  %361 = vmatprep.subr.mxu0 0.0
  %362 = vmatpush1.msra.mxu0 0.0
  %363 = vmatprep.subr.mxu0 0.0
  %364 = vmatpush1.msra.mxu0 0.0
  %365 = vmatprep.subr.mxu0 0.0
  %366 = vmatpush1.msra.mxu0 0.0
  %367 = vmatprep.subr.mxu0 0.0
  %368 = vmatpush1.msra.mxu0 0.0
  %369 = vmatprep.subr.mxu0 0.0
  %370 = vmatpush1.msra.mxu0 0.0
  %371 = vmatprep.subr.mxu0 0.0
  %372 = vmatpush1.msra.mxu0 0.0
  %373 = vmatprep.subr.mxu0 0.0
  %374 = vmatpush1.msra.mxu0 0.0
  %375 = vmatprep.mubr.f32.mxu0 0.0
  %376 = vmatmul.mubr.f32.gmra.mrb[0].mxu0 %v300
  %v377 = vpop.f32.mrb[0].mxu0
  %v378 = vadd.f32 %v282, %v377
  %v379 = vpop.f32.mrb[0].mxu0
  %380 = vmatprep.mubr.f32.mxu0 0.0
  %381 = vmatmul.mubr.f32.gmra.mrb[0].mxu0 %v303
  %v382 = vpop.f32.mrb[0].mxu0
  %v383 = vadd.f32 %v287, %v382
  %v384 = vpop.f32.mrb[0].mxu0
  %385 = vmatprep.mubr.f32.mxu0 0.0
  %386 = vmatmul.mubr.f32.gmra.mrb[0].mxu0 %v306
  %v387 = vpop.f32.mrb[0].mxu0
  %v388 = vadd.f32 %v292, %v387
  %v389 = vpop.f32.mrb[0].mxu0
  %390 = vmatprep.mubr.f32.mxu0 0.0
  %391 = vmatmul.mubr.f32.gmra.mrb[0].mxu0 %v309
  %v392 = vpop.f32.mrb[0].mxu0
  %v393 = vadd.f32 %v297, %v392
  %v394 = vpop.f32.mrb[0].mxu0
  %395 = vdwg.mxu0
  %v396 = vxor.u32 %v378, 2147483648
  %v397 = vxor.u32 %v383, 2147483648
  %v398 = vxor.u32 %v388, 2147483648
  %v399 = vxor.u32 %v393, 2147483648
  %v400 = vmul.f32 %v396, 1.442695
  %v401 = vpow.pop %v400
  %v402 = vmul.f32 %v397, 1.442695
  %v403 = vpow.pop %v402
  %v404 = vmul.f32 %v398, 1.442695
  %v405 = vpow.pop %v404
  %v406 = vmul.f32 %v399, 1.442695
  %v407 = vpow.pop %v406
  %v408 = vadd.f32 %v401, 1.0
  %v409 = vadd.f32 %v403, 1.0
  %v410 = vadd.f32 %v405, 1.0
  %v411 = vadd.f32 %v407, 1.0
  %v412 = vrcp.pop %v408
  %v413 = vmul.f32 1.0, %v412
  %v414 = vrcp.pop %v409
  %v415 = vmul.f32 1.0, %v414
  %v416 = vrcp.pop %v410
  %v417 = vmul.f32 1.0, %v416
  %v418 = vrcp.pop %v411
  %v419 = vmul.f32 1.0, %v418
  %v420 = vmax.f32 %v261, 0.0
  %v421 = vmax.f32 %v266, 0.0
  %v422 = vmax.f32 %v271, 0.0
  %v423 = vmax.f32 %v276, 0.0
  %v424 = vmul.f32 %v413, %v420
  %v425 = vmul.f32 %v415, %v421
  %v426 = vmul.f32 %v417, %v422
  %v427 = vmul.f32 %v419, %v423
  %v428 = vsub.f32 1.0, %v413
  %v429 = vsub.f32 1.0, %v415
  %v430 = vsub.f32 1.0, %v417
  %v431 = vsub.f32 1.0, %v419
  %v432 = vmul.f32 %v428, %v127
  %v433 = vmul.f32 %v429, %v132
  %v434 = vmul.f32 %v430, %v137
  %v435 = vmul.f32 %v431, %v142
  %v436 = vadd.f32 %v424, %v432
  %v437 = vadd.f32 %v425, %v433
  %v438 = vadd.f32 %v426, %v434
  %v439 = vadd.f32 %v427, %v435
  %v440 = vld [vmem:[%s6] sm:$0xff]
  %v441 = vld [vmem:[%s6 + $0x8] sm:$0xff]
  %v442 = vld [vmem:[%s6 + $0x10] sm:$0xff]
  %v443 = vld [vmem:[%s6 + $0x18] sm:$0xff]
  %v444 = vld [vmem:[%s7] sm:$0xff]
  %v445 = vld [vmem:[%s7 + $0x8] sm:$0xff]
  %v446 = vld [vmem:[%s7 + $0x10] sm:$0xff]
  %v447 = vld [vmem:[%s7 + $0x18] sm:$0xff]
  %v448 = vld [vmem:[%s8] sm:$0xff]
  %v449 = vld [vmem:[%s8 + $0x8] sm:$0xff]
  %v450 = vld [vmem:[%s8 + $0x10] sm:$0xff]
  %v451 = vld [vmem:[%s8 + $0x18] sm:$0xff]
  %v452 = vld [vmem:[%s9] sm:$0xff]
  %v453 = vld [vmem:[%s9 + $0x8] sm:$0xff]
  %v454 = vld [vmem:[%s9 + $0x10] sm:$0xff]
  %v455 = vld [vmem:[%s9 + $0x18] sm:$0xff]
  %457 = vset.pattern.permute.xlu0 0
  %458 = vperm.xlu0 %457, %v444
  %v459 = vpop.permute.xlu0 %458
  %462 = vset.pattern.permute.xlu0 0
  %463 = vperm.xlu0 %462, %v445
  %v464 = vpop.permute.xlu0 %463
  %467 = vset.pattern.permute.xlu0 0
  %468 = vperm.xlu0 %467, %v446
  %v469 = vpop.permute.xlu0 %468
  %472 = vset.pattern.permute.xlu0 0
  %473 = vperm.xlu0 %472, %v447
  %v474 = vpop.permute.xlu0 %473
  %v477 = vsel %vm181, %v440, 0
  %v480 = vsel %vm181, %v441, 0
  %v483 = vsel %vm181, %v442, 0
  %v486 = vsel %vm181, %v443, 0
  %488 = vmatprep.subr.mxu0 0.0
  %489 = vmatpush1.msra.mxu0 %v436
  %490 = vmatprep.subr.mxu0 0.0
  %491 = vmatpush1.msra.mxu0 %v437
  %492 = vmatprep.subr.mxu0 0.0
  %493 = vmatpush1.msra.mxu0 %v438
  %494 = vmatprep.subr.mxu0 0.0
  %495 = vmatpush1.msra.mxu0 %v439
  %496 = vmatprep.subr.mxu0 0.0
  %497 = vmatpush1.msra.mxu0 0.0
  %498 = vmatprep.subr.mxu0 0.0
  %499 = vmatpush1.msra.mxu0 0.0
  %500 = vmatprep.subr.mxu0 0.0
  %501 = vmatpush1.msra.mxu0 0.0
  %502 = vmatprep.subr.mxu0 0.0
  %503 = vmatpush1.msra.mxu0 0.0
  %504 = vmatprep.subr.mxu0 0.0
  %505 = vmatpush1.msra.mxu0 0.0
  %506 = vmatprep.subr.mxu0 0.0
  %507 = vmatpush1.msra.mxu0 0.0
  %508 = vmatprep.subr.mxu0 0.0
  %509 = vmatpush1.msra.mxu0 0.0
  %510 = vmatprep.subr.mxu0 0.0
  %511 = vmatpush1.msra.mxu0 0.0
  %512 = vmatprep.subr.mxu0 0.0
  %513 = vmatpush1.msra.mxu0 0.0
  %514 = vmatprep.subr.mxu0 0.0
  %515 = vmatpush1.msra.mxu0 0.0
  %516 = vmatprep.subr.mxu0 0.0
  %517 = vmatpush1.msra.mxu0 0.0
  %518 = vmatprep.subr.mxu0 0.0
  %519 = vmatpush1.msra.mxu0 0.0
  %520 = vmatprep.subr.mxu0 0.0
  %521 = vmatpush1.msra.mxu0 0.0
  %522 = vmatprep.subr.mxu0 0.0
  %523 = vmatpush1.msra.mxu0 0.0
  %524 = vmatprep.subr.mxu0 0.0
  %525 = vmatpush1.msra.mxu0 0.0
  %526 = vmatprep.subr.mxu0 0.0
  %527 = vmatpush1.msra.mxu0 0.0
  %528 = vmatprep.subr.mxu0 0.0
  %529 = vmatpush1.msra.mxu0 0.0
  %530 = vmatprep.subr.mxu0 0.0
  %531 = vmatpush1.msra.mxu0 0.0
  %532 = vmatprep.subr.mxu0 0.0
  %533 = vmatpush1.msra.mxu0 0.0
  %534 = vmatprep.subr.mxu0 0.0
  %535 = vmatpush1.msra.mxu0 0.0
  %536 = vmatprep.subr.mxu0 0.0
  %537 = vmatpush1.msra.mxu0 0.0
  %538 = vmatprep.subr.mxu0 0.0
  %539 = vmatpush1.msra.mxu0 0.0
  %540 = vmatprep.subr.mxu0 0.0
  %541 = vmatpush1.msra.mxu0 0.0
  %542 = vmatprep.subr.mxu0 0.0
  %543 = vmatpush1.msra.mxu0 0.0
  %544 = vmatprep.subr.mxu0 0.0
  %545 = vmatpush1.msra.mxu0 0.0
  %546 = vmatprep.subr.mxu0 0.0
  %547 = vmatpush1.msra.mxu0 0.0
  %548 = vmatprep.subr.mxu0 0.0
  %549 = vmatpush1.msra.mxu0 0.0
  %550 = vmatprep.subr.mxu0 0.0
  %551 = vmatpush1.msra.mxu0 0.0
  %552 = vmatprep.mubr.f32.mxu0 0.0
  %553 = vmatmul.mubr.f32.gmra.mrb[0].mxu0 %v477
  %v554 = vpop.f32.mrb[0].mxu0
  %v555 = vadd.f32 %v459, %v554
  %v556 = vpop.f32.mrb[0].mxu0
  %557 = vmatprep.mubr.f32.mxu0 0.0
  %558 = vmatmul.mubr.f32.gmra.mrb[0].mxu0 %v480
  %v559 = vpop.f32.mrb[0].mxu0
  %v560 = vadd.f32 %v464, %v559
  %v561 = vpop.f32.mrb[0].mxu0
  %562 = vmatprep.mubr.f32.mxu0 0.0
  %563 = vmatmul.mubr.f32.gmra.mrb[0].mxu0 %v483
  %v564 = vpop.f32.mrb[0].mxu0
  %v565 = vadd.f32 %v469, %v564
  %v566 = vpop.f32.mrb[0].mxu0
  %567 = vmatprep.mubr.f32.mxu0 0.0
  %568 = vmatmul.mubr.f32.gmra.mrb[0].mxu0 %v486
  %v569 = vpop.f32.mrb[0].mxu0
  %v570 = vadd.f32 %v474, %v569
  %v571 = vpop.f32.mrb[0].mxu0
  %572 = vdwg.mxu0
  %574 = vset.pattern.permute.xlu0 0
  %575 = vperm.xlu0 %574, %v452
  %v576 = vpop.permute.xlu0 %575
  %579 = vset.pattern.permute.xlu0 0
  %580 = vperm.xlu0 %579, %v453
  %v581 = vpop.permute.xlu0 %580
  %584 = vset.pattern.permute.xlu0 0
  %585 = vperm.xlu0 %584, %v454
  %v586 = vpop.permute.xlu0 %585
  %589 = vset.pattern.permute.xlu0 0
  %590 = vperm.xlu0 %589, %v455
  %v591 = vpop.permute.xlu0 %590
  %v594 = vsel %vm181, %v448, 0
  %v597 = vsel %vm181, %v449, 0
  %v600 = vsel %vm181, %v450, 0
  %v603 = vsel %vm181, %v451, 0
  %605 = vmatprep.subr.mxu0 0.0
  %606 = vmatpush1.msra.mxu0 %v436
  %607 = vmatprep.subr.mxu0 0.0
  %608 = vmatpush1.msra.mxu0 %v437
  %609 = vmatprep.subr.mxu0 0.0
  %610 = vmatpush1.msra.mxu0 %v438
  %611 = vmatprep.subr.mxu0 0.0
  %612 = vmatpush1.msra.mxu0 %v439
  %613 = vmatprep.subr.mxu0 0.0
  %614 = vmatpush1.msra.mxu0 0.0
  %615 = vmatprep.subr.mxu0 0.0
  %616 = vmatpush1.msra.mxu0 0.0
  %617 = vmatprep.subr.mxu0 0.0
  %618 = vmatpush1.msra.mxu0 0.0
  %619 = vmatprep.subr.mxu0 0.0
  %620 = vmatpush1.msra.mxu0 0.0
  %621 = vmatprep.subr.mxu0 0.0
  %622 = vmatpush1.msra.mxu0 0.0
  %623 = vmatprep.subr.mxu0 0.0
  %624 = vmatpush1.msra.mxu0 0.0
  %625 = vmatprep.subr.mxu0 0.0
  %626 = vmatpush1.msra.mxu0 0.0
  %627 = vmatprep.subr.mxu0 0.0
  %628 = vmatpush1.msra.mxu0 0.0
  %629 = vmatprep.subr.mxu0 0.0
  %630 = vmatpush1.msra.mxu0 0.0
  %631 = vmatprep.subr.mxu0 0.0
  %632 = vmatpush1.msra.mxu0 0.0
  %633 = vmatprep.subr.mxu0 0.0
  %634 = vmatpush1.msra.mxu0 0.0
  %635 = vmatprep.subr.mxu0 0.0
  %636 = vmatpush1.msra.mxu0 0.0
  %637 = vmatprep.subr.mxu0 0.0
  %638 = vmatpush1.msra.mxu0 0.0
  %639 = vmatprep.subr.mxu0 0.0
  %640 = vmatpush1.msra.mxu0 0.0
  %641 = vmatprep.subr.mxu0 0.0
  %642 = vmatpush1.msra.mxu0 0.0
  %643 = vmatprep.subr.mxu0 0.0
  %644 = vmatpush1.msra.mxu0 0.0
  %645 = vmatprep.subr.mxu0 0.0
  %646 = vmatpush1.msra.mxu0 0.0
  %647 = vmatprep.subr.mxu0 0.0
  %648 = vmatpush1.msra.mxu0 0.0
  %649 = vmatprep.subr.mxu0 0.0
  %650 = vmatpush1.msra.mxu0 0.0
  %651 = vmatprep.subr.mxu0 0.0
  %652 = vmatpush1.msra.mxu0 0.0
  %653 = vmatprep.subr.mxu0 0.0
  %654 = vmatpush1.msra.mxu0 0.0
  %655 = vmatprep.subr.mxu0 0.0
  %656 = vmatpush1.msra.mxu0 0.0
  %657 = vmatprep.subr.mxu0 0.0
  %658 = vmatpush1.msra.mxu0 0.0
  %659 = vmatprep.subr.mxu0 0.0
  %660 = vmatpush1.msra.mxu0 0.0
  %661 = vmatprep.subr.mxu0 0.0
  %662 = vmatpush1.msra.mxu0 0.0
  %663 = vmatprep.subr.mxu0 0.0
  %664 = vmatpush1.msra.mxu0 0.0
  %665 = vmatprep.subr.mxu0 0.0
  %666 = vmatpush1.msra.mxu0 0.0
  %667 = vmatprep.subr.mxu0 0.0
  %668 = vmatpush1.msra.mxu0 0.0
  %669 = vmatprep.mubr.f32.mxu0 0.0
  %670 = vmatmul.mubr.f32.gmra.mrb[0].mxu0 %v594
  %v671 = vpop.f32.mrb[0].mxu0
  %v672 = vadd.f32 %v576, %v671
  %v673 = vpop.f32.mrb[0].mxu0
  %674 = vmatprep.mubr.f32.mxu0 0.0
  %675 = vmatmul.mubr.f32.gmra.mrb[0].mxu0 %v597
  %v676 = vpop.f32.mrb[0].mxu0
  %v677 = vadd.f32 %v581, %v676
  %v678 = vpop.f32.mrb[0].mxu0
  %679 = vmatprep.mubr.f32.mxu0 0.0
  %680 = vmatmul.mubr.f32.gmra.mrb[0].mxu0 %v600
  %v681 = vpop.f32.mrb[0].mxu0
  %v682 = vadd.f32 %v586, %v681
  %v683 = vpop.f32.mrb[0].mxu0
  %684 = vmatprep.mubr.f32.mxu0 0.0
  %685 = vmatmul.mubr.f32.gmra.mrb[0].mxu0 %v603
  %v686 = vpop.f32.mrb[0].mxu0
  %v687 = vadd.f32 %v591, %v686
  %v688 = vpop.f32.mrb[0].mxu0
  %689 = vdwg.mxu0
  %v690 = vxor.u32 %v672, 2147483648
  %v691 = vxor.u32 %v677, 2147483648
  %v692 = vxor.u32 %v682, 2147483648
  %v693 = vxor.u32 %v687, 2147483648
  %v694 = vmul.f32 %v690, 1.442695
  %v695 = vpow.pop %v694
  %v696 = vmul.f32 %v691, 1.442695
  %v697 = vpow.pop %v696
  %v698 = vmul.f32 %v692, 1.442695
  %v699 = vpow.pop %v698
  %v700 = vmul.f32 %v693, 1.442695
  %v701 = vpow.pop %v700
  %v702 = vadd.f32 %v695, 1.0
  %v703 = vadd.f32 %v697, 1.0
  %v704 = vadd.f32 %v699, 1.0
  %v705 = vadd.f32 %v701, 1.0
  %v706 = vrcp.pop %v702
  %v707 = vmul.f32 1.0, %v706
  %v708 = vrcp.pop %v703
  %v709 = vmul.f32 1.0, %v708
  %v710 = vrcp.pop %v704
  %v711 = vmul.f32 1.0, %v710
  %v712 = vrcp.pop %v705
  %v713 = vmul.f32 1.0, %v712
  %v714 = vmax.f32 %v555, 0.0
  %v715 = vmax.f32 %v560, 0.0
  %v716 = vmax.f32 %v565, 0.0
  %v717 = vmax.f32 %v570, 0.0
  %v718 = vmul.f32 %v707, %v714
  %v719 = vmul.f32 %v709, %v715
  %v720 = vmul.f32 %v711, %v716
  %v721 = vmul.f32 %v713, %v717
  %v722 = vsub.f32 1.0, %v707
  %v723 = vsub.f32 1.0, %v709
  %v724 = vsub.f32 1.0, %v711
  %v725 = vsub.f32 1.0, %v713
  %v726 = vmul.f32 %v722, %v436
  %v727 = vmul.f32 %v723, %v437
  %v728 = vmul.f32 %v724, %v438
  %v729 = vmul.f32 %v725, %v439
  %v730 = vadd.f32 %v718, %v726
  %v731 = vadd.f32 %v719, %v727
  %v732 = vadd.f32 %v720, %v728
  %v733 = vadd.f32 %v721, %v729
  %v734 = vld [vmem:[%s10] sm:$0xff]
  %v735 = vld [vmem:[%s10 + $0x8] sm:$0xff]
  %v736 = vld [vmem:[%s10 + $0x10] sm:$0xff]
  %v737 = vld [vmem:[%s10 + $0x18] sm:$0xff]
  %v738 = vld [vmem:[%s10 + $0x20] sm:$0xff]
  %v739 = vld [vmem:[%s10 + $0x28] sm:$0xff]
  %v740 = vld [vmem:[%s10 + $0x30] sm:$0xff]
  %v741 = vld [vmem:[%s10 + $0x38] sm:$0xff]
  %v742 = vld [vmem:[%s10 + $0x40] sm:$0xff]
  %v743 = vld [vmem:[%s10 + $0x48] sm:$0xff]
  %v744 = vld [vmem:[%s10 + $0x50] sm:$0xff]
  %v745 = vld [vmem:[%s10 + $0x58] sm:$0xff]
  %v746 = vld [vmem:[%s10 + $0x60] sm:$0xff]
  %v747 = vld [vmem:[%s10 + $0x68] sm:$0xff]
  %v748 = vld [vmem:[%s10 + $0x70] sm:$0xff]
  %v749 = vld [vmem:[%s10 + $0x78] sm:$0xff]
  %v750 = vld [vmem:[%s10 + $0x80] sm:$0xff]
  %v751 = vld [vmem:[%s10 + $0x88] sm:$0xff]
  %v752 = vld [vmem:[%s10 + $0x90] sm:$0xff]
  %v753 = vld [vmem:[%s10 + $0x98] sm:$0xff]
  %v754 = vld [vmem:[%s10 + $0xa0] sm:$0xff]
  %v755 = vld [vmem:[%s10 + $0xa8] sm:$0xff]
  %v756 = vld [vmem:[%s10 + $0xb0] sm:$0xff]
  %v757 = vld [vmem:[%s10 + $0xb8] sm:$0xff]
  %v758 = vld [vmem:[%s11] sm:$0xff]
  %v759 = vld [vmem:[%s11 + $0x8] sm:$0xff]
  %v760 = vld [vmem:[%s11 + $0x10] sm:$0xff]
  %v761 = vld [vmem:[%s11 + $0x18] sm:$0xff]
  %v762 = vld [vmem:[%s11 + $0x20] sm:$0xff]
  %v763 = vld [vmem:[%s11 + $0x28] sm:$0xff]
  %v764 = vld [vmem:[%s11 + $0x30] sm:$0xff]
  %v765 = vld [vmem:[%s11 + $0x38] sm:$0xff]
  %v766 = vld [vmem:[%s11 + $0x40] sm:$0xff]
  %v767 = vld [vmem:[%s11 + $0x48] sm:$0xff]
  %v768 = vld [vmem:[%s11 + $0x50] sm:$0xff]
  %v769 = vld [vmem:[%s11 + $0x58] sm:$0xff]
  %v770 = vld [vmem:[%s11 + $0x60] sm:$0xff]
  %v771 = vld [vmem:[%s11 + $0x68] sm:$0xff]
  %v772 = vld [vmem:[%s11 + $0x70] sm:$0xff]
  %v773 = vld [vmem:[%s11 + $0x78] sm:$0xff]
  %v774 = vld [vmem:[%s11 + $0x80] sm:$0xff]
  %v775 = vld [vmem:[%s11 + $0x88] sm:$0xff]
  %v776 = vld [vmem:[%s11 + $0x90] sm:$0xff]
  %v777 = vld [vmem:[%s11 + $0x98] sm:$0xff]
  %v778 = vld [vmem:[%s11 + $0xa0] sm:$0xff]
  %v779 = vld [vmem:[%s11 + $0xa8] sm:$0xff]
  %v780 = vld [vmem:[%s11 + $0xb0] sm:$0xff]
  %v781 = vld [vmem:[%s11 + $0xb8] sm:$0xff]
  %783 = vset.pattern.permute.xlu0 0
  %784 = vperm.xlu0 %783, %v758
  %v785 = vpop.permute.xlu0 %784
  %788 = vset.pattern.permute.xlu0 0
  %789 = vperm.xlu0 %788, %v759
  %v790 = vpop.permute.xlu0 %789
  %793 = vset.pattern.permute.xlu0 0
  %794 = vperm.xlu0 %793, %v760
  %v795 = vpop.permute.xlu0 %794
  %798 = vset.pattern.permute.xlu0 0
  %799 = vperm.xlu0 %798, %v761
  %v800 = vpop.permute.xlu0 %799
  %803 = vset.pattern.permute.xlu0 0
  %804 = vperm.xlu0 %803, %v762
  %v805 = vpop.permute.xlu0 %804
  %808 = vset.pattern.permute.xlu0 0
  %809 = vperm.xlu0 %808, %v763
  %v810 = vpop.permute.xlu0 %809
  %813 = vset.pattern.permute.xlu0 0
  %814 = vperm.xlu0 %813, %v764
  %v815 = vpop.permute.xlu0 %814
  %818 = vset.pattern.permute.xlu0 0
  %819 = vperm.xlu0 %818, %v765
  %v820 = vpop.permute.xlu0 %819
  %823 = vset.pattern.permute.xlu0 0
  %824 = vperm.xlu0 %823, %v766
  %v825 = vpop.permute.xlu0 %824
  %828 = vset.pattern.permute.xlu0 0
  %829 = vperm.xlu0 %828, %v767
  %v830 = vpop.permute.xlu0 %829
  %833 = vset.pattern.permute.xlu0 0
  %834 = vperm.xlu0 %833, %v768
  %v835 = vpop.permute.xlu0 %834
  %838 = vset.pattern.permute.xlu0 0
  %839 = vperm.xlu0 %838, %v769
  %v840 = vpop.permute.xlu0 %839
  %843 = vset.pattern.permute.xlu0 0
  %844 = vperm.xlu0 %843, %v770
  %v845 = vpop.permute.xlu0 %844
  %848 = vset.pattern.permute.xlu0 0
  %849 = vperm.xlu0 %848, %v771
  %v850 = vpop.permute.xlu0 %849
  %853 = vset.pattern.permute.xlu0 0
  %854 = vperm.xlu0 %853, %v772
  %v855 = vpop.permute.xlu0 %854
  %858 = vset.pattern.permute.xlu0 0
  %859 = vperm.xlu0 %858, %v773
  %v860 = vpop.permute.xlu0 %859
  %863 = vset.pattern.permute.xlu0 0
  %864 = vperm.xlu0 %863, %v774
  %v865 = vpop.permute.xlu0 %864
  %868 = vset.pattern.permute.xlu0 0
  %869 = vperm.xlu0 %868, %v775
  %v870 = vpop.permute.xlu0 %869
  %873 = vset.pattern.permute.xlu0 0
  %874 = vperm.xlu0 %873, %v776
  %v875 = vpop.permute.xlu0 %874
  %878 = vset.pattern.permute.xlu0 0
  %879 = vperm.xlu0 %878, %v777
  %v880 = vpop.permute.xlu0 %879
  %883 = vset.pattern.permute.xlu0 0
  %884 = vperm.xlu0 %883, %v778
  %v885 = vpop.permute.xlu0 %884
  %888 = vset.pattern.permute.xlu0 0
  %889 = vperm.xlu0 %888, %v779
  %v890 = vpop.permute.xlu0 %889
  %893 = vset.pattern.permute.xlu0 0
  %894 = vperm.xlu0 %893, %v780
  %v895 = vpop.permute.xlu0 %894
  %898 = vset.pattern.permute.xlu0 0
  %899 = vperm.xlu0 %898, %v781
  %v900 = vpop.permute.xlu0 %899
  %v903 = vsel %vm181, %v734, 0
  %v906 = vsel %vm181, %v735, 0
  %v909 = vsel %vm181, %v736, 0
  %v912 = vsel %vm181, %v737, 0
  %v915 = vsel %vm181, %v738, 0
  %v918 = vsel %vm181, %v739, 0
  %v921 = vsel %vm181, %v740, 0
  %v924 = vsel %vm181, %v741, 0
  %v927 = vsel %vm181, %v742, 0
  %v930 = vsel %vm181, %v743, 0
  %v933 = vsel %vm181, %v744, 0
  %v936 = vsel %vm181, %v745, 0
  %v939 = vsel %vm181, %v746, 0
  %v942 = vsel %vm181, %v747, 0
  %v945 = vsel %vm181, %v748, 0
  %v948 = vsel %vm181, %v749, 0
  %v951 = vsel %vm181, %v750, 0
  %v954 = vsel %vm181, %v751, 0
  %v957 = vsel %vm181, %v752, 0
  %v960 = vsel %vm181, %v753, 0
  %v963 = vsel %vm181, %v754, 0
  %v966 = vsel %vm181, %v755, 0
  %v969 = vsel %vm181, %v756, 0
  %v972 = vsel %vm181, %v757, 0
  %974 = vmatprep.subr.mxu0 0.0
  %975 = vmatpush1.msra.mxu0 %v730
  %976 = vmatprep.subr.mxu0 0.0
  %977 = vmatpush1.msra.mxu0 %v731
  %978 = vmatprep.subr.mxu0 0.0
  %979 = vmatpush1.msra.mxu0 %v732
  %980 = vmatprep.subr.mxu0 0.0
  %981 = vmatpush1.msra.mxu0 %v733
  %982 = vmatprep.subr.mxu0 0.0
  %983 = vmatpush1.msra.mxu0 0.0
  %984 = vmatprep.subr.mxu0 0.0
  %985 = vmatpush1.msra.mxu0 0.0
  %986 = vmatprep.subr.mxu0 0.0
  %987 = vmatpush1.msra.mxu0 0.0
  %988 = vmatprep.subr.mxu0 0.0
  %989 = vmatpush1.msra.mxu0 0.0
  %990 = vmatprep.subr.mxu0 0.0
  %991 = vmatpush1.msra.mxu0 0.0
  %992 = vmatprep.subr.mxu0 0.0
  %993 = vmatpush1.msra.mxu0 0.0
  %994 = vmatprep.subr.mxu0 0.0
  %995 = vmatpush1.msra.mxu0 0.0
  %996 = vmatprep.subr.mxu0 0.0
  %997 = vmatpush1.msra.mxu0 0.0
  %998 = vmatprep.subr.mxu0 0.0
  %999 = vmatpush1.msra.mxu0 0.0
  %1000 = vmatprep.subr.mxu0 0.0
  %1001 = vmatpush1.msra.mxu0 0.0
  %1002 = vmatprep.subr.mxu0 0.0
  %1003 = vmatpush1.msra.mxu0 0.0
  %1004 = vmatprep.subr.mxu0 0.0
  %1005 = vmatpush1.msra.mxu0 0.0
  %1006 = vmatprep.subr.mxu0 0.0
  %1007 = vmatpush1.msra.mxu0 0.0
  %1008 = vmatprep.subr.mxu0 0.0
  %1009 = vmatpush1.msra.mxu0 0.0
  %1010 = vmatprep.subr.mxu0 0.0
  %1011 = vmatpush1.msra.mxu0 0.0
  %1012 = vmatprep.subr.mxu0 0.0
  %1013 = vmatpush1.msra.mxu0 0.0
  %1014 = vmatprep.subr.mxu0 0.0
  %1015 = vmatpush1.msra.mxu0 0.0
  %1016 = vmatprep.subr.mxu0 0.0
  %1017 = vmatpush1.msra.mxu0 0.0
  %1018 = vmatprep.subr.mxu0 0.0
  %1019 = vmatpush1.msra.mxu0 0.0
  %1020 = vmatprep.subr.mxu0 0.0
  %1021 = vmatpush1.msra.mxu0 0.0
  %1022 = vmatprep.subr.mxu0 0.0
  %1023 = vmatpush1.msra.mxu0 0.0
  %1024 = vmatprep.subr.mxu0 0.0
  %1025 = vmatpush1.msra.mxu0 0.0
  %1026 = vmatprep.subr.mxu0 0.0
  %1027 = vmatpush1.msra.mxu0 0.0
  %1028 = vmatprep.subr.mxu0 0.0
  %1029 = vmatpush1.msra.mxu0 0.0
  %1030 = vmatprep.subr.mxu0 0.0
  %1031 = vmatpush1.msra.mxu0 0.0
  %1032 = vmatprep.subr.mxu0 0.0
  %1033 = vmatpush1.msra.mxu0 0.0
  %1034 = vmatprep.subr.mxu0 0.0
  %1035 = vmatpush1.msra.mxu0 0.0
  %1036 = vmatprep.subr.mxu0 0.0
  %1037 = vmatpush1.msra.mxu0 0.0
  %1038 = vmatprep.mubr.f32.mxu0 0.0
  %1039 = vmatmul.mubr.f32.gmra.mrb[0].mxu0 %v903
  %v1040 = vpop.f32.mrb[0].mxu0
  %v1041 = vadd.f32 %v785, %v1040
  %v1042 = vpop.f32.mrb[0].mxu0
  %1043 = vmatprep.mubr.f32.mxu0 0.0
  %1044 = vmatmul.mubr.f32.gmra.mrb[0].mxu0 %v906
  %v1045 = vpop.f32.mrb[0].mxu0
  %v1046 = vadd.f32 %v790, %v1045
  %v1047 = vpop.f32.mrb[0].mxu0
  %1048 = vmatprep.mubr.f32.mxu0 0.0
  %1049 = vmatmul.mubr.f32.gmra.mrb[0].mxu0 %v909
  %v1050 = vpop.f32.mrb[0].mxu0
  %v1051 = vadd.f32 %v795, %v1050
  %v1052 = vpop.f32.mrb[0].mxu0
  %1053 = vmatprep.mubr.f32.mxu0 0.0
  %1054 = vmatmul.mubr.f32.gmra.mrb[0].mxu0 %v912
  %v1055 = vpop.f32.mrb[0].mxu0
  %v1056 = vadd.f32 %v800, %v1055
  %v1057 = vpop.f32.mrb[0].mxu0
  %1058 = vmatprep.mubr.f32.mxu0 0.0
  %1059 = vmatmul.mubr.f32.gmra.mrb[0].mxu0 %v915
  %v1060 = vpop.f32.mrb[0].mxu0
  %v1061 = vadd.f32 %v805, %v1060
  %v1062 = vpop.f32.mrb[0].mxu0
  %1063 = vmatprep.mubr.f32.mxu0 0.0
  %1064 = vmatmul.mubr.f32.gmra.mrb[0].mxu0 %v918
  %v1065 = vpop.f32.mrb[0].mxu0
  %v1066 = vadd.f32 %v810, %v1065
  %v1067 = vpop.f32.mrb[0].mxu0
  %1068 = vmatprep.mubr.f32.mxu0 0.0
  %1069 = vmatmul.mubr.f32.gmra.mrb[0].mxu0 %v921
  %v1070 = vpop.f32.mrb[0].mxu0
  %v1071 = vadd.f32 %v815, %v1070
  %v1072 = vpop.f32.mrb[0].mxu0
  %1073 = vmatprep.mubr.f32.mxu0 0.0
  %1074 = vmatmul.mubr.f32.gmra.mrb[0].mxu0 %v924
  %v1075 = vpop.f32.mrb[0].mxu0
  %v1076 = vadd.f32 %v820, %v1075
  %v1077 = vpop.f32.mrb[0].mxu0
  %1078 = vmatprep.mubr.f32.mxu0 0.0
  %1079 = vmatmul.mubr.f32.gmra.mrb[0].mxu0 %v927
  %v1080 = vpop.f32.mrb[0].mxu0
  %v1081 = vadd.f32 %v825, %v1080
  %v1082 = vpop.f32.mrb[0].mxu0
  %1083 = vmatprep.mubr.f32.mxu0 0.0
  %1084 = vmatmul.mubr.f32.gmra.mrb[0].mxu0 %v930
  %v1085 = vpop.f32.mrb[0].mxu0
  %v1086 = vadd.f32 %v830, %v1085
  %v1087 = vpop.f32.mrb[0].mxu0
  %1088 = vmatprep.mubr.f32.mxu0 0.0
  %1089 = vmatmul.mubr.f32.gmra.mrb[0].mxu0 %v933
  %v1090 = vpop.f32.mrb[0].mxu0
  %v1091 = vadd.f32 %v835, %v1090
  %v1092 = vpop.f32.mrb[0].mxu0
  %1093 = vmatprep.mubr.f32.mxu0 0.0
  %1094 = vmatmul.mubr.f32.gmra.mrb[0].mxu0 %v936
  %v1095 = vpop.f32.mrb[0].mxu0
  %v1096 = vadd.f32 %v840, %v1095
  %v1097 = vpop.f32.mrb[0].mxu0
  %1098 = vmatprep.mubr.f32.mxu0 0.0
  %1099 = vmatmul.mubr.f32.gmra.mrb[0].mxu0 %v939
  %v1100 = vpop.f32.mrb[0].mxu0
  %v1101 = vadd.f32 %v845, %v1100
  %v1102 = vpop.f32.mrb[0].mxu0
  %1103 = vmatprep.mubr.f32.mxu0 0.0
  %1104 = vmatmul.mubr.f32.gmra.mrb[0].mxu0 %v942
  %v1105 = vpop.f32.mrb[0].mxu0
  %v1106 = vadd.f32 %v850, %v1105
  %v1107 = vpop.f32.mrb[0].mxu0
  %1108 = vmatprep.mubr.f32.mxu0 0.0
  %1109 = vmatmul.mubr.f32.gmra.mrb[0].mxu0 %v945
  %v1110 = vpop.f32.mrb[0].mxu0
  %v1111 = vadd.f32 %v855, %v1110
  %v1112 = vpop.f32.mrb[0].mxu0
  %1113 = vmatprep.mubr.f32.mxu0 0.0
  %1114 = vmatmul.mubr.f32.gmra.mrb[0].mxu0 %v948
  %v1115 = vpop.f32.mrb[0].mxu0
  %v1116 = vadd.f32 %v860, %v1115
  %v1117 = vpop.f32.mrb[0].mxu0
  %1118 = vmatprep.mubr.f32.mxu0 0.0
  %1119 = vmatmul.mubr.f32.gmra.mrb[0].mxu0 %v951
  %v1120 = vpop.f32.mrb[0].mxu0
  %v1121 = vadd.f32 %v865, %v1120
  %v1122 = vpop.f32.mrb[0].mxu0
  %1123 = vmatprep.mubr.f32.mxu0 0.0
  %1124 = vmatmul.mubr.f32.gmra.mrb[0].mxu0 %v954
  %v1125 = vpop.f32.mrb[0].mxu0
  %v1126 = vadd.f32 %v870, %v1125
  %v1127 = vpop.f32.mrb[0].mxu0
  %1128 = vmatprep.mubr.f32.mxu0 0.0
  %1129 = vmatmul.mubr.f32.gmra.mrb[0].mxu0 %v957
  %v1130 = vpop.f32.mrb[0].mxu0
  %v1131 = vadd.f32 %v875, %v1130
  %v1132 = vpop.f32.mrb[0].mxu0
  %1133 = vmatprep.mubr.f32.mxu0 0.0
  %1134 = vmatmul.mubr.f32.gmra.mrb[0].mxu0 %v960
  %v1135 = vpop.f32.mrb[0].mxu0
  %v1136 = vadd.f32 %v880, %v1135
  %v1137 = vpop.f32.mrb[0].mxu0
  %1138 = vmatprep.mubr.f32.mxu0 0.0
  %1139 = vmatmul.mubr.f32.gmra.mrb[0].mxu0 %v963
  %v1140 = vpop.f32.mrb[0].mxu0
  %v1141 = vadd.f32 %v885, %v1140
  %v1142 = vpop.f32.mrb[0].mxu0
  %1143 = vmatprep.mubr.f32.mxu0 0.0
  %1144 = vmatmul.mubr.f32.gmra.mrb[0].mxu0 %v966
  %v1145 = vpop.f32.mrb[0].mxu0
  %v1146 = vadd.f32 %v890, %v1145
  %v1147 = vpop.f32.mrb[0].mxu0
  %1148 = vmatprep.mubr.f32.mxu0 0.0
  %1149 = vmatmul.mubr.f32.gmra.mrb[0].mxu0 %v969
  %v1150 = vpop.f32.mrb[0].mxu0
  %v1151 = vadd.f32 %v895, %v1150
  %v1152 = vpop.f32.mrb[0].mxu0
  %1153 = vmatprep.mubr.f32.mxu0 0.0
  %1154 = vmatmul.mubr.f32.gmra.mrb[0].mxu0 %v972
  %v1155 = vpop.f32.mrb[0].mxu0
  %v1156 = vadd.f32 %v900, %v1155
  %v1157 = vpop.f32.mrb[0].mxu0
  %1158 = vdwg.mxu0
  %1159 = vxpose.xlu0.b32.start [1/16] %v1041, 128
  %1160 = vxpose.xlu0.b32.cont [2/16] %v1046, 128
  %1161 = vxpose.xlu0.b32.cont [3/16] %v1051, 128
  %1162 = vxpose.xlu0.b32.cont [4/16] %v1056, 128
  %1163 = vxpose.xlu0.b32.cont [5/16] %v1061, 128
  %1164 = vxpose.xlu0.b32.cont [6/16] %v1066, 128
  %1165 = vxpose.xlu0.b32.cont [7/16] %v1071, 128
  %1166 = vxpose.xlu0.b32.cont [8/16] %v1076, 128
  %1167 = vxpose.xlu0.b32.cont [9/16] %v1081, 128
  %1168 = vxpose.xlu0.b32.cont [10/16] %v1086, 128
  %1169 = vxpose.xlu0.b32.cont [11/16] %v1091, 128
  %1170 = vxpose.xlu0.b32.cont [12/16] %v1096, 128
  %1171 = vxpose.xlu0.b32.cont [13/16] %v1101, 128
  %1172 = vxpose.xlu0.b32.cont [14/16] %v1106, 128
  %1173 = vxpose.xlu0.b32.cont [15/16] %v1111, 128
  %1174 = vxpose.xlu0.b32.end [16/16] %v1116, 128
  %v1175 = vpop.trf.xlu0
  %v1176 = vpop.trf.xlu0
  %v1177 = vpop.trf.xlu0
  %v1178 = vpop.trf.xlu0
  %v1179 = vpop.trf.xlu0
  %v1180 = vpop.trf.xlu0
  %v1181 = vpop.trf.xlu0
  %v1182 = vpop.trf.xlu0
  %v1183 = vpop.trf.xlu0
  %v1184 = vpop.trf.xlu0
  %v1185 = vpop.trf.xlu0
  %v1186 = vpop.trf.xlu0
  %v1187 = vpop.trf.xlu0
  %v1188 = vpop.trf.xlu0
  %v1189 = vpop.trf.xlu0
  %v1190 = vpop.trf.xlu0
  %1191 = vxpose.xlu0.b32.start [1/16] %v1121, 128
  %1192 = vxpose.xlu0.b32.cont [2/16] %v1126, 128
  %1193 = vxpose.xlu0.b32.cont [3/16] %v1131, 128
  %1194 = vxpose.xlu0.b32.cont [4/16] %v1136, 128
  %1195 = vxpose.xlu0.b32.cont [5/16] %v1141, 128
  %1196 = vxpose.xlu0.b32.cont [6/16] %v1146, 128
  %1197 = vxpose.xlu0.b32.cont [7/16] %v1151, 128
  %1198 = vxpose.xlu0.b32.cont [8/16] %v1156, 128
  %1199 = vxpose.xlu0.b32.cont [9/16] 0.0, 128
  %1200 = vxpose.xlu0.b32.cont [10/16] 0.0, 128
  %1201 = vxpose.xlu0.b32.cont [11/16] 0.0, 128
  %1202 = vxpose.xlu0.b32.cont [12/16] 0.0, 128
  %1203 = vxpose.xlu0.b32.cont [13/16] 0.0, 128
  %1204 = vxpose.xlu0.b32.cont [14/16] 0.0, 128
  %1205 = vxpose.xlu0.b32.cont [15/16] 0.0, 128
  %1206 = vxpose.xlu0.b32.end [16/16] 0.0, 128
  %v1207 = vpop.trf.xlu0
  %v1208 = vpop.trf.xlu0
  %v1209 = vpop.trf.xlu0
  %v1210 = vpop.trf.xlu0
  %v1211 = vpop.trf.xlu0
  %v1212 = vpop.trf.xlu0
  %v1213 = vpop.trf.xlu0
  %v1214 = vpop.trf.xlu0
  %v1215 = vpop.trf.xlu0
  %v1216 = vpop.trf.xlu0
  %v1217 = vpop.trf.xlu0
  %v1218 = vpop.trf.xlu0
  %v1219 = vpop.trf.xlu0
  %v1220 = vpop.trf.xlu0
  %v1221 = vpop.trf.xlu0
  %v1222 = vpop.trf.xlu0
  %1223 = vst [vmem:[%s12] sm:$0xff] %v1175
  %vm1224 = vcmask 523264
  %1225 = vst.msk [vmem:[%s12 + $0x8] sm:$0xff] %vm1224, %v1207
  %1226 = vst [vmem:[%s12 + $0x10] sm:$0xff] %v1176
  %1227 = vst.msk [vmem:[%s12 + $0x18] sm:$0xff] %vm1224, %v1208
  %1228 = vst [vmem:[%s12 + $0x20] sm:$0xff] %v1177
  %1229 = vst.msk [vmem:[%s12 + $0x28] sm:$0xff] %vm1224, %v1209
  %1230 = vst [vmem:[%s12 + $0x30] sm:$0xff] %v1178
  %1231 = vst.msk [vmem:[%s12 + $0x38] sm:$0xff] %vm1224, %v1210
  // Predicated region
  $region50: #{cbhg_forward.4} parent=0 // pred_check
    _
  $region51: #{cbhg_forward.4} parent=0 // pred_check_branch
    %1233 = sbr.rel (0) target = $region53
  $region52: #{cbhg_forward.4} parent=0 // pred_region
    _
  $region53: #{cbhg_forward.4} parent=0 // pred_fallthru
    _
  // Predicated region
  $region54: #{cbhg_forward.4} parent=0 // pred_check
    _
  $region55: #{cbhg_forward.4} parent=0 // pred_check_branch
    %1235 = sbr.rel (0) target = $region57
  $region56: #{cbhg_forward.4} parent=0 // pred_region
    _
  $region57: #{cbhg_forward.4} parent=0 // pred_fallthru
    _

// kernel: cbhg_forward.3
$region0: #{cbhg_forward.3}
  #allocation0 [shape = 'u32[]', space=smem, size = 0x4, offset = 0x4, fixed_abs, tag = 'smem constant byte address 0x4 - core index']
  #allocation1 [shape = 'u32[144,128]{1,0:T(1,128)}', space=vmem, size = 0x12000, scoped, tag = 'internal scratch']
  %s0 = inlined_call_operand.vmem [shape: f32[16,40], index: 0, kind: input, shape index: {}]
  %s1 = inlined_call_operand.vmem [shape: f32[32,16], index: 1, kind: input, shape index: {}]
  %s2 = inlined_call_operand.vmem [shape: f32[32,1], index: 2, kind: input, shape index: {}]
  %s3 = inlined_call_operand.vmem [shape: f32[32,1], index: 3, kind: input, shape index: {}]
  %s4 = inlined_call_operand.vmem [shape: f32[32,32], index: 4, kind: input, shape index: {}]
  %s5 = inlined_call_operand.vmem [shape: f32[32,1], index: 5, kind: input, shape index: {}]
  %s6 = inlined_call_operand.vmem [shape: f32[32,1], index: 6, kind: input, shape index: {}]
  %s7 = inlined_call_operand.vmem [shape: f32[32,48], index: 7, kind: input, shape index: {}]
  %s8 = inlined_call_operand.vmem [shape: f32[32,1], index: 8, kind: input, shape index: {}]
  %s9 = inlined_call_operand.vmem [shape: f32[32,1], index: 9, kind: input, shape index: {}]
  %s10 = inlined_call_operand.vmem [shape: f32[32,64], index: 10, kind: input, shape index: {}]
  %s11 = inlined_call_operand.vmem [shape: f32[32,1], index: 11, kind: input, shape index: {}]
  %s12 = inlined_call_operand.vmem [shape: f32[32,1], index: 12, kind: input, shape index: {}]
  %s13 = inlined_call_operand.vmem [shape: f32[64,384], index: 13, kind: input, shape index: {}]
  %s14 = inlined_call_operand.vmem [shape: f32[64,1], index: 14, kind: input, shape index: {}]
  %s15 = inlined_call_operand.vmem [shape: f32[64,1], index: 15, kind: input, shape index: {}]
  %s16 = inlined_call_operand.vmem [shape: f32[16,192], index: 16, kind: input, shape index: {}]
  %s17 = inlined_call_operand.vmem [shape: f32[16,1], index: 17, kind: input, shape index: {}]
  %s18 = inlined_call_operand.vmem [shape: f32[16,1], index: 18, kind: input, shape index: {}]
  %s19 = inlined_call_operand.vmem [shape: f32[16,32], index: 19, kind: output, shape index: {}]
  %s20 = sld [smem:[#allocation0]]
  $region86: #{cbhg_forward.3} parent=0
    _
  %s22 = ssub.s32 1, %s20
  %s23 = scalar_select 0, %s22, %s20
  // Predicated region
  $region2: #{cbhg_forward.3} parent=0 // pred_check
    _
  $region3: #{cbhg_forward.3} parent=0 // pred_check_branch
    %25 = sbr.rel (0) target = $region5
  $region4: #{cbhg_forward.3} parent=0 // pred_region
    _
  $region5: #{cbhg_forward.3} parent=0 // pred_fallthru
    _
  // Predicated region
  $region6: #{cbhg_forward.3} parent=0 // pred_check
    _
  $region7: #{cbhg_forward.3} parent=0 // pred_check_branch
    %27 = sbr.rel (0) target = $region9
  $region8: #{cbhg_forward.3} parent=0 // pred_region
    _
  $region9: #{cbhg_forward.3} parent=0 // pred_fallthru
    _
  // Predicated region
  $region10: #{cbhg_forward.3} parent=0 // pred_check
    _
  $region11: #{cbhg_forward.3} parent=0 // pred_check_branch
    %29 = sbr.rel (0) target = $region13
  $region12: #{cbhg_forward.3} parent=0 // pred_region
    _
  $region13: #{cbhg_forward.3} parent=0 // pred_fallthru
    _
  // Predicated region
  $region14: #{cbhg_forward.3} parent=0 // pred_check
    _
  $region15: #{cbhg_forward.3} parent=0 // pred_check_branch
    %31 = sbr.rel (0) target = $region17
  $region16: #{cbhg_forward.3} parent=0 // pred_region
    _
  $region17: #{cbhg_forward.3} parent=0 // pred_fallthru
    _
  // Predicated region
  $region18: #{cbhg_forward.3} parent=0 // pred_check
    _
  $region19: #{cbhg_forward.3} parent=0 // pred_check_branch
    %33 = sbr.rel (0) target = $region21
  $region20: #{cbhg_forward.3} parent=0 // pred_region
    _
  $region21: #{cbhg_forward.3} parent=0 // pred_fallthru
    _
  // Predicated region
  $region22: #{cbhg_forward.3} parent=0 // pred_check
    _
  $region23: #{cbhg_forward.3} parent=0 // pred_check_branch
    %35 = sbr.rel (0) target = $region25
  $region24: #{cbhg_forward.3} parent=0 // pred_region
    _
  $region25: #{cbhg_forward.3} parent=0 // pred_fallthru
    _
  // Predicated region
  $region26: #{cbhg_forward.3} parent=0 // pred_check
    _
  $region27: #{cbhg_forward.3} parent=0 // pred_check_branch
    %37 = sbr.rel (0) target = $region29
  $region28: #{cbhg_forward.3} parent=0 // pred_region
    _
  $region29: #{cbhg_forward.3} parent=0 // pred_fallthru
    _
  // Predicated region
  $region30: #{cbhg_forward.3} parent=0 // pred_check
    _
  $region31: #{cbhg_forward.3} parent=0 // pred_check_branch
    %39 = sbr.rel (0) target = $region33
  $region32: #{cbhg_forward.3} parent=0 // pred_region
    _
  $region33: #{cbhg_forward.3} parent=0 // pred_fallthru
    _
  // Predicated region
  $region34: #{cbhg_forward.3} parent=0 // pred_check
    _
  $region35: #{cbhg_forward.3} parent=0 // pred_check_branch
    %41 = sbr.rel (0) target = $region37
  $region36: #{cbhg_forward.3} parent=0 // pred_region
    _
  $region37: #{cbhg_forward.3} parent=0 // pred_fallthru
    _
  // Predicated region
  $region38: #{cbhg_forward.3} parent=0 // pred_check
    _
  $region39: #{cbhg_forward.3} parent=0 // pred_check_branch
    %43 = sbr.rel (0) target = $region41
  $region40: #{cbhg_forward.3} parent=0 // pred_region
    _
  $region41: #{cbhg_forward.3} parent=0 // pred_fallthru
    _
  // Predicated region
  $region42: #{cbhg_forward.3} parent=0 // pred_check
    _
  $region43: #{cbhg_forward.3} parent=0 // pred_check_branch
    %45 = sbr.rel (0) target = $region45
  $region44: #{cbhg_forward.3} parent=0 // pred_region
    _
  $region45: #{cbhg_forward.3} parent=0 // pred_fallthru
    _
  // Predicated region
  $region46: #{cbhg_forward.3} parent=0 // pred_check
    _
  $region47: #{cbhg_forward.3} parent=0 // pred_check_branch
    %47 = sbr.rel (0) target = $region49
  $region48: #{cbhg_forward.3} parent=0 // pred_region
    _
  $region49: #{cbhg_forward.3} parent=0 // pred_fallthru
    _
  // Predicated region
  $region50: #{cbhg_forward.3} parent=0 // pred_check
    _
  $region51: #{cbhg_forward.3} parent=0 // pred_check_branch
    %49 = sbr.rel (0) target = $region53
  $region52: #{cbhg_forward.3} parent=0 // pred_region
    _
  $region53: #{cbhg_forward.3} parent=0 // pred_fallthru
    _
  // Predicated region
  $region54: #{cbhg_forward.3} parent=0 // pred_check
    _
  $region55: #{cbhg_forward.3} parent=0 // pred_check_branch
    %51 = sbr.rel (0) target = $region57
  $region56: #{cbhg_forward.3} parent=0 // pred_region
    _
  $region57: #{cbhg_forward.3} parent=0 // pred_fallthru
    _
  // Predicated region
  $region58: #{cbhg_forward.3} parent=0 // pred_check
    _
  $region59: #{cbhg_forward.3} parent=0 // pred_check_branch
    %53 = sbr.rel (0) target = $region61
  $region60: #{cbhg_forward.3} parent=0 // pred_region
    _
  $region61: #{cbhg_forward.3} parent=0 // pred_fallthru
    _
  // Predicated region
  $region62: #{cbhg_forward.3} parent=0 // pred_check
    _
  $region63: #{cbhg_forward.3} parent=0 // pred_check_branch
    %55 = sbr.rel (0) target = $region65
  $region64: #{cbhg_forward.3} parent=0 // pred_region
    _
  $region65: #{cbhg_forward.3} parent=0 // pred_fallthru
    _
  // Predicated region
  $region66: #{cbhg_forward.3} parent=0 // pred_check
    _
  $region67: #{cbhg_forward.3} parent=0 // pred_check_branch
    %57 = sbr.rel (0) target = $region69
  $region68: #{cbhg_forward.3} parent=0 // pred_region
    _
  $region69: #{cbhg_forward.3} parent=0 // pred_fallthru
    _
  // Predicated region
  $region70: #{cbhg_forward.3} parent=0 // pred_check
    _
  $region71: #{cbhg_forward.3} parent=0 // pred_check_branch
    %59 = sbr.rel (0) target = $region73
  $region72: #{cbhg_forward.3} parent=0 // pred_region
    _
  $region73: #{cbhg_forward.3} parent=0 // pred_fallthru
    _
  // Predicated region
  $region74: #{cbhg_forward.3} parent=0 // pred_check
    _
  $region75: #{cbhg_forward.3} parent=0 // pred_check_branch
    %61 = sbr.rel (0) target = $region77
  $region76: #{cbhg_forward.3} parent=0 // pred_region
    _
  $region77: #{cbhg_forward.3} parent=0 // pred_fallthru
    _
  %v62 = vld [vmem:[%s0] sm:$0xff]
  %v63 = vld [vmem:[%s0 + $0x8] sm:$0xff]
  %v64 = vld [vmem:[%s1] sm:$0xff]
  %v65 = vld [vmem:[%s1 + $0x8] sm:$0xff]
  %v66 = vld [vmem:[%s1 + $0x10] sm:$0xff]
  %v67 = vld [vmem:[%s1 + $0x18] sm:$0xff]
  %v68 = vld [vmem:[%s2] sm:$0xff]
  %v69 = vld [vmem:[%s2 + $0x8] sm:$0xff]
  %v70 = vld [vmem:[%s2 + $0x10] sm:$0xff]
  %v71 = vld [vmem:[%s2 + $0x18] sm:$0xff]
  %v72 = vld [vmem:[%s3] sm:$0xff]
  %v73 = vld [vmem:[%s3 + $0x8] sm:$0xff]
  %v74 = vld [vmem:[%s3 + $0x10] sm:$0xff]
  %v75 = vld [vmem:[%s3 + $0x18] sm:$0xff]
  %78 = vrot.lane.b32.xlu0 %v62, 126
  %v79 = vpop.permute.xlu0 %78
  %80 = vrot.lane.b32.xlu0 %v63, 126
  %v81 = vpop.permute.xlu0 %80
  %84 = vrot.lane.b32.xlu0 %v62, 122
  %v85 = vpop.permute.xlu0 %84
  %86 = vrot.lane.b32.xlu0 %v63, 122
  %v87 = vpop.permute.xlu0 %86
  %vm90 = vcmask 130048
  %v91 = vsel %vm90, %v79, %v85
  %v92 = vsel %vm90, %v81, %v87
  %v94 = vsel %vm90, %v64, 0
  %v97 = vsel %vm90, %v65, 0
  %v100 = vsel %vm90, %v66, 0
  %v103 = vsel %vm90, %v67, 0
  %105 = vmatprep.subr.mxu0 0.0
  %106 = vmatpush1.msra.mxu0 %v91
  %107 = vmatprep.subr.mxu0 0.0
  %108 = vmatpush1.msra.mxu0 %v92
  %109 = vmatprep.subr.mxu0 0.0
  %110 = vmatpush1.msra.mxu0 0.0
  %111 = vmatprep.subr.mxu0 0.0
  %112 = vmatpush1.msra.mxu0 0.0
  %113 = vmatprep.subr.mxu0 0.0
  %114 = vmatpush1.msra.mxu0 0.0
  %115 = vmatprep.subr.mxu0 0.0
  %116 = vmatpush1.msra.mxu0 0.0
  %117 = vmatprep.subr.mxu0 0.0
  %118 = vmatpush1.msra.mxu0 0.0
  %119 = vmatprep.subr.mxu0 0.0
  %120 = vmatpush1.msra.mxu0 0.0
  %121 = vmatprep.subr.mxu0 0.0
  %122 = vmatpush1.msra.mxu0 0.0
  %123 = vmatprep.subr.mxu0 0.0
  %124 = vmatpush1.msra.mxu0 0.0
  %125 = vmatprep.subr.mxu0 0.0
  %126 = vmatpush1.msra.mxu0 0.0
  %127 = vmatprep.subr.mxu0 0.0
  %128 = vmatpush1.msra.mxu0 0.0
  %129 = vmatprep.subr.mxu0 0.0
  %130 = vmatpush1.msra.mxu0 0.0
  %131 = vmatprep.subr.mxu0 0.0
  %132 = vmatpush1.msra.mxu0 0.0
  %133 = vmatprep.subr.mxu0 0.0
  %134 = vmatpush1.msra.mxu0 0.0
  %135 = vmatprep.subr.mxu0 0.0
  %136 = vmatpush1.msra.mxu0 0.0
  %137 = vmatprep.subr.mxu0 0.0
  %138 = vmatpush1.msra.mxu0 0.0
  %139 = vmatprep.subr.mxu0 0.0
  %140 = vmatpush1.msra.mxu0 0.0
  %141 = vmatprep.subr.mxu0 0.0
  %142 = vmatpush1.msra.mxu0 0.0
  %143 = vmatprep.subr.mxu0 0.0
  %144 = vmatpush1.msra.mxu0 0.0
  %145 = vmatprep.subr.mxu0 0.0
  %146 = vmatpush1.msra.mxu0 0.0
  %147 = vmatprep.subr.mxu0 0.0
  %148 = vmatpush1.msra.mxu0 0.0
  %149 = vmatprep.subr.mxu0 0.0
  %150 = vmatpush1.msra.mxu0 0.0
  %151 = vmatprep.subr.mxu0 0.0
  %152 = vmatpush1.msra.mxu0 0.0
  %153 = vmatprep.subr.mxu0 0.0
  %154 = vmatpush1.msra.mxu0 0.0
  %155 = vmatprep.subr.mxu0 0.0
  %156 = vmatpush1.msra.mxu0 0.0
  %157 = vmatprep.subr.mxu0 0.0
  %158 = vmatpush1.msra.mxu0 0.0
  %159 = vmatprep.subr.mxu0 0.0
  %160 = vmatpush1.msra.mxu0 0.0
  %161 = vmatprep.subr.mxu0 0.0
  %162 = vmatpush1.msra.mxu0 0.0
  %163 = vmatprep.subr.mxu0 0.0
  %164 = vmatpush1.msra.mxu0 0.0
  %165 = vmatprep.subr.mxu0 0.0
  %166 = vmatpush1.msra.mxu0 0.0
  %167 = vmatprep.subr.mxu0 0.0
  %168 = vmatpush1.msra.mxu0 0.0
  %169 = vmatprep.mubr.f32.mxu0 0.0
  %170 = vmatmul.mubr.f32.gmra.mrb[0].mxu0 %v94
  %v171 = vpop.f32.mrb[0].mxu0
  %v172 = vadd.f32 0.0, %v171
  %v173 = vpop.f32.mrb[0].mxu0
  %174 = vmatprep.mubr.f32.mxu0 0.0
  %175 = vmatmul.mubr.f32.gmra.mrb[0].mxu0 %v97
  %v176 = vpop.f32.mrb[0].mxu0
  %v177 = vadd.f32 0.0, %v176
  %v178 = vpop.f32.mrb[0].mxu0
  %179 = vmatprep.mubr.f32.mxu0 0.0
  %180 = vmatmul.mubr.f32.gmra.mrb[0].mxu0 %v100
  %v181 = vpop.f32.mrb[0].mxu0
  %v182 = vadd.f32 0.0, %v181
  %v183 = vpop.f32.mrb[0].mxu0
  %184 = vmatprep.mubr.f32.mxu0 0.0
  %185 = vmatmul.mubr.f32.gmra.mrb[0].mxu0 %v103
  %v186 = vpop.f32.mrb[0].mxu0
  %v187 = vadd.f32 0.0, %v186
  %v188 = vpop.f32.mrb[0].mxu0
  %189 = vdwg.mxu0
  %v190 = vmax.f32 %v172, 0.0
  %v191 = vmax.f32 %v177, 0.0
  %v192 = vmax.f32 %v182, 0.0
  %v193 = vmax.f32 %v187, 0.0
  %vm194 = vcmask 261120
  %v195 = vsel %vm194, %v190, 0.0
  %196 = vadd.xlane.f32.xlu0 %v195
  %v197 = vpop.xlane.xlu0 %196
  %v198 = vsel %vm194, %v191, 0.0
  %199 = vadd.xlane.f32.xlu0 %v198
  %v200 = vpop.xlane.xlu0 %199
  %v201 = vsel %vm194, %v192, 0.0
  %202 = vadd.xlane.f32.xlu0 %v201
  %v203 = vpop.xlane.xlu0 %202
  %v204 = vsel %vm194, %v193, 0.0
  %205 = vadd.xlane.f32.xlu0 %v204
  %v206 = vpop.xlane.xlu0 %205
  %v207 = vmul.f32 %v190, %v190
  %v208 = vmul.f32 %v191, %v191
  %v209 = vmul.f32 %v192, %v192
  %v210 = vmul.f32 %v193, %v193
  %v211 = vsel %vm194, %v207, 0.0
  %212 = vadd.xlane.f32.xlu0 %v211
  %v213 = vpop.xlane.xlu0 %212
  %v214 = vsel %vm194, %v208, 0.0
  %215 = vadd.xlane.f32.xlu0 %v214
  %v216 = vpop.xlane.xlu0 %215
  %v217 = vsel %vm194, %v209, 0.0
  %218 = vadd.xlane.f32.xlu0 %v217
  %v219 = vpop.xlane.xlu0 %218
  %v220 = vsel %vm194, %v210, 0.0
  %221 = vadd.xlane.f32.xlu0 %v220
  %v222 = vpop.xlane.xlu0 %221
  %v223 = vrcp.pop 32.0
  %v224 = vmul.f32 %v197, %v223
  %v225 = vmul.f32 %v200, %v223
  %v226 = vmul.f32 %v203, %v223
  %v227 = vmul.f32 %v206, %v223
  %v228 = vmul.f32 %v213, %v223
  %v229 = vmul.f32 %v216, %v223
  %v230 = vmul.f32 %v219, %v223
  %v231 = vmul.f32 %v222, %v223
  %v232 = vmul.f32 %v224, %v224
  %v233 = vmul.f32 %v225, %v225
  %v234 = vmul.f32 %v226, %v226
  %v235 = vmul.f32 %v227, %v227
  %v236 = vsub.f32 %v228, %v232
  %v237 = vsub.f32 %v229, %v233
  %v238 = vsub.f32 %v230, %v234
  %v239 = vsub.f32 %v231, %v235
  %v240 = vmax.f32 %v236, 0.0
  %v241 = vmax.f32 %v237, 0.0
  %v242 = vmax.f32 %v238, 0.0
  %v243 = vmax.f32 %v239, 0.0
  %v244 = vsub.f32 %v190, %v224
  %v245 = vsub.f32 %v191, %v225
  %v246 = vsub.f32 %v192, %v226
  %v247 = vsub.f32 %v193, %v227
  %v248 = vadd.f32 %v240, 1e-05
  %v249 = vadd.f32 %v241, 1e-05
  %v250 = vadd.f32 %v242, 1e-05
  %v251 = vadd.f32 %v243, 1e-05
  %v252 = vrsqrt.pop %v248
  %v253 = vrsqrt.pop %v249
  %v254 = vrsqrt.pop %v250
  %v255 = vrsqrt.pop %v251
  %v256 = vmul.f32 %v244, %v252
  %v257 = vmul.f32 %v245, %v253
  %v258 = vmul.f32 %v246, %v254
  %v259 = vmul.f32 %v247, %v255
  %261 = vset.pattern.permute.xlu0 0
  %262 = vperm.xlu0 %261, %v68
  %v263 = vpop.permute.xlu0 %262
  %266 = vset.pattern.permute.xlu0 0
  %267 = vperm.xlu0 %266, %v69
  %v268 = vpop.permute.xlu0 %267
  %271 = vset.pattern.permute.xlu0 0
  %272 = vperm.xlu0 %271, %v70
  %v273 = vpop.permute.xlu0 %272
  %276 = vset.pattern.permute.xlu0 0
  %277 = vperm.xlu0 %276, %v71
  %v278 = vpop.permute.xlu0 %277
  %v280 = vmul.f32 %v256, %v263
  %v281 = vmul.f32 %v257, %v268
  %v282 = vmul.f32 %v258, %v273
  %v283 = vmul.f32 %v259, %v278
  %285 = vset.pattern.permute.xlu0 0
  %286 = vperm.xlu0 %285, %v72
  %v287 = vpop.permute.xlu0 %286
  %290 = vset.pattern.permute.xlu0 0
  %291 = vperm.xlu0 %290, %v73
  %v292 = vpop.permute.xlu0 %291
  %295 = vset.pattern.permute.xlu0 0
  %296 = vperm.xlu0 %295, %v74
  %v297 = vpop.permute.xlu0 %296
  %300 = vset.pattern.permute.xlu0 0
  %301 = vperm.xlu0 %300, %v75
  %v302 = vpop.permute.xlu0 %301
  %v304 = vadd.f32 %v280, %v287
  %v305 = vadd.f32 %v281, %v292
  %v306 = vadd.f32 %v282, %v297
  %v307 = vadd.f32 %v283, %v302
  %v308 = vld [vmem:[%s4] sm:$0xff]
  %v309 = vld [vmem:[%s4 + $0x8] sm:$0xff]
  %v310 = vld [vmem:[%s4 + $0x10] sm:$0xff]
  %v311 = vld [vmem:[%s4 + $0x18] sm:$0xff]
  %v312 = vld [vmem:[%s5] sm:$0xff]
  %v313 = vld [vmem:[%s5 + $0x8] sm:$0xff]
  %v314 = vld [vmem:[%s5 + $0x10] sm:$0xff]
  %v315 = vld [vmem:[%s5 + $0x18] sm:$0xff]
  %v316 = vld [vmem:[%s6] sm:$0xff]
  %v317 = vld [vmem:[%s6 + $0x8] sm:$0xff]
  %v318 = vld [vmem:[%s6 + $0x10] sm:$0xff]
  %v319 = vld [vmem:[%s6 + $0x18] sm:$0xff]
  %320 = vrot.lane.b32.xlu0 %v62, 127
  %v321 = vpop.permute.xlu0 %320
  %322 = vrot.lane.b32.xlu0 %v63, 127
  %v323 = vpop.permute.xlu0 %322
  %324 = vrot.lane.b32.xlu0 %v321, 127
  %v325 = vpop.permute.xlu0 %324
  %326 = vrot.lane.b32.xlu0 %v323, 127
  %v327 = vpop.permute.xlu0 %326
  %332 = vrot.lane.b32.xlu0 %v62, 124
  %v333 = vpop.permute.xlu0 %332
  %334 = vrot.lane.b32.xlu0 %v63, 124
  %v335 = vpop.permute.xlu0 %334
  %336 = vrot.lane.b32.xlu0 %v321, 124
  %v337 = vpop.permute.xlu0 %336
  %338 = vrot.lane.b32.xlu0 %v323, 124
  %v339 = vpop.permute.xlu0 %338
  %vm344 = vcmask 138240
  %v345 = vsel %vm344, %v321, %v333
  %v346 = vsel %vm344, %v323, %v335
  %v347 = vsel %vm344, %v325, %v337
  %v348 = vsel %vm344, %v327, %v339
  %v350 = vsel %vm194, %v308, 0
  %v353 = vsel %vm194, %v309, 0
  %v356 = vsel %vm194, %v310, 0
  %v359 = vsel %vm194, %v311, 0
  %361 = vmatprep.subr.mxu0 0.0
  %362 = vmatpush1.msra.mxu0 %v345
  %363 = vmatprep.subr.mxu0 0.0
  %364 = vmatpush1.msra.mxu0 %v346
  %365 = vmatprep.subr.mxu0 0.0
  %366 = vmatpush1.msra.mxu0 %v347
  %367 = vmatprep.subr.mxu0 0.0
  %368 = vmatpush1.msra.mxu0 %v348
  %369 = vmatprep.subr.mxu0 0.0
  %370 = vmatpush1.msra.mxu0 0.0
  %371 = vmatprep.subr.mxu0 0.0
  %372 = vmatpush1.msra.mxu0 0.0
  %373 = vmatprep.subr.mxu0 0.0
  %374 = vmatpush1.msra.mxu0 0.0
  %375 = vmatprep.subr.mxu0 0.0
  %376 = vmatpush1.msra.mxu0 0.0
  %377 = vmatprep.subr.mxu0 0.0
  %378 = vmatpush1.msra.mxu0 0.0
  %379 = vmatprep.subr.mxu0 0.0
  %380 = vmatpush1.msra.mxu0 0.0
  %381 = vmatprep.subr.mxu0 0.0
  %382 = vmatpush1.msra.mxu0 0.0
  %383 = vmatprep.subr.mxu0 0.0
  %384 = vmatpush1.msra.mxu0 0.0
  %385 = vmatprep.subr.mxu0 0.0
  %386 = vmatpush1.msra.mxu0 0.0
  %387 = vmatprep.subr.mxu0 0.0
  %388 = vmatpush1.msra.mxu0 0.0
  %389 = vmatprep.subr.mxu0 0.0
  %390 = vmatpush1.msra.mxu0 0.0
  %391 = vmatprep.subr.mxu0 0.0
  %392 = vmatpush1.msra.mxu0 0.0
  %393 = vmatprep.subr.mxu0 0.0
  %394 = vmatpush1.msra.mxu0 0.0
  %395 = vmatprep.subr.mxu0 0.0
  %396 = vmatpush1.msra.mxu0 0.0
  %397 = vmatprep.subr.mxu0 0.0
  %398 = vmatpush1.msra.mxu0 0.0
  %399 = vmatprep.subr.mxu0 0.0
  %400 = vmatpush1.msra.mxu0 0.0
  %401 = vmatprep.subr.mxu0 0.0
  %402 = vmatpush1.msra.mxu0 0.0
  %403 = vmatprep.subr.mxu0 0.0
  %404 = vmatpush1.msra.mxu0 0.0
  %405 = vmatprep.subr.mxu0 0.0
  %406 = vmatpush1.msra.mxu0 0.0
  %407 = vmatprep.subr.mxu0 0.0
  %408 = vmatpush1.msra.mxu0 0.0
  %409 = vmatprep.subr.mxu0 0.0
  %410 = vmatpush1.msra.mxu0 0.0
  %411 = vmatprep.subr.mxu0 0.0
  %412 = vmatpush1.msra.mxu0 0.0
  %413 = vmatprep.subr.mxu0 0.0
  %414 = vmatpush1.msra.mxu0 0.0
  %415 = vmatprep.subr.mxu0 0.0
  %416 = vmatpush1.msra.mxu0 0.0
  %417 = vmatprep.subr.mxu0 0.0
  %418 = vmatpush1.msra.mxu0 0.0
  %419 = vmatprep.subr.mxu0 0.0
  %420 = vmatpush1.msra.mxu0 0.0
  %421 = vmatprep.subr.mxu0 0.0
  %422 = vmatpush1.msra.mxu0 0.0
  %423 = vmatprep.subr.mxu0 0.0
  %424 = vmatpush1.msra.mxu0 0.0
  %425 = vmatprep.mubr.f32.mxu0 0.0
  %426 = vmatmul.mubr.f32.gmra.mrb[0].mxu0 %v350
  %v427 = vpop.f32.mrb[0].mxu0
  %v428 = vadd.f32 0.0, %v427
  %v429 = vpop.f32.mrb[0].mxu0
  %430 = vmatprep.mubr.f32.mxu0 0.0
  %431 = vmatmul.mubr.f32.gmra.mrb[0].mxu0 %v353
  %v432 = vpop.f32.mrb[0].mxu0
  %v433 = vadd.f32 0.0, %v432
  %v434 = vpop.f32.mrb[0].mxu0
  %435 = vmatprep.mubr.f32.mxu0 0.0
  %436 = vmatmul.mubr.f32.gmra.mrb[0].mxu0 %v356
  %v437 = vpop.f32.mrb[0].mxu0
  %v438 = vadd.f32 0.0, %v437
  %v439 = vpop.f32.mrb[0].mxu0
  %440 = vmatprep.mubr.f32.mxu0 0.0
  %441 = vmatmul.mubr.f32.gmra.mrb[0].mxu0 %v359
  %v442 = vpop.f32.mrb[0].mxu0
  %v443 = vadd.f32 0.0, %v442
  %v444 = vpop.f32.mrb[0].mxu0
  %445 = vdwg.mxu0
  %v446 = vmax.f32 %v428, 0.0
  %v447 = vmax.f32 %v433, 0.0
  %v448 = vmax.f32 %v438, 0.0
  %v449 = vmax.f32 %v443, 0.0
  %vm450 = vcmask 277504
  %v451 = vsel %vm450, %v446, 0.0
  %452 = vadd.xlane.f32.xlu0 %v451
  %v453 = vpop.xlane.xlu0 %452
  %v454 = vsel %vm450, %v447, 0.0
  %455 = vadd.xlane.f32.xlu0 %v454
  %v456 = vpop.xlane.xlu0 %455
  %v457 = vsel %vm450, %v448, 0.0
  %458 = vadd.xlane.f32.xlu0 %v457
  %v459 = vpop.xlane.xlu0 %458
  %v460 = vsel %vm450, %v449, 0.0
  %461 = vadd.xlane.f32.xlu0 %v460
  %v462 = vpop.xlane.xlu0 %461
  %v463 = vmul.f32 %v446, %v446
  %v464 = vmul.f32 %v447, %v447
  %v465 = vmul.f32 %v448, %v448
  %v466 = vmul.f32 %v449, %v449
  %v467 = vsel %vm450, %v463, 0.0
  %468 = vadd.xlane.f32.xlu0 %v467
  %v469 = vpop.xlane.xlu0 %468
  %v470 = vsel %vm450, %v464, 0.0
  %471 = vadd.xlane.f32.xlu0 %v470
  %v472 = vpop.xlane.xlu0 %471
  %v473 = vsel %vm450, %v465, 0.0
  %474 = vadd.xlane.f32.xlu0 %v473
  %v475 = vpop.xlane.xlu0 %474
  %v476 = vsel %vm450, %v466, 0.0
  %477 = vadd.xlane.f32.xlu0 %v476
  %v478 = vpop.xlane.xlu0 %477
  %v479 = vrcp.pop 34.0
  %v480 = vmul.f32 %v453, %v479
  %v481 = vmul.f32 %v456, %v479
  %v482 = vmul.f32 %v459, %v479
  %v483 = vmul.f32 %v462, %v479
  %v484 = vmul.f32 %v469, %v479
  %v485 = vmul.f32 %v472, %v479
  %v486 = vmul.f32 %v475, %v479
  %v487 = vmul.f32 %v478, %v479
  %v488 = vmul.f32 %v480, %v480
  %v489 = vmul.f32 %v481, %v481
  %v490 = vmul.f32 %v482, %v482
  %v491 = vmul.f32 %v483, %v483
  %v492 = vsub.f32 %v484, %v488
  %v493 = vsub.f32 %v485, %v489
  %v494 = vsub.f32 %v486, %v490
  %v495 = vsub.f32 %v487, %v491
  %v496 = vmax.f32 %v492, 0.0
  %v497 = vmax.f32 %v493, 0.0
  %v498 = vmax.f32 %v494, 0.0
  %v499 = vmax.f32 %v495, 0.0
  %v500 = vsub.f32 %v446, %v480
  %v501 = vsub.f32 %v447, %v481
  %v502 = vsub.f32 %v448, %v482
  %v503 = vsub.f32 %v449, %v483
  %v504 = vadd.f32 %v496, 1e-05
  %v505 = vadd.f32 %v497, 1e-05
  %v506 = vadd.f32 %v498, 1e-05
  %v507 = vadd.f32 %v499, 1e-05
  %v508 = vrsqrt.pop %v504
  %v509 = vrsqrt.pop %v505
  %v510 = vrsqrt.pop %v506
  %v511 = vrsqrt.pop %v507
  %v512 = vmul.f32 %v500, %v508
  %v513 = vmul.f32 %v501, %v509
  %v514 = vmul.f32 %v502, %v510
  %v515 = vmul.f32 %v503, %v511
  %517 = vset.pattern.permute.xlu0 0
  %518 = vperm.xlu0 %517, %v312
  %v519 = vpop.permute.xlu0 %518
  %522 = vset.pattern.permute.xlu0 0
  %523 = vperm.xlu0 %522, %v313
  %v524 = vpop.permute.xlu0 %523
  %527 = vset.pattern.permute.xlu0 0
  %528 = vperm.xlu0 %527, %v314
  %v529 = vpop.permute.xlu0 %528
  %532 = vset.pattern.permute.xlu0 0
  %533 = vperm.xlu0 %532, %v315
  %v534 = vpop.permute.xlu0 %533
  %v536 = vmul.f32 %v512, %v519
  %v537 = vmul.f32 %v513, %v524
  %v538 = vmul.f32 %v514, %v529
  %v539 = vmul.f32 %v515, %v534
  %541 = vset.pattern.permute.xlu0 0
  %542 = vperm.xlu0 %541, %v316
  %v543 = vpop.permute.xlu0 %542
  %546 = vset.pattern.permute.xlu0 0
  %547 = vperm.xlu0 %546, %v317
  %v548 = vpop.permute.xlu0 %547
  %551 = vset.pattern.permute.xlu0 0
  %552 = vperm.xlu0 %551, %v318
  %v553 = vpop.permute.xlu0 %552
  %556 = vset.pattern.permute.xlu0 0
  %557 = vperm.xlu0 %556, %v319
  %v558 = vpop.permute.xlu0 %557
  %v560 = vadd.f32 %v536, %v543
  %v561 = vadd.f32 %v537, %v548
  %v562 = vadd.f32 %v538, %v553
  %v563 = vadd.f32 %v539, %v558
  %568 = vrot.lane.b32.xlu0 %v560, 127
  %v569 = vpop.permute.xlu0 %568
  %570 = vrot.lane.b32.xlu0 %v561, 127
  %v571 = vpop.permute.xlu0 %570
  %572 = vrot.lane.b32.xlu0 %v562, 127
  %v573 = vpop.permute.xlu0 %572
  %574 = vrot.lane.b32.xlu0 %v563, 127
  %v575 = vpop.permute.xlu0 %574
  %v580 = vsel %vm90, %v560, %v569
  %v581 = vsel %vm90, %v561, %v571
  %v582 = vsel %vm90, %v562, %v573
  %v583 = vsel %vm90, %v563, %v575
  %v584 = vld [vmem:[%s7] sm:$0xff]
  %v585 = vld [vmem:[%s7 + $0x8] sm:$0xff]
  %v586 = vld [vmem:[%s7 + $0x10] sm:$0xff]
  %v587 = vld [vmem:[%s7 + $0x18] sm:$0xff]
  %v588 = vld [vmem:[%s8] sm:$0xff]
  %v589 = vld [vmem:[%s8 + $0x8] sm:$0xff]
  %v590 = vld [vmem:[%s8 + $0x10] sm:$0xff]
  %v591 = vld [vmem:[%s8 + $0x18] sm:$0xff]
  %v592 = vld [vmem:[%s9] sm:$0xff]
  %v593 = vld [vmem:[%s9 + $0x8] sm:$0xff]
  %v594 = vld [vmem:[%s9 + $0x10] sm:$0xff]
  %v595 = vld [vmem:[%s9 + $0x18] sm:$0xff]
  %596 = vrot.lane.b32.xlu0 %v79, 127
  %v597 = vpop.permute.xlu0 %596
  %598 = vrot.lane.b32.xlu0 %v81, 127
  %v599 = vpop.permute.xlu0 %598
  %602 = vrot.lane.b32.xlu0 %v62, 123
  %v603 = vpop.permute.xlu0 %602
  %604 = vrot.lane.b32.xlu0 %v63, 123
  %v605 = vpop.permute.xlu0 %604
  %606 = vrot.lane.b32.xlu0 %v321, 123
  %v607 = vpop.permute.xlu0 %606
  %608 = vrot.lane.b32.xlu0 %v323, 123
  %v609 = vpop.permute.xlu0 %608
  %610 = vrot.lane.b32.xlu0 %v79, 123
  %v611 = vpop.permute.xlu0 %610
  %612 = vrot.lane.b32.xlu0 %v81, 123
  %v613 = vpop.permute.xlu0 %612
  %v620 = vsel %vm90, %v321, %v603
  %v621 = vsel %vm90, %v323, %v605
  %v622 = vsel %vm90, %v325, %v607
  %v623 = vsel %vm90, %v327, %v609
  %v624 = vsel %vm90, %v597, %v611
  %v625 = vsel %vm90, %v599, %v613
  %vm626 = vcmask 392192
  %v628 = vsel %vm626, %v584, 0
  %v631 = vsel %vm626, %v585, 0
  %v634 = vsel %vm626, %v586, 0
  %v637 = vsel %vm626, %v587, 0
  %639 = vmatprep.subr.mxu0 0.0
  %640 = vmatpush1.msra.mxu0 %v620
  %641 = vmatprep.subr.mxu0 0.0
  %642 = vmatpush1.msra.mxu0 %v621
  %643 = vmatprep.subr.mxu0 0.0
  %644 = vmatpush1.msra.mxu0 %v622
  %645 = vmatprep.subr.mxu0 0.0
  %646 = vmatpush1.msra.mxu0 %v623
  %647 = vmatprep.subr.mxu0 0.0
  %648 = vmatpush1.msra.mxu0 %v624
  %649 = vmatprep.subr.mxu0 0.0
  %650 = vmatpush1.msra.mxu0 %v625
  %651 = vmatprep.subr.mxu0 0.0
  %652 = vmatpush1.msra.mxu0 0.0
  %653 = vmatprep.subr.mxu0 0.0
  %654 = vmatpush1.msra.mxu0 0.0
  %655 = vmatprep.subr.mxu0 0.0
  %656 = vmatpush1.msra.mxu0 0.0
  %657 = vmatprep.subr.mxu0 0.0
  %658 = vmatpush1.msra.mxu0 0.0
  %659 = vmatprep.subr.mxu0 0.0
  %660 = vmatpush1.msra.mxu0 0.0
  %661 = vmatprep.subr.mxu0 0.0
  %662 = vmatpush1.msra.mxu0 0.0
  %663 = vmatprep.subr.mxu0 0.0
  %664 = vmatpush1.msra.mxu0 0.0
  %665 = vmatprep.subr.mxu0 0.0
  %666 = vmatpush1.msra.mxu0 0.0
  %667 = vmatprep.subr.mxu0 0.0
  %668 = vmatpush1.msra.mxu0 0.0
  %669 = vmatprep.subr.mxu0 0.0
  %670 = vmatpush1.msra.mxu0 0.0
  %671 = vmatprep.subr.mxu0 0.0
  %672 = vmatpush1.msra.mxu0 0.0
  %673 = vmatprep.subr.mxu0 0.0
  %674 = vmatpush1.msra.mxu0 0.0
  %675 = vmatprep.subr.mxu0 0.0
  %676 = vmatpush1.msra.mxu0 0.0
  %677 = vmatprep.subr.mxu0 0.0
  %678 = vmatpush1.msra.mxu0 0.0
  %679 = vmatprep.subr.mxu0 0.0
  %680 = vmatpush1.msra.mxu0 0.0
  %681 = vmatprep.subr.mxu0 0.0
  %682 = vmatpush1.msra.mxu0 0.0
  %683 = vmatprep.subr.mxu0 0.0
  %684 = vmatpush1.msra.mxu0 0.0
  %685 = vmatprep.subr.mxu0 0.0
  %686 = vmatpush1.msra.mxu0 0.0
  %687 = vmatprep.subr.mxu0 0.0
  %688 = vmatpush1.msra.mxu0 0.0
  %689 = vmatprep.subr.mxu0 0.0
  %690 = vmatpush1.msra.mxu0 0.0
  %691 = vmatprep.subr.mxu0 0.0
  %692 = vmatpush1.msra.mxu0 0.0
  %693 = vmatprep.subr.mxu0 0.0
  %694 = vmatpush1.msra.mxu0 0.0
  %695 = vmatprep.subr.mxu0 0.0
  %696 = vmatpush1.msra.mxu0 0.0
  %697 = vmatprep.subr.mxu0 0.0
  %698 = vmatpush1.msra.mxu0 0.0
  %699 = vmatprep.subr.mxu0 0.0
  %700 = vmatpush1.msra.mxu0 0.0
  %701 = vmatprep.subr.mxu0 0.0
  %702 = vmatpush1.msra.mxu0 0.0
  %703 = vmatprep.mubr.f32.mxu0 0.0
  %704 = vmatmul.mubr.f32.gmra.mrb[0].mxu0 %v628
  %v705 = vpop.f32.mrb[0].mxu0
  %v706 = vadd.f32 0.0, %v705
  %v707 = vpop.f32.mrb[0].mxu0
  %708 = vmatprep.mubr.f32.mxu0 0.0
  %709 = vmatmul.mubr.f32.gmra.mrb[0].mxu0 %v631
  %v710 = vpop.f32.mrb[0].mxu0
  %v711 = vadd.f32 0.0, %v710
  %v712 = vpop.f32.mrb[0].mxu0
  %713 = vmatprep.mubr.f32.mxu0 0.0
  %714 = vmatmul.mubr.f32.gmra.mrb[0].mxu0 %v634
  %v715 = vpop.f32.mrb[0].mxu0
  %v716 = vadd.f32 0.0, %v715
  %v717 = vpop.f32.mrb[0].mxu0
  %718 = vmatprep.mubr.f32.mxu0 0.0
  %719 = vmatmul.mubr.f32.gmra.mrb[0].mxu0 %v637
  %v720 = vpop.f32.mrb[0].mxu0
  %v721 = vadd.f32 0.0, %v720
  %v722 = vpop.f32.mrb[0].mxu0
  %723 = vdwg.mxu0
  %v724 = vmax.f32 %v706, 0.0
  %v725 = vmax.f32 %v711, 0.0
  %v726 = vmax.f32 %v716, 0.0
  %v727 = vmax.f32 %v721, 0.0
  %v728 = vsel %vm194, %v724, 0.0
  %729 = vadd.xlane.f32.xlu0 %v728
  %v730 = vpop.xlane.xlu0 %729
  %v731 = vsel %vm194, %v725, 0.0
  %732 = vadd.xlane.f32.xlu0 %v731
  %v733 = vpop.xlane.xlu0 %732
  %v734 = vsel %vm194, %v726, 0.0
  %735 = vadd.xlane.f32.xlu0 %v734
  %v736 = vpop.xlane.xlu0 %735
  %v737 = vsel %vm194, %v727, 0.0
  %738 = vadd.xlane.f32.xlu0 %v737
  %v739 = vpop.xlane.xlu0 %738
  %v740 = vmul.f32 %v724, %v724
  %v741 = vmul.f32 %v725, %v725
  %v742 = vmul.f32 %v726, %v726
  %v743 = vmul.f32 %v727, %v727
  %v744 = vsel %vm194, %v740, 0.0
  %745 = vadd.xlane.f32.xlu0 %v744
  %v746 = vpop.xlane.xlu0 %745
  %v747 = vsel %vm194, %v741, 0.0
  %748 = vadd.xlane.f32.xlu0 %v747
  %v749 = vpop.xlane.xlu0 %748
  %v750 = vsel %vm194, %v742, 0.0
  %751 = vadd.xlane.f32.xlu0 %v750
  %v752 = vpop.xlane.xlu0 %751
  %v753 = vsel %vm194, %v743, 0.0
  %754 = vadd.xlane.f32.xlu0 %v753
  %v755 = vpop.xlane.xlu0 %754
  %v756 = vmul.f32 %v730, %v223
  %v757 = vmul.f32 %v733, %v223
  %v758 = vmul.f32 %v736, %v223
  %v759 = vmul.f32 %v739, %v223
  %v760 = vmul.f32 %v746, %v223
  %v761 = vmul.f32 %v749, %v223
  %v762 = vmul.f32 %v752, %v223
  %v763 = vmul.f32 %v755, %v223
  %v764 = vmul.f32 %v756, %v756
  %v765 = vmul.f32 %v757, %v757
  %v766 = vmul.f32 %v758, %v758
  %v767 = vmul.f32 %v759, %v759
  %v768 = vsub.f32 %v760, %v764
  %v769 = vsub.f32 %v761, %v765
  %v770 = vsub.f32 %v762, %v766
  %v771 = vsub.f32 %v763, %v767
  %v772 = vmax.f32 %v768, 0.0
  %v773 = vmax.f32 %v769, 0.0
  %v774 = vmax.f32 %v770, 0.0
  %v775 = vmax.f32 %v771, 0.0
  %v776 = vsub.f32 %v724, %v756
  %v777 = vsub.f32 %v725, %v757
  %v778 = vsub.f32 %v726, %v758
  %v779 = vsub.f32 %v727, %v759
  %v780 = vadd.f32 %v772, 1e-05
  %v781 = vadd.f32 %v773, 1e-05
  %v782 = vadd.f32 %v774, 1e-05
  %v783 = vadd.f32 %v775, 1e-05
  %v784 = vrsqrt.pop %v780
  %v785 = vrsqrt.pop %v781
  %v786 = vrsqrt.pop %v782
  %v787 = vrsqrt.pop %v783
  %v788 = vmul.f32 %v776, %v784
  %v789 = vmul.f32 %v777, %v785
  %v790 = vmul.f32 %v778, %v786
  %v791 = vmul.f32 %v779, %v787
  %793 = vset.pattern.permute.xlu0 0
  %794 = vperm.xlu0 %793, %v588
  %v795 = vpop.permute.xlu0 %794
  %798 = vset.pattern.permute.xlu0 0
  %799 = vperm.xlu0 %798, %v589
  %v800 = vpop.permute.xlu0 %799
  %803 = vset.pattern.permute.xlu0 0
  %804 = vperm.xlu0 %803, %v590
  %v805 = vpop.permute.xlu0 %804
  %808 = vset.pattern.permute.xlu0 0
  %809 = vperm.xlu0 %808, %v591
  %v810 = vpop.permute.xlu0 %809
  %v812 = vmul.f32 %v788, %v795
  %v813 = vmul.f32 %v789, %v800
  %v814 = vmul.f32 %v790, %v805
  %v815 = vmul.f32 %v791, %v810
  %817 = vset.pattern.permute.xlu0 0
  %818 = vperm.xlu0 %817, %v592
  %v819 = vpop.permute.xlu0 %818
  %822 = vset.pattern.permute.xlu0 0
  %823 = vperm.xlu0 %822, %v593
  %v824 = vpop.permute.xlu0 %823
  %827 = vset.pattern.permute.xlu0 0
  %828 = vperm.xlu0 %827, %v594
  %v829 = vpop.permute.xlu0 %828
  %832 = vset.pattern.permute.xlu0 0
  %833 = vperm.xlu0 %832, %v595
  %v834 = vpop.permute.xlu0 %833
  %v836 = vadd.f32 %v812, %v819
  %v837 = vadd.f32 %v813, %v824
  %v838 = vadd.f32 %v814, %v829
  %v839 = vadd.f32 %v815, %v834
  %v840 = vld [vmem:[%s10] sm:$0xff]
  %v841 = vld [vmem:[%s10 + $0x8] sm:$0xff]
  %v842 = vld [vmem:[%s10 + $0x10] sm:$0xff]
  %v843 = vld [vmem:[%s10 + $0x18] sm:$0xff]
  %v844 = vld [vmem:[%s11] sm:$0xff]
  %v845 = vld [vmem:[%s11 + $0x8] sm:$0xff]
  %v846 = vld [vmem:[%s11 + $0x10] sm:$0xff]
  %v847 = vld [vmem:[%s11 + $0x18] sm:$0xff]
  %v848 = vld [vmem:[%s12] sm:$0xff]
  %v849 = vld [vmem:[%s12 + $0x8] sm:$0xff]
  %v850 = vld [vmem:[%s12 + $0x10] sm:$0xff]
  %v851 = vld [vmem:[%s12 + $0x18] sm:$0xff]
  %852 = vrot.lane.b32.xlu0 %v62, 125
  %v853 = vpop.permute.xlu0 %852
  %854 = vrot.lane.b32.xlu0 %v63, 125
  %v855 = vpop.permute.xlu0 %854
  %858 = vrot.lane.b32.xlu0 %v321, 125
  %v859 = vpop.permute.xlu0 %858
  %860 = vrot.lane.b32.xlu0 %v323, 125
  %v861 = vpop.permute.xlu0 %860
  %862 = vrot.lane.b32.xlu0 %v79, 125
  %v863 = vpop.permute.xlu0 %862
  %864 = vrot.lane.b32.xlu0 %v81, 125
  %v865 = vpop.permute.xlu0 %864
  %866 = vrot.lane.b32.xlu0 %v853, 125
  %v867 = vpop.permute.xlu0 %866
  %868 = vrot.lane.b32.xlu0 %v855, 125
  %v869 = vpop.permute.xlu0 %868
  %v876 = vsel %vm344, %v62, %v853
  %v877 = vsel %vm344, %v63, %v855
  %v878 = vsel %vm344, %v321, %v859
  %v879 = vsel %vm344, %v323, %v861
  %v880 = vsel %vm344, %v79, %v863
  %v881 = vsel %vm344, %v81, %v865
  %v882 = vsel %vm344, %v853, %v867
  %v883 = vsel %vm344, %v855, %v869
  %vm884 = vcmask 523264
  %v886 = vsel %vm884, %v840, 0
  %v889 = vsel %vm884, %v841, 0
  %v892 = vsel %vm884, %v842, 0
  %v895 = vsel %vm884, %v843, 0
  %897 = vmatprep.subr.mxu0 0.0
  %898 = vmatpush1.msra.mxu0 %v876
  %899 = vmatprep.subr.mxu0 0.0
  %900 = vmatpush1.msra.mxu0 %v877
  %901 = vmatprep.subr.mxu0 0.0
  %902 = vmatpush1.msra.mxu0 %v878
  %903 = vmatprep.subr.mxu0 0.0
  %904 = vmatpush1.msra.mxu0 %v879
  %905 = vmatprep.subr.mxu0 0.0
  %906 = vmatpush1.msra.mxu0 %v880
  %907 = vmatprep.subr.mxu0 0.0
  %908 = vmatpush1.msra.mxu0 %v881
  %909 = vmatprep.subr.mxu0 0.0
  %910 = vmatpush1.msra.mxu0 %v882
  %911 = vmatprep.subr.mxu0 0.0
  %912 = vmatpush1.msra.mxu0 %v883
  %913 = vmatprep.subr.mxu0 0.0
  %914 = vmatpush1.msra.mxu0 0.0
  %915 = vmatprep.subr.mxu0 0.0
  %916 = vmatpush1.msra.mxu0 0.0
  %917 = vmatprep.subr.mxu0 0.0
  %918 = vmatpush1.msra.mxu0 0.0
  %919 = vmatprep.subr.mxu0 0.0
  %920 = vmatpush1.msra.mxu0 0.0
  %921 = vmatprep.subr.mxu0 0.0
  %922 = vmatpush1.msra.mxu0 0.0
  %923 = vmatprep.subr.mxu0 0.0
  %924 = vmatpush1.msra.mxu0 0.0
  %925 = vmatprep.subr.mxu0 0.0
  %926 = vmatpush1.msra.mxu0 0.0
  %927 = vmatprep.subr.mxu0 0.0
  %928 = vmatpush1.msra.mxu0 0.0
  %929 = vmatprep.subr.mxu0 0.0
  %930 = vmatpush1.msra.mxu0 0.0
  %931 = vmatprep.subr.mxu0 0.0
  %932 = vmatpush1.msra.mxu0 0.0
  %933 = vmatprep.subr.mxu0 0.0
  %934 = vmatpush1.msra.mxu0 0.0
  %935 = vmatprep.subr.mxu0 0.0
  %936 = vmatpush1.msra.mxu0 0.0
  %937 = vmatprep.subr.mxu0 0.0
  %938 = vmatpush1.msra.mxu0 0.0
  %939 = vmatprep.subr.mxu0 0.0
  %940 = vmatpush1.msra.mxu0 0.0
  %941 = vmatprep.subr.mxu0 0.0
  %942 = vmatpush1.msra.mxu0 0.0
  %943 = vmatprep.subr.mxu0 0.0
  %944 = vmatpush1.msra.mxu0 0.0
  %945 = vmatprep.subr.mxu0 0.0
  %946 = vmatpush1.msra.mxu0 0.0
  %947 = vmatprep.subr.mxu0 0.0
  %948 = vmatpush1.msra.mxu0 0.0
  %949 = vmatprep.subr.mxu0 0.0
  %950 = vmatpush1.msra.mxu0 0.0
  %951 = vmatprep.subr.mxu0 0.0
  %952 = vmatpush1.msra.mxu0 0.0
  %953 = vmatprep.subr.mxu0 0.0
  %954 = vmatpush1.msra.mxu0 0.0
  %955 = vmatprep.subr.mxu0 0.0
  %956 = vmatpush1.msra.mxu0 0.0
  %957 = vmatprep.subr.mxu0 0.0
  %958 = vmatpush1.msra.mxu0 0.0
  %959 = vmatprep.subr.mxu0 0.0
  %960 = vmatpush1.msra.mxu0 0.0
  %961 = vmatprep.mubr.f32.mxu0 0.0
  %962 = vmatmul.mubr.f32.gmra.mrb[0].mxu0 %v886
  %v963 = vpop.f32.mrb[0].mxu0
  %v964 = vadd.f32 0.0, %v963
  %v965 = vpop.f32.mrb[0].mxu0
  %966 = vmatprep.mubr.f32.mxu0 0.0
  %967 = vmatmul.mubr.f32.gmra.mrb[0].mxu0 %v889
  %v968 = vpop.f32.mrb[0].mxu0
  %v969 = vadd.f32 0.0, %v968
  %v970 = vpop.f32.mrb[0].mxu0
  %971 = vmatprep.mubr.f32.mxu0 0.0
  %972 = vmatmul.mubr.f32.gmra.mrb[0].mxu0 %v892
  %v973 = vpop.f32.mrb[0].mxu0
  %v974 = vadd.f32 0.0, %v973
  %v975 = vpop.f32.mrb[0].mxu0
  %976 = vmatprep.mubr.f32.mxu0 0.0
  %977 = vmatmul.mubr.f32.gmra.mrb[0].mxu0 %v895
  %v978 = vpop.f32.mrb[0].mxu0
  %v979 = vadd.f32 0.0, %v978
  %v980 = vpop.f32.mrb[0].mxu0
  %981 = vdwg.mxu0
  %v982 = vmax.f32 %v964, 0.0
  %v983 = vmax.f32 %v969, 0.0
  %v984 = vmax.f32 %v974, 0.0
  %v985 = vmax.f32 %v979, 0.0
  %v986 = vsel %vm450, %v982, 0.0
  %987 = vadd.xlane.f32.xlu0 %v986
  %v988 = vpop.xlane.xlu0 %987
  %v989 = vsel %vm450, %v983, 0.0
  %990 = vadd.xlane.f32.xlu0 %v989
  %v991 = vpop.xlane.xlu0 %990
  %v992 = vsel %vm450, %v984, 0.0
  %993 = vadd.xlane.f32.xlu0 %v992
  %v994 = vpop.xlane.xlu0 %993
  %v995 = vsel %vm450, %v985, 0.0
  %996 = vadd.xlane.f32.xlu0 %v995
  %v997 = vpop.xlane.xlu0 %996
  %v998 = vmul.f32 %v982, %v982
  %v999 = vmul.f32 %v983, %v983
  %v1000 = vmul.f32 %v984, %v984
  %v1001 = vmul.f32 %v985, %v985
  %v1002 = vsel %vm450, %v998, 0.0
  %1003 = vadd.xlane.f32.xlu0 %v1002
  %v1004 = vpop.xlane.xlu0 %1003
  %v1005 = vsel %vm450, %v999, 0.0
  %1006 = vadd.xlane.f32.xlu0 %v1005
  %v1007 = vpop.xlane.xlu0 %1006
  %v1008 = vsel %vm450, %v1000, 0.0
  %1009 = vadd.xlane.f32.xlu0 %v1008
  %v1010 = vpop.xlane.xlu0 %1009
  %v1011 = vsel %vm450, %v1001, 0.0
  %1012 = vadd.xlane.f32.xlu0 %v1011
  %v1013 = vpop.xlane.xlu0 %1012
  %v1014 = vmul.f32 %v988, %v479
  %v1015 = vmul.f32 %v991, %v479
  %v1016 = vmul.f32 %v994, %v479
  %v1017 = vmul.f32 %v997, %v479
  %v1018 = vmul.f32 %v1004, %v479
  %v1019 = vmul.f32 %v1007, %v479
  %v1020 = vmul.f32 %v1010, %v479
  %v1021 = vmul.f32 %v1013, %v479
  %v1022 = vmul.f32 %v1014, %v1014
  %v1023 = vmul.f32 %v1015, %v1015
  %v1024 = vmul.f32 %v1016, %v1016
  %v1025 = vmul.f32 %v1017, %v1017
  %v1026 = vsub.f32 %v1018, %v1022
  %v1027 = vsub.f32 %v1019, %v1023
  %v1028 = vsub.f32 %v1020, %v1024
  %v1029 = vsub.f32 %v1021, %v1025
  %v1030 = vmax.f32 %v1026, 0.0
  %v1031 = vmax.f32 %v1027, 0.0
  %v1032 = vmax.f32 %v1028, 0.0
  %v1033 = vmax.f32 %v1029, 0.0
  %v1034 = vsub.f32 %v982, %v1014
  %v1035 = vsub.f32 %v983, %v1015
  %v1036 = vsub.f32 %v984, %v1016
  %v1037 = vsub.f32 %v985, %v1017
  %v1038 = vadd.f32 %v1030, 1e-05
  %v1039 = vadd.f32 %v1031, 1e-05
  %v1040 = vadd.f32 %v1032, 1e-05
  %v1041 = vadd.f32 %v1033, 1e-05
  %v1042 = vrsqrt.pop %v1038
  %v1043 = vrsqrt.pop %v1039
  %v1044 = vrsqrt.pop %v1040
  %v1045 = vrsqrt.pop %v1041
  %v1046 = vmul.f32 %v1034, %v1042
  %v1047 = vmul.f32 %v1035, %v1043
  %v1048 = vmul.f32 %v1036, %v1044
  %v1049 = vmul.f32 %v1037, %v1045
  %1051 = vset.pattern.permute.xlu0 0
  %1052 = vperm.xlu0 %1051, %v844
  %v1053 = vpop.permute.xlu0 %1052
  %1056 = vset.pattern.permute.xlu0 0
  %1057 = vperm.xlu0 %1056, %v845
  %v1058 = vpop.permute.xlu0 %1057
  %1061 = vset.pattern.permute.xlu0 0
  %1062 = vperm.xlu0 %1061, %v846
  %v1063 = vpop.permute.xlu0 %1062
  %1066 = vset.pattern.permute.xlu0 0
  %1067 = vperm.xlu0 %1066, %v847
  %v1068 = vpop.permute.xlu0 %1067
  %v1070 = vmul.f32 %v1046, %v1053
  %v1071 = vmul.f32 %v1047, %v1058
  %v1072 = vmul.f32 %v1048, %v1063
  %v1073 = vmul.f32 %v1049, %v1068
  %1075 = vset.pattern.permute.xlu0 0
  %1076 = vperm.xlu0 %1075, %v848
  %v1077 = vpop.permute.xlu0 %1076
  %1080 = vset.pattern.permute.xlu0 0
  %1081 = vperm.xlu0 %1080, %v849
  %v1082 = vpop.permute.xlu0 %1081
  %1085 = vset.pattern.permute.xlu0 0
  %1086 = vperm.xlu0 %1085, %v850
  %v1087 = vpop.permute.xlu0 %1086
  %1090 = vset.pattern.permute.xlu0 0
  %1091 = vperm.xlu0 %1090, %v851
  %v1092 = vpop.permute.xlu0 %1091
  %v1094 = vadd.f32 %v1070, %v1077
  %v1095 = vadd.f32 %v1071, %v1082
  %v1096 = vadd.f32 %v1072, %v1087
  %v1097 = vadd.f32 %v1073, %v1092
  %1102 = vrot.lane.b32.xlu0 %v1094, 127
  %v1103 = vpop.permute.xlu0 %1102
  %1104 = vrot.lane.b32.xlu0 %v1095, 127
  %v1105 = vpop.permute.xlu0 %1104
  %1106 = vrot.lane.b32.xlu0 %v1096, 127
  %v1107 = vpop.permute.xlu0 %1106
  %1108 = vrot.lane.b32.xlu0 %v1097, 127
  %v1109 = vpop.permute.xlu0 %1108
  %v1114 = vsel %vm90, %v1094, %v1103
  %v1115 = vsel %vm90, %v1095, %v1105
  %v1116 = vsel %vm90, %v1096, %v1107
  %v1117 = vsel %vm90, %v1097, %v1109
  %1134 = vrot.lane.b32.xlu0 %v304, 1
  %v1135 = vpop.permute.xlu0 %1134
  %1136 = vrot.lane.b32.xlu0 %v305, 1
  %v1137 = vpop.permute.xlu0 %1136
  %1138 = vrot.lane.b32.xlu0 %v306, 1
  %v1139 = vpop.permute.xlu0 %1138
  %1140 = vrot.lane.b32.xlu0 %v307, 1
  %v1141 = vpop.permute.xlu0 %1140
  %1142 = vrot.lane.b32.xlu0 %v580, 1
  %v1143 = vpop.permute.xlu0 %1142
  %1144 = vrot.lane.b32.xlu0 %v581, 1
  %v1145 = vpop.permute.xlu0 %1144
  %1146 = vrot.lane.b32.xlu0 %v582, 1
  %v1147 = vpop.permute.xlu0 %1146
  %1148 = vrot.lane.b32.xlu0 %v583, 1
  %v1149 = vpop.permute.xlu0 %1148
  %1150 = vrot.lane.b32.xlu0 %v836, 1
  %v1151 = vpop.permute.xlu0 %1150
  %1152 = vrot.lane.b32.xlu0 %v837, 1
  %v1153 = vpop.permute.xlu0 %1152
  %1154 = vrot.lane.b32.xlu0 %v838, 1
  %v1155 = vpop.permute.xlu0 %1154
  %1156 = vrot.lane.b32.xlu0 %v839, 1
  %v1157 = vpop.permute.xlu0 %1156
  %1158 = vrot.lane.b32.xlu0 %v1114, 1
  %v1159 = vpop.permute.xlu0 %1158
  %1160 = vrot.lane.b32.xlu0 %v1115, 1
  %v1161 = vpop.permute.xlu0 %1160
  %1162 = vrot.lane.b32.xlu0 %v1116, 1
  %v1163 = vpop.permute.xlu0 %1162
  %1164 = vrot.lane.b32.xlu0 %v1117, 1
  %v1165 = vpop.permute.xlu0 %1164
  %vm1182 = vcmask 7168
  %v1183 = vsel %vm1182, -inf, %v1135
  %v1184 = vsel %vm1182, -inf, %v1137
  %v1185 = vsel %vm1182, -inf, %v1139
  %v1186 = vsel %vm1182, -inf, %v1141
  %v1187 = vsel %vm1182, -inf, %v1143
  %v1188 = vsel %vm1182, -inf, %v1145
  %v1189 = vsel %vm1182, -inf, %v1147
  %v1190 = vsel %vm1182, -inf, %v1149
  %v1191 = vsel %vm1182, -inf, %v1151
  %v1192 = vsel %vm1182, -inf, %v1153
  %v1193 = vsel %vm1182, -inf, %v1155
  %v1194 = vsel %vm1182, -inf, %v1157
  %v1195 = vsel %vm1182, -inf, %v1159
  %v1196 = vsel %vm1182, -inf, %v1161
  %v1197 = vsel %vm1182, -inf, %v1163
  %v1198 = vsel %vm1182, -inf, %v1165
  %v1199 = vmax.f32 %v304, %v1183
  %v1200 = vmax.f32 %v305, %v1184
  %v1201 = vmax.f32 %v306, %v1185
  %v1202 = vmax.f32 %v307, %v1186
  %v1203 = vmax.f32 %v580, %v1187
  %v1204 = vmax.f32 %v581, %v1188
  %v1205 = vmax.f32 %v582, %v1189
  %v1206 = vmax.f32 %v583, %v1190
  %v1207 = vmax.f32 %v836, %v1191
  %v1208 = vmax.f32 %v837, %v1192
  %v1209 = vmax.f32 %v838, %v1193
  %v1210 = vmax.f32 %v839, %v1194
  %v1211 = vmax.f32 %v1114, %v1195
  %v1212 = vmax.f32 %v1115, %v1196
  %v1213 = vmax.f32 %v1116, %v1197
  %v1214 = vmax.f32 %v1117, %v1198
  %1231 = vrot.lane.b32.xlu0 %v1199, 1
  %v1232 = vpop.permute.xlu0 %1231
  %1233 = vrot.lane.b32.xlu0 %v1200, 1
  %v1234 = vpop.permute.xlu0 %1233
  %1235 = vrot.lane.b32.xlu0 %v1201, 1
  %v1236 = vpop.permute.xlu0 %1235
  %1237 = vrot.lane.b32.xlu0 %v1202, 1
  %v1238 = vpop.permute.xlu0 %1237
  %1239 = vrot.lane.b32.xlu0 %v1203, 1
  %v1240 = vpop.permute.xlu0 %1239
  %1241 = vrot.lane.b32.xlu0 %v1204, 1
  %v1242 = vpop.permute.xlu0 %1241
  %1243 = vrot.lane.b32.xlu0 %v1205, 1
  %v1244 = vpop.permute.xlu0 %1243
  %1245 = vrot.lane.b32.xlu0 %v1206, 1
  %v1246 = vpop.permute.xlu0 %1245
  %1247 = vrot.lane.b32.xlu0 %v1207, 1
  %v1248 = vpop.permute.xlu0 %1247
  %1249 = vrot.lane.b32.xlu0 %v1208, 1
  %v1250 = vpop.permute.xlu0 %1249
  %1251 = vrot.lane.b32.xlu0 %v1209, 1
  %v1252 = vpop.permute.xlu0 %1251
  %1253 = vrot.lane.b32.xlu0 %v1210, 1
  %v1254 = vpop.permute.xlu0 %1253
  %1255 = vrot.lane.b32.xlu0 %v1211, 1
  %v1256 = vpop.permute.xlu0 %1255
  %1257 = vrot.lane.b32.xlu0 %v1212, 1
  %v1258 = vpop.permute.xlu0 %1257
  %1259 = vrot.lane.b32.xlu0 %v1213, 1
  %v1260 = vpop.permute.xlu0 %1259
  %1261 = vrot.lane.b32.xlu0 %v1214, 1
  %v1262 = vpop.permute.xlu0 %1261
  %v1279 = vsel %vm1182, 0.0, %v1232
  %v1280 = vsel %vm1182, 0.0, %v1234
  %v1281 = vsel %vm1182, 0.0, %v1236
  %v1282 = vsel %vm1182, 0.0, %v1238
  %v1283 = vsel %vm1182, 0.0, %v1240
  %v1284 = vsel %vm1182, 0.0, %v1242
  %v1285 = vsel %vm1182, 0.0, %v1244
  %v1286 = vsel %vm1182, 0.0, %v1246
  %v1287 = vsel %vm1182, 0.0, %v1248
  %v1288 = vsel %vm1182, 0.0, %v1250
  %v1289 = vsel %vm1182, 0.0, %v1252
  %v1290 = vsel %vm1182, 0.0, %v1254
  %v1291 = vsel %vm1182, 0.0, %v1256
  %v1292 = vsel %vm1182, 0.0, %v1258
  %v1293 = vsel %vm1182, 0.0, %v1260
  %v1294 = vsel %vm1182, 0.0, %v1262
  %v1295 = vsel %vm344, %v1279, 0.0
  %v1296 = vsel %vm344, %v1280, 0.0
  %v1297 = vsel %vm344, %v1281, 0.0
  %v1298 = vsel %vm344, %v1282, 0.0
  %v1299 = vsel %vm344, %v1283, 0.0
  %v1300 = vsel %vm344, %v1284, 0.0
  %v1301 = vsel %vm344, %v1285, 0.0
  %v1302 = vsel %vm344, %v1286, 0.0
  %v1303 = vsel %vm344, %v1287, 0.0
  %v1304 = vsel %vm344, %v1288, 0.0
  %v1305 = vsel %vm344, %v1289, 0.0
  %v1306 = vsel %vm344, %v1290, 0.0
  %v1307 = vsel %vm344, %v1291, 0.0
  %v1308 = vsel %vm344, %v1292, 0.0
  %v1309 = vsel %vm344, %v1293, 0.0
  %v1310 = vsel %vm344, %v1294, 0.0
  %1327 = vrot.lane.b32.xlu0 %v1295, 127
  %v1328 = vpop.permute.xlu0 %1327
  %1329 = vrot.lane.b32.xlu0 %v1296, 127
  %v1330 = vpop.permute.xlu0 %1329
  %1331 = vrot.lane.b32.xlu0 %v1297, 127
  %v1332 = vpop.permute.xlu0 %1331
  %1333 = vrot.lane.b32.xlu0 %v1298, 127
  %v1334 = vpop.permute.xlu0 %1333
  %1335 = vrot.lane.b32.xlu0 %v1299, 127
  %v1336 = vpop.permute.xlu0 %1335
  %1337 = vrot.lane.b32.xlu0 %v1300, 127
  %v1338 = vpop.permute.xlu0 %1337
  %1339 = vrot.lane.b32.xlu0 %v1301, 127
  %v1340 = vpop.permute.xlu0 %1339
  %1341 = vrot.lane.b32.xlu0 %v1302, 127
  %v1342 = vpop.permute.xlu0 %1341
  %1343 = vrot.lane.b32.xlu0 %v1303, 127
  %v1344 = vpop.permute.xlu0 %1343
  %1345 = vrot.lane.b32.xlu0 %v1304, 127
  %v1346 = vpop.permute.xlu0 %1345
  %1347 = vrot.lane.b32.xlu0 %v1305, 127
  %v1348 = vpop.permute.xlu0 %1347
  %1349 = vrot.lane.b32.xlu0 %v1306, 127
  %v1350 = vpop.permute.xlu0 %1349
  %1351 = vrot.lane.b32.xlu0 %v1307, 127
  %v1352 = vpop.permute.xlu0 %1351
  %1353 = vrot.lane.b32.xlu0 %v1308, 127
  %v1354 = vpop.permute.xlu0 %1353
  %1355 = vrot.lane.b32.xlu0 %v1309, 127
  %v1356 = vpop.permute.xlu0 %1355
  %1357 = vrot.lane.b32.xlu0 %v1310, 127
  %v1358 = vpop.permute.xlu0 %1357
  %1375 = vrot.lane.b32.xlu0 %v1295, 126
  %v1376 = vpop.permute.xlu0 %1375
  %1377 = vrot.lane.b32.xlu0 %v1296, 126
  %v1378 = vpop.permute.xlu0 %1377
  %1379 = vrot.lane.b32.xlu0 %v1297, 126
  %v1380 = vpop.permute.xlu0 %1379
  %1381 = vrot.lane.b32.xlu0 %v1298, 126
  %v1382 = vpop.permute.xlu0 %1381
  %1383 = vrot.lane.b32.xlu0 %v1299, 126
  %v1384 = vpop.permute.xlu0 %1383
  %1385 = vrot.lane.b32.xlu0 %v1300, 126
  %v1386 = vpop.permute.xlu0 %1385
  %1387 = vrot.lane.b32.xlu0 %v1301, 126
  %v1388 = vpop.permute.xlu0 %1387
  %1389 = vrot.lane.b32.xlu0 %v1302, 126
  %v1390 = vpop.permute.xlu0 %1389
  %1391 = vrot.lane.b32.xlu0 %v1303, 126
  %v1392 = vpop.permute.xlu0 %1391
  %1393 = vrot.lane.b32.xlu0 %v1304, 126
  %v1394 = vpop.permute.xlu0 %1393
  %1395 = vrot.lane.b32.xlu0 %v1305, 126
  %v1396 = vpop.permute.xlu0 %1395
  %1397 = vrot.lane.b32.xlu0 %v1306, 126
  %v1398 = vpop.permute.xlu0 %1397
  %1399 = vrot.lane.b32.xlu0 %v1307, 126
  %v1400 = vpop.permute.xlu0 %1399
  %1401 = vrot.lane.b32.xlu0 %v1308, 126
  %v1402 = vpop.permute.xlu0 %1401
  %1403 = vrot.lane.b32.xlu0 %v1309, 126
  %v1404 = vpop.permute.xlu0 %1403
  %1405 = vrot.lane.b32.xlu0 %v1310, 126
  %v1406 = vpop.permute.xlu0 %1405
  %1423 = vrot.lane.b32.xlu0 %v304, 113
  %v1424 = vpop.permute.xlu0 %1423
  %1425 = vrot.lane.b32.xlu0 %v305, 113
  %v1426 = vpop.permute.xlu0 %1425
  %1427 = vrot.lane.b32.xlu0 %v306, 113
  %v1428 = vpop.permute.xlu0 %1427
  %1429 = vrot.lane.b32.xlu0 %v307, 113
  %v1430 = vpop.permute.xlu0 %1429
  %1431 = vrot.lane.b32.xlu0 %v580, 113
  %v1432 = vpop.permute.xlu0 %1431
  %1433 = vrot.lane.b32.xlu0 %v581, 113
  %v1434 = vpop.permute.xlu0 %1433
  %1435 = vrot.lane.b32.xlu0 %v582, 113
  %v1436 = vpop.permute.xlu0 %1435
  %1437 = vrot.lane.b32.xlu0 %v583, 113
  %v1438 = vpop.permute.xlu0 %1437
  %1439 = vrot.lane.b32.xlu0 %v836, 113
  %v1440 = vpop.permute.xlu0 %1439
  %1441 = vrot.lane.b32.xlu0 %v837, 113
  %v1442 = vpop.permute.xlu0 %1441
  %1443 = vrot.lane.b32.xlu0 %v838, 113
  %v1444 = vpop.permute.xlu0 %1443
  %1445 = vrot.lane.b32.xlu0 %v839, 113
  %v1446 = vpop.permute.xlu0 %1445
  %1447 = vrot.lane.b32.xlu0 %v1114, 113
  %v1448 = vpop.permute.xlu0 %1447
  %1449 = vrot.lane.b32.xlu0 %v1115, 113
  %v1450 = vpop.permute.xlu0 %1449
  %1451 = vrot.lane.b32.xlu0 %v1116, 113
  %v1452 = vpop.permute.xlu0 %1451
  %1453 = vrot.lane.b32.xlu0 %v1117, 113
  %v1454 = vpop.permute.xlu0 %1453
  %v1471 = vsel %vm1182, -inf, %v1424
  %v1472 = vsel %vm1182, -inf, %v1426
  %v1473 = vsel %vm1182, -inf, %v1428
  %v1474 = vsel %vm1182, -inf, %v1430
  %v1475 = vsel %vm1182, -inf, %v1432
  %v1476 = vsel %vm1182, -inf, %v1434
  %v1477 = vsel %vm1182, -inf, %v1436
  %v1478 = vsel %vm1182, -inf, %v1438
  %v1479 = vsel %vm1182, -inf, %v1440
  %v1480 = vsel %vm1182, -inf, %v1442
  %v1481 = vsel %vm1182, -inf, %v1444
  %v1482 = vsel %vm1182, -inf, %v1446
  %v1483 = vsel %vm1182, -inf, %v1448
  %v1484 = vsel %vm1182, -inf, %v1450
  %v1485 = vsel %vm1182, -inf, %v1452
  %v1486 = vsel %vm1182, -inf, %v1454
  %1503 = vrot.lane.b32.xlu0 %v1471, 16
  %v1504 = vpop.permute.xlu0 %1503
  %1505 = vrot.lane.b32.xlu0 %v1472, 16
  %v1506 = vpop.permute.xlu0 %1505
  %1507 = vrot.lane.b32.xlu0 %v1473, 16
  %v1508 = vpop.permute.xlu0 %1507
  %1509 = vrot.lane.b32.xlu0 %v1474, 16
  %v1510 = vpop.permute.xlu0 %1509
  %1511 = vrot.lane.b32.xlu0 %v1475, 16
  %v1512 = vpop.permute.xlu0 %1511
  %1513 = vrot.lane.b32.xlu0 %v1476, 16
  %v1514 = vpop.permute.xlu0 %1513
  %1515 = vrot.lane.b32.xlu0 %v1477, 16
  %v1516 = vpop.permute.xlu0 %1515
  %1517 = vrot.lane.b32.xlu0 %v1478, 16
  %v1518 = vpop.permute.xlu0 %1517
  %1519 = vrot.lane.b32.xlu0 %v1479, 16
  %v1520 = vpop.permute.xlu0 %1519
  %1521 = vrot.lane.b32.xlu0 %v1480, 16
  %v1522 = vpop.permute.xlu0 %1521
  %1523 = vrot.lane.b32.xlu0 %v1481, 16
  %v1524 = vpop.permute.xlu0 %1523
  %1525 = vrot.lane.b32.xlu0 %v1482, 16
  %v1526 = vpop.permute.xlu0 %1525
  %1527 = vrot.lane.b32.xlu0 %v1483, 16
  %v1528 = vpop.permute.xlu0 %1527
  %1529 = vrot.lane.b32.xlu0 %v1484, 16
  %v1530 = vpop.permute.xlu0 %1529
  %1531 = vrot.lane.b32.xlu0 %v1485, 16
  %v1532 = vpop.permute.xlu0 %1531
  %1533 = vrot.lane.b32.xlu0 %v1486, 16
  %v1534 = vpop.permute.xlu0 %1533
  %v1551 = vmax.f32 %v304, %v1504
  %v1552 = vmax.f32 %v305, %v1506
  %v1553 = vmax.f32 %v306, %v1508
  %v1554 = vmax.f32 %v307, %v1510
  %v1555 = vmax.f32 %v580, %v1512
  %v1556 = vmax.f32 %v581, %v1514
  %v1557 = vmax.f32 %v582, %v1516
  %v1558 = vmax.f32 %v583, %v1518
  %v1559 = vmax.f32 %v836, %v1520
  %v1560 = vmax.f32 %v837, %v1522
  %v1561 = vmax.f32 %v838, %v1524
  %v1562 = vmax.f32 %v839, %v1526
  %v1563 = vmax.f32 %v1114, %v1528
  %v1564 = vmax.f32 %v1115, %v1530
  %v1565 = vmax.f32 %v1116, %v1532
  %v1566 = vmax.f32 %v1117, %v1534
  %1583 = vrot.lane.b32.xlu0 %v1551, 113
  %v1584 = vpop.permute.xlu0 %1583
  %1585 = vrot.lane.b32.xlu0 %v1552, 113
  %v1586 = vpop.permute.xlu0 %1585
  %1587 = vrot.lane.b32.xlu0 %v1553, 113
  %v1588 = vpop.permute.xlu0 %1587
  %1589 = vrot.lane.b32.xlu0 %v1554, 113
  %v1590 = vpop.permute.xlu0 %1589
  %1591 = vrot.lane.b32.xlu0 %v1555, 113
  %v1592 = vpop.permute.xlu0 %1591
  %1593 = vrot.lane.b32.xlu0 %v1556, 113
  %v1594 = vpop.permute.xlu0 %1593
  %1595 = vrot.lane.b32.xlu0 %v1557, 113
  %v1596 = vpop.permute.xlu0 %1595
  %1597 = vrot.lane.b32.xlu0 %v1558, 113
  %v1598 = vpop.permute.xlu0 %1597
  %1599 = vrot.lane.b32.xlu0 %v1559, 113
  %v1600 = vpop.permute.xlu0 %1599
  %1601 = vrot.lane.b32.xlu0 %v1560, 113
  %v1602 = vpop.permute.xlu0 %1601
  %1603 = vrot.lane.b32.xlu0 %v1561, 113
  %v1604 = vpop.permute.xlu0 %1603
  %1605 = vrot.lane.b32.xlu0 %v1562, 113
  %v1606 = vpop.permute.xlu0 %1605
  %1607 = vrot.lane.b32.xlu0 %v1563, 113
  %v1608 = vpop.permute.xlu0 %1607
  %1609 = vrot.lane.b32.xlu0 %v1564, 113
  %v1610 = vpop.permute.xlu0 %1609
  %1611 = vrot.lane.b32.xlu0 %v1565, 113
  %v1612 = vpop.permute.xlu0 %1611
  %1613 = vrot.lane.b32.xlu0 %v1566, 113
  %v1614 = vpop.permute.xlu0 %1613
  %v1631 = vsel %vm1182, 0.0, %v1584
  %v1632 = vsel %vm1182, 0.0, %v1586
  %v1633 = vsel %vm1182, 0.0, %v1588
  %v1634 = vsel %vm1182, 0.0, %v1590
  %v1635 = vsel %vm1182, 0.0, %v1592
  %v1636 = vsel %vm1182, 0.0, %v1594
  %v1637 = vsel %vm1182, 0.0, %v1596
  %v1638 = vsel %vm1182, 0.0, %v1598
  %v1639 = vsel %vm1182, 0.0, %v1600
  %v1640 = vsel %vm1182, 0.0, %v1602
  %v1641 = vsel %vm1182, 0.0, %v1604
  %v1642 = vsel %vm1182, 0.0, %v1606
  %v1643 = vsel %vm1182, 0.0, %v1608
  %v1644 = vsel %vm1182, 0.0, %v1610
  %v1645 = vsel %vm1182, 0.0, %v1612
  %v1646 = vsel %vm1182, 0.0, %v1614
  %v1647 = vsel %vm344, %v1631, 0.0
  %v1648 = vsel %vm344, %v1632, 0.0
  %v1649 = vsel %vm344, %v1633, 0.0
  %v1650 = vsel %vm344, %v1634, 0.0
  %v1651 = vsel %vm344, %v1635, 0.0
  %v1652 = vsel %vm344, %v1636, 0.0
  %v1653 = vsel %vm344, %v1637, 0.0
  %v1654 = vsel %vm344, %v1638, 0.0
  %v1655 = vsel %vm344, %v1639, 0.0
  %v1656 = vsel %vm344, %v1640, 0.0
  %v1657 = vsel %vm344, %v1641, 0.0
  %v1658 = vsel %vm344, %v1642, 0.0
  %v1659 = vsel %vm344, %v1643, 0.0
  %v1660 = vsel %vm344, %v1644, 0.0
  %v1661 = vsel %vm344, %v1645, 0.0
  %v1662 = vsel %vm344, %v1646, 0.0
  %1679 = vrot.lane.b32.xlu0 %v1647, 127
  %v1680 = vpop.permute.xlu0 %1679
  %1681 = vrot.lane.b32.xlu0 %v1648, 127
  %v1682 = vpop.permute.xlu0 %1681
  %1683 = vrot.lane.b32.xlu0 %v1649, 127
  %v1684 = vpop.permute.xlu0 %1683
  %1685 = vrot.lane.b32.xlu0 %v1650, 127
  %v1686 = vpop.permute.xlu0 %1685
  %1687 = vrot.lane.b32.xlu0 %v1651, 127
  %v1688 = vpop.permute.xlu0 %1687
  %1689 = vrot.lane.b32.xlu0 %v1652, 127
  %v1690 = vpop.permute.xlu0 %1689
  %1691 = vrot.lane.b32.xlu0 %v1653, 127
  %v1692 = vpop.permute.xlu0 %1691
  %1693 = vrot.lane.b32.xlu0 %v1654, 127
  %v1694 = vpop.permute.xlu0 %1693
  %1695 = vrot.lane.b32.xlu0 %v1655, 127
  %v1696 = vpop.permute.xlu0 %1695
  %1697 = vrot.lane.b32.xlu0 %v1656, 127
  %v1698 = vpop.permute.xlu0 %1697
  %1699 = vrot.lane.b32.xlu0 %v1657, 127
  %v1700 = vpop.permute.xlu0 %1699
  %1701 = vrot.lane.b32.xlu0 %v1658, 127
  %v1702 = vpop.permute.xlu0 %1701
  %1703 = vrot.lane.b32.xlu0 %v1659, 127
  %v1704 = vpop.permute.xlu0 %1703
  %1705 = vrot.lane.b32.xlu0 %v1660, 127
  %v1706 = vpop.permute.xlu0 %1705
  %1707 = vrot.lane.b32.xlu0 %v1661, 127
  %v1708 = vpop.permute.xlu0 %1707
  %1709 = vrot.lane.b32.xlu0 %v1662, 127
  %v1710 = vpop.permute.xlu0 %1709
  %1711 = vrot.lane.b32.xlu0 %v1647, 126
  %v1712 = vpop.permute.xlu0 %1711
  %1713 = vrot.lane.b32.xlu0 %v1648, 126
  %v1714 = vpop.permute.xlu0 %1713
  %1715 = vrot.lane.b32.xlu0 %v1649, 126
  %v1716 = vpop.permute.xlu0 %1715
  %1717 = vrot.lane.b32.xlu0 %v1650, 126
  %v1718 = vpop.permute.xlu0 %1717
  %1719 = vrot.lane.b32.xlu0 %v1651, 126
  %v1720 = vpop.permute.xlu0 %1719
  %1721 = vrot.lane.b32.xlu0 %v1652, 126
  %v1722 = vpop.permute.xlu0 %1721
  %1723 = vrot.lane.b32.xlu0 %v1653, 126
  %v1724 = vpop.permute.xlu0 %1723
  %1725 = vrot.lane.b32.xlu0 %v1654, 126
  %v1726 = vpop.permute.xlu0 %1725
  %1727 = vrot.lane.b32.xlu0 %v1655, 126
  %v1728 = vpop.permute.xlu0 %1727
  %1729 = vrot.lane.b32.xlu0 %v1656, 126
  %v1730 = vpop.permute.xlu0 %1729
  %1731 = vrot.lane.b32.xlu0 %v1657, 126
  %v1732 = vpop.permute.xlu0 %1731
  %1733 = vrot.lane.b32.xlu0 %v1658, 126
  %v1734 = vpop.permute.xlu0 %1733
  %1735 = vrot.lane.b32.xlu0 %v1659, 126
  %v1736 = vpop.permute.xlu0 %1735
  %1737 = vrot.lane.b32.xlu0 %v1660, 126
  %v1738 = vpop.permute.xlu0 %1737
  %1739 = vrot.lane.b32.xlu0 %v1661, 126
  %v1740 = vpop.permute.xlu0 %1739
  %1741 = vrot.lane.b32.xlu0 %v1662, 126
  %v1742 = vpop.permute.xlu0 %1741
  %1743 = vrot.lane.b32.xlu0 %v1647, 16
  %v1744 = vpop.permute.xlu0 %1743
  %1745 = vrot.lane.b32.xlu0 %v1648, 16
  %v1746 = vpop.permute.xlu0 %1745
  %1747 = vrot.lane.b32.xlu0 %v1649, 16
  %v1748 = vpop.permute.xlu0 %1747
  %1749 = vrot.lane.b32.xlu0 %v1650, 16
  %v1750 = vpop.permute.xlu0 %1749
  %1751 = vrot.lane.b32.xlu0 %v1651, 16
  %v1752 = vpop.permute.xlu0 %1751
  %1753 = vrot.lane.b32.xlu0 %v1652, 16
  %v1754 = vpop.permute.xlu0 %1753
  %1755 = vrot.lane.b32.xlu0 %v1653, 16
  %v1756 = vpop.permute.xlu0 %1755
  %1757 = vrot.lane.b32.xlu0 %v1654, 16
  %v1758 = vpop.permute.xlu0 %1757
  %1759 = vrot.lane.b32.xlu0 %v1655, 16
  %v1760 = vpop.permute.xlu0 %1759
  %1761 = vrot.lane.b32.xlu0 %v1656, 16
  %v1762 = vpop.permute.xlu0 %1761
  %1763 = vrot.lane.b32.xlu0 %v1657, 16
  %v1764 = vpop.permute.xlu0 %1763
  %1765 = vrot.lane.b32.xlu0 %v1658, 16
  %v1766 = vpop.permute.xlu0 %1765
  %1767 = vrot.lane.b32.xlu0 %v1659, 16
  %v1768 = vpop.permute.xlu0 %1767
  %1769 = vrot.lane.b32.xlu0 %v1660, 16
  %v1770 = vpop.permute.xlu0 %1769
  %1771 = vrot.lane.b32.xlu0 %v1661, 16
  %v1772 = vpop.permute.xlu0 %1771
  %1773 = vrot.lane.b32.xlu0 %v1662, 16
  %v1774 = vpop.permute.xlu0 %1773
  %1775 = vrot.lane.b32.xlu0 %v1680, 16
  %v1776 = vpop.permute.xlu0 %1775
  %1777 = vrot.lane.b32.xlu0 %v1682, 16
  %v1778 = vpop.permute.xlu0 %1777
  %1779 = vrot.lane.b32.xlu0 %v1684, 16
  %v1780 = vpop.permute.xlu0 %1779
  %1781 = vrot.lane.b32.xlu0 %v1686, 16
  %v1782 = vpop.permute.xlu0 %1781
  %1783 = vrot.lane.b32.xlu0 %v1688, 16
  %v1784 = vpop.permute.xlu0 %1783
  %1785 = vrot.lane.b32.xlu0 %v1690, 16
  %v1786 = vpop.permute.xlu0 %1785
  %1787 = vrot.lane.b32.xlu0 %v1692, 16
  %v1788 = vpop.permute.xlu0 %1787
  %1789 = vrot.lane.b32.xlu0 %v1694, 16
  %v1790 = vpop.permute.xlu0 %1789
  %1791 = vrot.lane.b32.xlu0 %v1696, 16
  %v1792 = vpop.permute.xlu0 %1791
  %1793 = vrot.lane.b32.xlu0 %v1698, 16
  %v1794 = vpop.permute.xlu0 %1793
  %1795 = vrot.lane.b32.xlu0 %v1700, 16
  %v1796 = vpop.permute.xlu0 %1795
  %1797 = vrot.lane.b32.xlu0 %v1702, 16
  %v1798 = vpop.permute.xlu0 %1797
  %1799 = vrot.lane.b32.xlu0 %v1704, 16
  %v1800 = vpop.permute.xlu0 %1799
  %1801 = vrot.lane.b32.xlu0 %v1706, 16
  %v1802 = vpop.permute.xlu0 %1801
  %1803 = vrot.lane.b32.xlu0 %v1708, 16
  %v1804 = vpop.permute.xlu0 %1803
  %1805 = vrot.lane.b32.xlu0 %v1710, 16
  %v1806 = vpop.permute.xlu0 %1805
  %1807 = vrot.lane.b32.xlu0 %v1712, 16
  %v1808 = vpop.permute.xlu0 %1807
  %1809 = vrot.lane.b32.xlu0 %v1714, 16
  %v1810 = vpop.permute.xlu0 %1809
  %1811 = vrot.lane.b32.xlu0 %v1716, 16
  %v1812 = vpop.permute.xlu0 %1811
  %1813 = vrot.lane.b32.xlu0 %v1718, 16
  %v1814 = vpop.permute.xlu0 %1813
  %1815 = vrot.lane.b32.xlu0 %v1720, 16
  %v1816 = vpop.permute.xlu0 %1815
  %1817 = vrot.lane.b32.xlu0 %v1722, 16
  %v1818 = vpop.permute.xlu0 %1817
  %1819 = vrot.lane.b32.xlu0 %v1724, 16
  %v1820 = vpop.permute.xlu0 %1819
  %1821 = vrot.lane.b32.xlu0 %v1726, 16
  %v1822 = vpop.permute.xlu0 %1821
  %1823 = vrot.lane.b32.xlu0 %v1728, 16
  %v1824 = vpop.permute.xlu0 %1823
  %1825 = vrot.lane.b32.xlu0 %v1730, 16
  %v1826 = vpop.permute.xlu0 %1825
  %1827 = vrot.lane.b32.xlu0 %v1732, 16
  %v1828 = vpop.permute.xlu0 %1827
  %1829 = vrot.lane.b32.xlu0 %v1734, 16
  %v1830 = vpop.permute.xlu0 %1829
  %1831 = vrot.lane.b32.xlu0 %v1736, 16
  %v1832 = vpop.permute.xlu0 %1831
  %1833 = vrot.lane.b32.xlu0 %v1738, 16
  %v1834 = vpop.permute.xlu0 %1833
  %1835 = vrot.lane.b32.xlu0 %v1740, 16
  %v1836 = vpop.permute.xlu0 %1835
  %1837 = vrot.lane.b32.xlu0 %v1742, 16
  %v1838 = vpop.permute.xlu0 %1837
  %v1887 = vsel %vm90, %v1295, %v1744
  %v1888 = vsel %vm90, %v1296, %v1746
  %v1889 = vsel %vm90, %v1297, %v1748
  %v1890 = vsel %vm90, %v1298, %v1750
  %v1891 = vsel %vm90, %v1299, %v1752
  %v1892 = vsel %vm90, %v1300, %v1754
  %v1893 = vsel %vm90, %v1301, %v1756
  %v1894 = vsel %vm90, %v1302, %v1758
  %v1895 = vsel %vm90, %v1303, %v1760
  %v1896 = vsel %vm90, %v1304, %v1762
  %v1897 = vsel %vm90, %v1305, %v1764
  %v1898 = vsel %vm90, %v1306, %v1766
  %v1899 = vsel %vm90, %v1307, %v1768
  %v1900 = vsel %vm90, %v1308, %v1770
  %v1901 = vsel %vm90, %v1309, %v1772
  %v1902 = vsel %vm90, %v1310, %v1774
  %v1903 = vsel %vm90, %v1328, %v1776
  %v1904 = vsel %vm90, %v1330, %v1778
  %v1905 = vsel %vm90, %v1332, %v1780
  %v1906 = vsel %vm90, %v1334, %v1782
  %v1907 = vsel %vm90, %v1336, %v1784
  %v1908 = vsel %vm90, %v1338, %v1786
  %v1909 = vsel %vm90, %v1340, %v1788
  %v1910 = vsel %vm90, %v1342, %v1790
  %v1911 = vsel %vm90, %v1344, %v1792
  %v1912 = vsel %vm90, %v1346, %v1794
  %v1913 = vsel %vm90, %v1348, %v1796
  %v1914 = vsel %vm90, %v1350, %v1798
  %v1915 = vsel %vm90, %v1352, %v1800
  %v1916 = vsel %vm90, %v1354, %v1802
  %v1917 = vsel %vm90, %v1356, %v1804
  %v1918 = vsel %vm90, %v1358, %v1806
  %v1919 = vsel %vm90, %v1376, %v1808
  %v1920 = vsel %vm90, %v1378, %v1810
  %v1921 = vsel %vm90, %v1380, %v1812
  %v1922 = vsel %vm90, %v1382, %v1814
  %v1923 = vsel %vm90, %v1384, %v1816
  %v1924 = vsel %vm90, %v1386, %v1818
  %v1925 = vsel %vm90, %v1388, %v1820
  %v1926 = vsel %vm90, %v1390, %v1822
  %v1927 = vsel %vm90, %v1392, %v1824
  %v1928 = vsel %vm90, %v1394, %v1826
  %v1929 = vsel %vm90, %v1396, %v1828
  %v1930 = vsel %vm90, %v1398, %v1830
  %v1931 = vsel %vm90, %v1400, %v1832
  %v1932 = vsel %vm90, %v1402, %v1834
  %v1933 = vsel %vm90, %v1404, %v1836
  %v1934 = vsel %vm90, %v1406, %v1838
  %v1935 = vld [vmem:[%s13] sm:$0xff]
  %v1936 = vld [vmem:[%s13 + $0x8] sm:$0xff]
  %v1937 = vld [vmem:[%s13 + $0x10] sm:$0xff]
  %v1938 = vld [vmem:[%s13 + $0x18] sm:$0xff]
  %v1939 = vld [vmem:[%s13 + $0x20] sm:$0xff]
  %v1940 = vld [vmem:[%s13 + $0x28] sm:$0xff]
  %v1941 = vld [vmem:[%s13 + $0x30] sm:$0xff]
  %v1942 = vld [vmem:[%s13 + $0x38] sm:$0xff]
  %v1943 = vld [vmem:[%s13 + $0x40] sm:$0xff]
  %v1944 = vld [vmem:[%s13 + $0x48] sm:$0xff]
  %v1945 = vld [vmem:[%s13 + $0x50] sm:$0xff]
  %v1946 = vld [vmem:[%s13 + $0x58] sm:$0xff]
  %v1947 = vld [vmem:[%s13 + $0x60] sm:$0xff]
  %v1948 = vld [vmem:[%s13 + $0x68] sm:$0xff]
  %v1949 = vld [vmem:[%s13 + $0x70] sm:$0xff]
  %v1950 = vld [vmem:[%s13 + $0x78] sm:$0xff]
  %v1951 = vld [vmem:[%s13 + $0x80] sm:$0xff]
  %v1952 = vld [vmem:[%s13 + $0x88] sm:$0xff]
  %v1953 = vld [vmem:[%s13 + $0x90] sm:$0xff]
  %v1954 = vld [vmem:[%s13 + $0x98] sm:$0xff]
  %v1955 = vld [vmem:[%s13 + $0xa0] sm:$0xff]
  %v1956 = vld [vmem:[%s13 + $0xa8] sm:$0xff]
  %v1957 = vld [vmem:[%s13 + $0xb0] sm:$0xff]
  %v1958 = vld [vmem:[%s13 + $0xb8] sm:$0xff]
  %1959 = vmatprep.subr.mxu0 0.0
  %1960 = vmatpush1.msra.mxu0 %v1887
  %1961 = vmatprep.subr.mxu0 0.0
  %1962 = vmatpush1.msra.mxu0 %v1888
  %1963 = vmatprep.subr.mxu0 0.0
  %1964 = vmatpush1.msra.mxu0 %v1889
  %1965 = vmatprep.subr.mxu0 0.0
  %1966 = vmatpush1.msra.mxu0 %v1890
  %1967 = vmatprep.subr.mxu0 0.0
  %1968 = vmatpush1.msra.mxu0 %v1891
  %1969 = vmatprep.subr.mxu0 0.0
  %1970 = vmatpush1.msra.mxu0 %v1892
  %1971 = vmatprep.subr.mxu0 0.0
  %1972 = vmatpush1.msra.mxu0 %v1893
  %1973 = vmatprep.subr.mxu0 0.0
  %1974 = vmatpush1.msra.mxu0 %v1894
  %1975 = vmatprep.subr.mxu0 0.0
  %1976 = vmatpush1.msra.mxu0 %v1895
  %1977 = vmatprep.subr.mxu0 0.0
  %1978 = vmatpush1.msra.mxu0 %v1896
  %1979 = vmatprep.subr.mxu0 0.0
  %1980 = vmatpush1.msra.mxu0 %v1897
  %1981 = vmatprep.subr.mxu0 0.0
  %1982 = vmatpush1.msra.mxu0 %v1898
  %1983 = vmatprep.subr.mxu0 0.0
  %1984 = vmatpush1.msra.mxu0 %v1899
  %1985 = vmatprep.subr.mxu0 0.0
  %1986 = vmatpush1.msra.mxu0 %v1900
  %1987 = vmatprep.subr.mxu0 0.0
  %1988 = vmatpush1.msra.mxu0 %v1901
  %1989 = vmatprep.subr.mxu0 0.0
  %1990 = vmatpush1.msra.mxu0 %v1902
  %1991 = vmatprep.subr.mxu0 0.0
  %1992 = vmatpush1.msra.mxu0 %v1903
  %1993 = vmatprep.subr.mxu0 0.0
  %1994 = vmatpush1.msra.mxu0 %v1904
  %1995 = vmatprep.subr.mxu0 0.0
  %1996 = vmatpush1.msra.mxu0 %v1905
  %1997 = vmatprep.subr.mxu0 0.0
  %1998 = vmatpush1.msra.mxu0 %v1906
  %1999 = vmatprep.subr.mxu0 0.0
  %2000 = vmatpush1.msra.mxu0 %v1907
  %2001 = vmatprep.subr.mxu0 0.0
  %2002 = vmatpush1.msra.mxu0 %v1908
  %2003 = vmatprep.subr.mxu0 0.0
  %2004 = vmatpush1.msra.mxu0 %v1909
  %2005 = vmatprep.subr.mxu0 0.0
  %2006 = vmatpush1.msra.mxu0 %v1910
  %2007 = vmatprep.subr.mxu0 0.0
  %2008 = vmatpush1.msra.mxu0 %v1911
  %2009 = vmatprep.subr.mxu0 0.0
  %2010 = vmatpush1.msra.mxu0 %v1912
  %2011 = vmatprep.subr.mxu0 0.0
  %2012 = vmatpush1.msra.mxu0 %v1913
  %2013 = vmatprep.subr.mxu0 0.0
  %2014 = vmatpush1.msra.mxu0 %v1914
  %2015 = vmatprep.subr.mxu0 0.0
  %2016 = vmatpush1.msra.mxu0 %v1915
  %2017 = vmatprep.subr.mxu0 0.0
  %2018 = vmatpush1.msra.mxu0 %v1916
  %2019 = vmatprep.subr.mxu0 0.0
  %2020 = vmatpush1.msra.mxu0 %v1917
  %2021 = vmatprep.subr.mxu0 0.0
  %2022 = vmatpush1.msra.mxu0 %v1918
  %2023 = vmatprep.mubr.f32.mxu0 %v1936
  %2024 = vmatmul.mubr.f32.gmra.mrb[0].mxu0 %v1935
  %v2025 = vpop.f32.mrb[0].mxu0
  %v2026 = vadd.f32 0.0, %v2025
  %v2027 = vpop.f32.mrb[0].mxu0
  %2028 = vmatprep.mubr.f32.mxu0 %v1939
  %2029 = vmatmul.mubr.f32.gmra.mrb[0].mxu0 %v1938
  %v2030 = vpop.f32.mrb[0].mxu0
  %v2031 = vadd.f32 0.0, %v2030
  %v2032 = vpop.f32.mrb[0].mxu0
  %2033 = vmatprep.mubr.f32.mxu0 %v1942
  %2034 = vmatmul.mubr.f32.gmra.mrb[0].mxu0 %v1941
  %v2035 = vpop.f32.mrb[0].mxu0
  %v2036 = vadd.f32 0.0, %v2035
  %v2037 = vpop.f32.mrb[0].mxu0
  %2038 = vmatprep.mubr.f32.mxu0 %v1945
  %2039 = vmatmul.mubr.f32.gmra.mrb[0].mxu0 %v1944
  %v2040 = vpop.f32.mrb[0].mxu0
  %v2041 = vadd.f32 0.0, %v2040
  %v2042 = vpop.f32.mrb[0].mxu0
  %2043 = vmatprep.mubr.f32.mxu0 %v1948
  %2044 = vmatmul.mubr.f32.gmra.mrb[0].mxu0 %v1947
  %v2045 = vpop.f32.mrb[0].mxu0
  %v2046 = vadd.f32 0.0, %v2045
  %v2047 = vpop.f32.mrb[0].mxu0
  %2048 = vmatprep.mubr.f32.mxu0 %v1951
  %2049 = vmatmul.mubr.f32.gmra.mrb[0].mxu0 %v1950
  %v2050 = vpop.f32.mrb[0].mxu0
  %v2051 = vadd.f32 0.0, %v2050
  %v2052 = vpop.f32.mrb[0].mxu0
  %2053 = vmatprep.mubr.f32.mxu0 %v1954
  %2054 = vmatmul.mubr.f32.gmra.mrb[0].mxu0 %v1953
  %v2055 = vpop.f32.mrb[0].mxu0
  %v2056 = vadd.f32 0.0, %v2055
  %v2057 = vpop.f32.mrb[0].mxu0
  %2058 = vmatprep.mubr.f32.mxu0 %v1957
  %2059 = vmatmul.mubr.f32.gmra.mrb[0].mxu0 %v1956
  %v2060 = vpop.f32.mrb[0].mxu0
  %v2061 = vadd.f32 0.0, %v2060
  %v2062 = vpop.f32.mrb[0].mxu0
  %2063 = vdwg.mxu0
  %2064 = vmatprep.subr.mxu0 0.0
  %2065 = vmatpush1.msra.mxu0 %v1919
  %2066 = vmatprep.subr.mxu0 0.0
  %2067 = vmatpush1.msra.mxu0 %v1920
  %2068 = vmatprep.subr.mxu0 0.0
  %2069 = vmatpush1.msra.mxu0 %v1921
  %2070 = vmatprep.subr.mxu0 0.0
  %2071 = vmatpush1.msra.mxu0 %v1922
  %2072 = vmatprep.subr.mxu0 0.0
  %2073 = vmatpush1.msra.mxu0 %v1923
  %2074 = vmatprep.subr.mxu0 0.0
  %2075 = vmatpush1.msra.mxu0 %v1924
  %2076 = vmatprep.subr.mxu0 0.0
  %2077 = vmatpush1.msra.mxu0 %v1925
  %2078 = vmatprep.subr.mxu0 0.0
  %2079 = vmatpush1.msra.mxu0 %v1926
  %2080 = vmatprep.subr.mxu0 0.0
  %2081 = vmatpush1.msra.mxu0 %v1927
  %2082 = vmatprep.subr.mxu0 0.0
  %2083 = vmatpush1.msra.mxu0 %v1928
  %2084 = vmatprep.subr.mxu0 0.0
  %2085 = vmatpush1.msra.mxu0 %v1929
  %2086 = vmatprep.subr.mxu0 0.0
  %2087 = vmatpush1.msra.mxu0 %v1930
  %2088 = vmatprep.subr.mxu0 0.0
  %2089 = vmatpush1.msra.mxu0 %v1931
  %2090 = vmatprep.subr.mxu0 0.0
  %2091 = vmatpush1.msra.mxu0 %v1932
  %2092 = vmatprep.subr.mxu0 0.0
  %2093 = vmatpush1.msra.mxu0 %v1933
  %2094 = vmatprep.subr.mxu0 0.0
  %2095 = vmatpush1.msra.mxu0 %v1934
  %2096 = vmatprep.subr.mxu0 0.0
  %2097 = vmatpush1.msra.mxu0 0.0
  %2098 = vmatprep.subr.mxu0 0.0
  %2099 = vmatpush1.msra.mxu0 0.0
  %2100 = vmatprep.subr.mxu0 0.0
  %2101 = vmatpush1.msra.mxu0 0.0
  %2102 = vmatprep.subr.mxu0 0.0
  %2103 = vmatpush1.msra.mxu0 0.0
  %2104 = vmatprep.subr.mxu0 0.0
  %2105 = vmatpush1.msra.mxu0 0.0
  %2106 = vmatprep.subr.mxu0 0.0
  %2107 = vmatpush1.msra.mxu0 0.0
  %2108 = vmatprep.subr.mxu0 0.0
  %2109 = vmatpush1.msra.mxu0 0.0
  %2110 = vmatprep.subr.mxu0 0.0
  %2111 = vmatpush1.msra.mxu0 0.0
  %2112 = vmatprep.subr.mxu0 0.0
  %2113 = vmatpush1.msra.mxu0 0.0
  %2114 = vmatprep.subr.mxu0 0.0
  %2115 = vmatpush1.msra.mxu0 0.0
  %2116 = vmatprep.subr.mxu0 0.0
  %2117 = vmatpush1.msra.mxu0 0.0
  %2118 = vmatprep.subr.mxu0 0.0
  %2119 = vmatpush1.msra.mxu0 0.0
  %2120 = vmatprep.subr.mxu0 0.0
  %2121 = vmatpush1.msra.mxu0 0.0
  %2122 = vmatprep.subr.mxu0 0.0
  %2123 = vmatpush1.msra.mxu0 0.0
  %2124 = vmatprep.subr.mxu0 0.0
  %2125 = vmatpush1.msra.mxu0 0.0
  %2126 = vmatprep.subr.mxu0 0.0
  %2127 = vmatpush1.msra.mxu0 0.0
  %2128 = vmatprep.mubr.f32.mxu0 0.0
  %2129 = vmatmul.mubr.f32.gmra.mrb[0].mxu0 %v1937
  %v2130 = vpop.f32.mrb[0].mxu0
  %v2131 = vadd.f32 %v2026, %v2130
  %v2132 = vpop.f32.mrb[0].mxu0
  %2133 = vmatprep.mubr.f32.mxu0 0.0
  %2134 = vmatmul.mubr.f32.gmra.mrb[0].mxu0 %v1940
  %v2135 = vpop.f32.mrb[0].mxu0
  %v2136 = vadd.f32 %v2031, %v2135
  %v2137 = vpop.f32.mrb[0].mxu0
  %2138 = vmatprep.mubr.f32.mxu0 0.0
  %2139 = vmatmul.mubr.f32.gmra.mrb[0].mxu0 %v1943
  %v2140 = vpop.f32.mrb[0].mxu0
  %v2141 = vadd.f32 %v2036, %v2140
  %v2142 = vpop.f32.mrb[0].mxu0
  %2143 = vmatprep.mubr.f32.mxu0 0.0
  %2144 = vmatmul.mubr.f32.gmra.mrb[0].mxu0 %v1946
  %v2145 = vpop.f32.mrb[0].mxu0
  %v2146 = vadd.f32 %v2041, %v2145
  %v2147 = vpop.f32.mrb[0].mxu0
  %2148 = vmatprep.mubr.f32.mxu0 0.0
  %2149 = vmatmul.mubr.f32.gmra.mrb[0].mxu0 %v1949
  %v2150 = vpop.f32.mrb[0].mxu0
  %v2151 = vadd.f32 %v2046, %v2150
  %v2152 = vpop.f32.mrb[0].mxu0
  %2153 = vmatprep.mubr.f32.mxu0 0.0
  %2154 = vmatmul.mubr.f32.gmra.mrb[0].mxu0 %v1952
  %v2155 = vpop.f32.mrb[0].mxu0
  %v2156 = vadd.f32 %v2051, %v2155
  %v2157 = vpop.f32.mrb[0].mxu0
  %2158 = vmatprep.mubr.f32.mxu0 0.0
  %2159 = vmatmul.mubr.f32.gmra.mrb[0].mxu0 %v1955
  %v2160 = vpop.f32.mrb[0].mxu0
  %v2161 = vadd.f32 %v2056, %v2160
  %v2162 = vpop.f32.mrb[0].mxu0
  %2163 = vmatprep.mubr.f32.mxu0 0.0
  %2164 = vmatmul.mubr.f32.gmra.mrb[0].mxu0 %v1958
  %v2165 = vpop.f32.mrb[0].mxu0
  %v2166 = vadd.f32 %v2061, %v2165
  %v2167 = vpop.f32.mrb[0].mxu0
  %2168 = vdwg.mxu0
  %v2169 = vmax.f32 %v2131, 0.0
  %v2170 = vmax.f32 %v2136, 0.0
  %v2171 = vmax.f32 %v2141, 0.0
  %v2172 = vmax.f32 %v2146, 0.0
  %v2173 = vmax.f32 %v2151, 0.0
  %v2174 = vmax.f32 %v2156, 0.0
  %v2175 = vmax.f32 %v2161, 0.0
  %v2176 = vmax.f32 %v2166, 0.0
  %v2177 = vld [vmem:[%s14] sm:$0xff]
  %v2178 = vld [vmem:[%s14 + $0x8] sm:$0xff]
  %v2179 = vld [vmem:[%s14 + $0x10] sm:$0xff]
  %v2180 = vld [vmem:[%s14 + $0x18] sm:$0xff]
  %v2181 = vld [vmem:[%s14 + $0x20] sm:$0xff]
  %v2182 = vld [vmem:[%s14 + $0x28] sm:$0xff]
  %v2183 = vld [vmem:[%s14 + $0x30] sm:$0xff]
  %v2184 = vld [vmem:[%s14 + $0x38] sm:$0xff]
  %v2185 = vld [vmem:[%s15] sm:$0xff]
  %v2186 = vld [vmem:[%s15 + $0x8] sm:$0xff]
  %v2187 = vld [vmem:[%s15 + $0x10] sm:$0xff]
  %v2188 = vld [vmem:[%s15 + $0x18] sm:$0xff]
  %v2189 = vld [vmem:[%s15 + $0x20] sm:$0xff]
  %v2190 = vld [vmem:[%s15 + $0x28] sm:$0xff]
  %v2191 = vld [vmem:[%s15 + $0x30] sm:$0xff]
  %v2192 = vld [vmem:[%s15 + $0x38] sm:$0xff]
  %v2193 = vsel %vm194, %v2169, 0.0
  %2194 = vadd.xlane.f32.xlu0 %v2193
  %v2195 = vpop.xlane.xlu0 %2194
  %v2196 = vsel %vm194, %v2170, 0.0
  %2197 = vadd.xlane.f32.xlu0 %v2196
  %v2198 = vpop.xlane.xlu0 %2197
  %v2199 = vsel %vm194, %v2171, 0.0
  %2200 = vadd.xlane.f32.xlu0 %v2199
  %v2201 = vpop.xlane.xlu0 %2200
  %v2202 = vsel %vm194, %v2172, 0.0
  %2203 = vadd.xlane.f32.xlu0 %v2202
  %v2204 = vpop.xlane.xlu0 %2203
  %v2205 = vsel %vm194, %v2173, 0.0
  %2206 = vadd.xlane.f32.xlu0 %v2205
  %v2207 = vpop.xlane.xlu0 %2206
  %v2208 = vsel %vm194, %v2174, 0.0
  %2209 = vadd.xlane.f32.xlu0 %v2208
  %v2210 = vpop.xlane.xlu0 %2209
  %v2211 = vsel %vm194, %v2175, 0.0
  %2212 = vadd.xlane.f32.xlu0 %v2211
  %v2213 = vpop.xlane.xlu0 %2212
  %v2214 = vsel %vm194, %v2176, 0.0
  %2215 = vadd.xlane.f32.xlu0 %v2214
  %v2216 = vpop.xlane.xlu0 %2215
  %v2217 = vmul.f32 %v2169, %v2169
  %v2218 = vmul.f32 %v2170, %v2170
  %v2219 = vmul.f32 %v2171, %v2171
  %v2220 = vmul.f32 %v2172, %v2172
  %v2221 = vmul.f32 %v2173, %v2173
  %v2222 = vmul.f32 %v2174, %v2174
  %v2223 = vmul.f32 %v2175, %v2175
  %v2224 = vmul.f32 %v2176, %v2176
  %v2225 = vsel %vm194, %v2217, 0.0
  %2226 = vadd.xlane.f32.xlu0 %v2225
  %v2227 = vpop.xlane.xlu0 %2226
  %v2228 = vsel %vm194, %v2218, 0.0
  %2229 = vadd.xlane.f32.xlu0 %v2228
  %v2230 = vpop.xlane.xlu0 %2229
  %v2231 = vsel %vm194, %v2219, 0.0
  %2232 = vadd.xlane.f32.xlu0 %v2231
  %v2233 = vpop.xlane.xlu0 %2232
  %v2234 = vsel %vm194, %v2220, 0.0
  %2235 = vadd.xlane.f32.xlu0 %v2234
  %v2236 = vpop.xlane.xlu0 %2235
  %v2237 = vsel %vm194, %v2221, 0.0
  %2238 = vadd.xlane.f32.xlu0 %v2237
  %v2239 = vpop.xlane.xlu0 %2238
  %v2240 = vsel %vm194, %v2222, 0.0
  %2241 = vadd.xlane.f32.xlu0 %v2240
  %v2242 = vpop.xlane.xlu0 %2241
  %v2243 = vsel %vm194, %v2223, 0.0
  %2244 = vadd.xlane.f32.xlu0 %v2243
  %v2245 = vpop.xlane.xlu0 %2244
  %v2246 = vsel %vm194, %v2224, 0.0
  %2247 = vadd.xlane.f32.xlu0 %v2246
  %v2248 = vpop.xlane.xlu0 %2247
  %v2249 = vmul.f32 %v2195, %v223
  %v2250 = vmul.f32 %v2198, %v223
  %v2251 = vmul.f32 %v2201, %v223
  %v2252 = vmul.f32 %v2204, %v223
  %v2253 = vmul.f32 %v2207, %v223
  %v2254 = vmul.f32 %v2210, %v223
  %v2255 = vmul.f32 %v2213, %v223
  %v2256 = vmul.f32 %v2216, %v223
  %v2257 = vmul.f32 %v2227, %v223
  %v2258 = vmul.f32 %v2230, %v223
  %v2259 = vmul.f32 %v2233, %v223
  %v2260 = vmul.f32 %v2236, %v223
  %v2261 = vmul.f32 %v2239, %v223
  %v2262 = vmul.f32 %v2242, %v223
  %v2263 = vmul.f32 %v2245, %v223
  %v2264 = vmul.f32 %v2248, %v223
  %v2265 = vmul.f32 %v2249, %v2249
  %v2266 = vmul.f32 %v2250, %v2250
  %v2267 = vmul.f32 %v2251, %v2251
  %v2268 = vmul.f32 %v2252, %v2252
  %v2269 = vmul.f32 %v2253, %v2253
  %v2270 = vmul.f32 %v2254, %v2254
  %v2271 = vmul.f32 %v2255, %v2255
  %v2272 = vmul.f32 %v2256, %v2256
  %v2273 = vsub.f32 %v2257, %v2265
  %v2274 = vsub.f32 %v2258, %v2266
  %v2275 = vsub.f32 %v2259, %v2267
  %v2276 = vsub.f32 %v2260, %v2268
  %v2277 = vsub.f32 %v2261, %v2269
  %v2278 = vsub.f32 %v2262, %v2270
  %v2279 = vsub.f32 %v2263, %v2271
  %v2280 = vsub.f32 %v2264, %v2272
  %v2281 = vmax.f32 %v2273, 0.0
  %v2282 = vmax.f32 %v2274, 0.0
  %v2283 = vmax.f32 %v2275, 0.0
  %v2284 = vmax.f32 %v2276, 0.0
  %v2285 = vmax.f32 %v2277, 0.0
  %v2286 = vmax.f32 %v2278, 0.0
  %v2287 = vmax.f32 %v2279, 0.0
  %v2288 = vmax.f32 %v2280, 0.0
  %v2289 = vsub.f32 %v2169, %v2249
  %v2290 = vsub.f32 %v2170, %v2250
  %v2291 = vsub.f32 %v2171, %v2251
  %v2292 = vsub.f32 %v2172, %v2252
  %v2293 = vsub.f32 %v2173, %v2253
  %v2294 = vsub.f32 %v2174, %v2254
  %v2295 = vsub.f32 %v2175, %v2255
  %v2296 = vsub.f32 %v2176, %v2256
  %v2297 = vadd.f32 %v2281, 1e-05
  %v2298 = vadd.f32 %v2282, 1e-05
  %v2299 = vadd.f32 %v2283, 1e-05
  %v2300 = vadd.f32 %v2284, 1e-05
  %v2301 = vadd.f32 %v2285, 1e-05
  %v2302 = vadd.f32 %v2286, 1e-05
  %v2303 = vadd.f32 %v2287, 1e-05
  %v2304 = vadd.f32 %v2288, 1e-05
  %v2305 = vrsqrt.pop %v2297
  %v2306 = vrsqrt.pop %v2298
  %v2307 = vrsqrt.pop %v2299
  %v2308 = vrsqrt.pop %v2300
  %v2309 = vrsqrt.pop %v2301
  %v2310 = vrsqrt.pop %v2302
  %v2311 = vrsqrt.pop %v2303
  %v2312 = vrsqrt.pop %v2304
  %v2313 = vmul.f32 %v2289, %v2305
  %v2314 = vmul.f32 %v2290, %v2306
  %v2315 = vmul.f32 %v2291, %v2307
  %v2316 = vmul.f32 %v2292, %v2308
  %v2317 = vmul.f32 %v2293, %v2309
  %v2318 = vmul.f32 %v2294, %v2310
  %v2319 = vmul.f32 %v2295, %v2311
  %v2320 = vmul.f32 %v2296, %v2312
  %2322 = vset.pattern.permute.xlu0 0
  %2323 = vperm.xlu0 %2322, %v2177
  %v2324 = vpop.permute.xlu0 %2323
  %2327 = vset.pattern.permute.xlu0 0
  %2328 = vperm.xlu0 %2327, %v2178
  %v2329 = vpop.permute.xlu0 %2328
  %2332 = vset.pattern.permute.xlu0 0
  %2333 = vperm.xlu0 %2332, %v2179
  %v2334 = vpop.permute.xlu0 %2333
  %2337 = vset.pattern.permute.xlu0 0
  %2338 = vperm.xlu0 %2337, %v2180
  %v2339 = vpop.permute.xlu0 %2338
  %2342 = vset.pattern.permute.xlu0 0
  %2343 = vperm.xlu0 %2342, %v2181
  %v2344 = vpop.permute.xlu0 %2343
  %2347 = vset.pattern.permute.xlu0 0
  %2348 = vperm.xlu0 %2347, %v2182
  %v2349 = vpop.permute.xlu0 %2348
  %2352 = vset.pattern.permute.xlu0 0
  %2353 = vperm.xlu0 %2352, %v2183
  %v2354 = vpop.permute.xlu0 %2353
  %2357 = vset.pattern.permute.xlu0 0
  %2358 = vperm.xlu0 %2357, %v2184
  %v2359 = vpop.permute.xlu0 %2358
  %v2361 = vmul.f32 %v2313, %v2324
  %v2362 = vmul.f32 %v2314, %v2329
  %v2363 = vmul.f32 %v2315, %v2334
  %v2364 = vmul.f32 %v2316, %v2339
  %v2365 = vmul.f32 %v2317, %v2344
  %v2366 = vmul.f32 %v2318, %v2349
  %v2367 = vmul.f32 %v2319, %v2354
  %v2368 = vmul.f32 %v2320, %v2359
  %2370 = vset.pattern.permute.xlu0 0
  %2371 = vperm.xlu0 %2370, %v2185
  %v2372 = vpop.permute.xlu0 %2371
  %2375 = vset.pattern.permute.xlu0 0
  %2376 = vperm.xlu0 %2375, %v2186
  %v2377 = vpop.permute.xlu0 %2376
  %2380 = vset.pattern.permute.xlu0 0
  %2381 = vperm.xlu0 %2380, %v2187
  %v2382 = vpop.permute.xlu0 %2381
  %2385 = vset.pattern.permute.xlu0 0
  %2386 = vperm.xlu0 %2385, %v2188
  %v2387 = vpop.permute.xlu0 %2386
  %2390 = vset.pattern.permute.xlu0 0
  %2391 = vperm.xlu0 %2390, %v2189
  %v2392 = vpop.permute.xlu0 %2391
  %2395 = vset.pattern.permute.xlu0 0
  %2396 = vperm.xlu0 %2395, %v2190
  %v2397 = vpop.permute.xlu0 %2396
  %2400 = vset.pattern.permute.xlu0 0
  %2401 = vperm.xlu0 %2400, %v2191
  %v2402 = vpop.permute.xlu0 %2401
  %2405 = vset.pattern.permute.xlu0 0
  %2406 = vperm.xlu0 %2405, %v2192
  %v2407 = vpop.permute.xlu0 %2406
  %v2409 = vadd.f32 %v2361, %v2372
  %v2410 = vadd.f32 %v2362, %v2377
  %v2411 = vadd.f32 %v2363, %v2382
  %v2412 = vadd.f32 %v2364, %v2387
  %v2413 = vadd.f32 %v2365, %v2392
  %v2414 = vadd.f32 %v2366, %v2397
  %v2415 = vadd.f32 %v2367, %v2402
  %v2416 = vadd.f32 %v2368, %v2407
  %2425 = vrot.lane.b32.xlu0 %v2409, 1
  %v2426 = vpop.permute.xlu0 %2425
  %2427 = vrot.lane.b32.xlu0 %v2410, 1
  %v2428 = vpop.permute.xlu0 %2427
  %2429 = vrot.lane.b32.xlu0 %v2411, 1
  %v2430 = vpop.permute.xlu0 %2429
  %2431 = vrot.lane.b32.xlu0 %v2412, 1
  %v2432 = vpop.permute.xlu0 %2431
  %2433 = vrot.lane.b32.xlu0 %v2413, 1
  %v2434 = vpop.permute.xlu0 %2433
  %2435 = vrot.lane.b32.xlu0 %v2414, 1
  %v2436 = vpop.permute.xlu0 %2435
  %2437 = vrot.lane.b32.xlu0 %v2415, 1
  %v2438 = vpop.permute.xlu0 %2437
  %2439 = vrot.lane.b32.xlu0 %v2416, 1
  %v2440 = vpop.permute.xlu0 %2439
  %v2449 = vsel %vm1182, 0.0, %v2426
  %v2450 = vsel %vm1182, 0.0, %v2428
  %v2451 = vsel %vm1182, 0.0, %v2430
  %v2452 = vsel %vm1182, 0.0, %v2432
  %v2453 = vsel %vm1182, 0.0, %v2434
  %v2454 = vsel %vm1182, 0.0, %v2436
  %v2455 = vsel %vm1182, 0.0, %v2438
  %v2456 = vsel %vm1182, 0.0, %v2440
  %v2457 = vsel %vm344, %v2449, 0.0
  %v2458 = vsel %vm344, %v2450, 0.0
  %v2459 = vsel %vm344, %v2451, 0.0
  %v2460 = vsel %vm344, %v2452, 0.0
  %v2461 = vsel %vm344, %v2453, 0.0
  %v2462 = vsel %vm344, %v2454, 0.0
  %v2463 = vsel %vm344, %v2455, 0.0
  %v2464 = vsel %vm344, %v2456, 0.0
  %2473 = vrot.lane.b32.xlu0 %v2457, 127
  %v2474 = vpop.permute.xlu0 %2473
  %2475 = vrot.lane.b32.xlu0 %v2458, 127
  %v2476 = vpop.permute.xlu0 %2475
  %2477 = vrot.lane.b32.xlu0 %v2459, 127
  %v2478 = vpop.permute.xlu0 %2477
  %2479 = vrot.lane.b32.xlu0 %v2460, 127
  %v2480 = vpop.permute.xlu0 %2479
  %2481 = vrot.lane.b32.xlu0 %v2461, 127
  %v2482 = vpop.permute.xlu0 %2481
  %2483 = vrot.lane.b32.xlu0 %v2462, 127
  %v2484 = vpop.permute.xlu0 %2483
  %2485 = vrot.lane.b32.xlu0 %v2463, 127
  %v2486 = vpop.permute.xlu0 %2485
  %2487 = vrot.lane.b32.xlu0 %v2464, 127
  %v2488 = vpop.permute.xlu0 %2487
  %2497 = vrot.lane.b32.xlu0 %v2457, 126
  %v2498 = vpop.permute.xlu0 %2497
  %2499 = vrot.lane.b32.xlu0 %v2458, 126
  %v2500 = vpop.permute.xlu0 %2499
  %2501 = vrot.lane.b32.xlu0 %v2459, 126
  %v2502 = vpop.permute.xlu0 %2501
  %2503 = vrot.lane.b32.xlu0 %v2460, 126
  %v2504 = vpop.permute.xlu0 %2503
  %2505 = vrot.lane.b32.xlu0 %v2461, 126
  %v2506 = vpop.permute.xlu0 %2505
  %2507 = vrot.lane.b32.xlu0 %v2462, 126
  %v2508 = vpop.permute.xlu0 %2507
  %2509 = vrot.lane.b32.xlu0 %v2463, 126
  %v2510 = vpop.permute.xlu0 %2509
  %2511 = vrot.lane.b32.xlu0 %v2464, 126
  %v2512 = vpop.permute.xlu0 %2511
  %2521 = vrot.lane.b32.xlu0 %v2409, 113
  %v2522 = vpop.permute.xlu0 %2521
  %2523 = vrot.lane.b32.xlu0 %v2410, 113
  %v2524 = vpop.permute.xlu0 %2523
  %2525 = vrot.lane.b32.xlu0 %v2411, 113
  %v2526 = vpop.permute.xlu0 %2525
  %2527 = vrot.lane.b32.xlu0 %v2412, 113
  %v2528 = vpop.permute.xlu0 %2527
  %2529 = vrot.lane.b32.xlu0 %v2413, 113
  %v2530 = vpop.permute.xlu0 %2529
  %2531 = vrot.lane.b32.xlu0 %v2414, 113
  %v2532 = vpop.permute.xlu0 %2531
  %2533 = vrot.lane.b32.xlu0 %v2415, 113
  %v2534 = vpop.permute.xlu0 %2533
  %2535 = vrot.lane.b32.xlu0 %v2416, 113
  %v2536 = vpop.permute.xlu0 %2535
  %v2545 = vsel %vm1182, 0.0, %v2522
  %v2546 = vsel %vm1182, 0.0, %v2524
  %v2547 = vsel %vm1182, 0.0, %v2526
  %v2548 = vsel %vm1182, 0.0, %v2528
  %v2549 = vsel %vm1182, 0.0, %v2530
  %v2550 = vsel %vm1182, 0.0, %v2532
  %v2551 = vsel %vm1182, 0.0, %v2534
  %v2552 = vsel %vm1182, 0.0, %v2536
  %v2553 = vsel %vm344, %v2545, 0.0
  %v2554 = vsel %vm344, %v2546, 0.0
  %v2555 = vsel %vm344, %v2547, 0.0
  %v2556 = vsel %vm344, %v2548, 0.0
  %v2557 = vsel %vm344, %v2549, 0.0
  %v2558 = vsel %vm344, %v2550, 0.0
  %v2559 = vsel %vm344, %v2551, 0.0
  %v2560 = vsel %vm344, %v2552, 0.0
  %2569 = vrot.lane.b32.xlu0 %v2553, 127
  %v2570 = vpop.permute.xlu0 %2569
  %2571 = vrot.lane.b32.xlu0 %v2554, 127
  %v2572 = vpop.permute.xlu0 %2571
  %2573 = vrot.lane.b32.xlu0 %v2555, 127
  %v2574 = vpop.permute.xlu0 %2573
  %2575 = vrot.lane.b32.xlu0 %v2556, 127
  %v2576 = vpop.permute.xlu0 %2575
  %2577 = vrot.lane.b32.xlu0 %v2557, 127
  %v2578 = vpop.permute.xlu0 %2577
  %2579 = vrot.lane.b32.xlu0 %v2558, 127
  %v2580 = vpop.permute.xlu0 %2579
  %2581 = vrot.lane.b32.xlu0 %v2559, 127
  %v2582 = vpop.permute.xlu0 %2581
  %2583 = vrot.lane.b32.xlu0 %v2560, 127
  %v2584 = vpop.permute.xlu0 %2583
  %2585 = vrot.lane.b32.xlu0 %v2553, 126
  %v2586 = vpop.permute.xlu0 %2585
  %2587 = vrot.lane.b32.xlu0 %v2554, 126
  %v2588 = vpop.permute.xlu0 %2587
  %2589 = vrot.lane.b32.xlu0 %v2555, 126
  %v2590 = vpop.permute.xlu0 %2589
  %2591 = vrot.lane.b32.xlu0 %v2556, 126
  %v2592 = vpop.permute.xlu0 %2591
  %2593 = vrot.lane.b32.xlu0 %v2557, 126
  %v2594 = vpop.permute.xlu0 %2593
  %2595 = vrot.lane.b32.xlu0 %v2558, 126
  %v2596 = vpop.permute.xlu0 %2595
  %2597 = vrot.lane.b32.xlu0 %v2559, 126
  %v2598 = vpop.permute.xlu0 %2597
  %2599 = vrot.lane.b32.xlu0 %v2560, 126
  %v2600 = vpop.permute.xlu0 %2599
  %2601 = vrot.lane.b32.xlu0 %v2553, 16
  %v2602 = vpop.permute.xlu0 %2601
  %2603 = vrot.lane.b32.xlu0 %v2554, 16
  %v2604 = vpop.permute.xlu0 %2603
  %2605 = vrot.lane.b32.xlu0 %v2555, 16
  %v2606 = vpop.permute.xlu0 %2605
  %2607 = vrot.lane.b32.xlu0 %v2556, 16
  %v2608 = vpop.permute.xlu0 %2607
  %2609 = vrot.lane.b32.xlu0 %v2557, 16
  %v2610 = vpop.permute.xlu0 %2609
  %2611 = vrot.lane.b32.xlu0 %v2558, 16
  %v2612 = vpop.permute.xlu0 %2611
  %2613 = vrot.lane.b32.xlu0 %v2559, 16
  %v2614 = vpop.permute.xlu0 %2613
  %2615 = vrot.lane.b32.xlu0 %v2560, 16
  %v2616 = vpop.permute.xlu0 %2615
  %2617 = vrot.lane.b32.xlu0 %v2570, 16
  %v2618 = vpop.permute.xlu0 %2617
  %2619 = vrot.lane.b32.xlu0 %v2572, 16
  %v2620 = vpop.permute.xlu0 %2619
  %2621 = vrot.lane.b32.xlu0 %v2574, 16
  %v2622 = vpop.permute.xlu0 %2621
  %2623 = vrot.lane.b32.xlu0 %v2576, 16
  %v2624 = vpop.permute.xlu0 %2623
  %2625 = vrot.lane.b32.xlu0 %v2578, 16
  %v2626 = vpop.permute.xlu0 %2625
  %2627 = vrot.lane.b32.xlu0 %v2580, 16
  %v2628 = vpop.permute.xlu0 %2627
  %2629 = vrot.lane.b32.xlu0 %v2582, 16
  %v2630 = vpop.permute.xlu0 %2629
  %2631 = vrot.lane.b32.xlu0 %v2584, 16
  %v2632 = vpop.permute.xlu0 %2631
  %2633 = vrot.lane.b32.xlu0 %v2586, 16
  %v2634 = vpop.permute.xlu0 %2633
  %2635 = vrot.lane.b32.xlu0 %v2588, 16
  %v2636 = vpop.permute.xlu0 %2635
  %2637 = vrot.lane.b32.xlu0 %v2590, 16
  %v2638 = vpop.permute.xlu0 %2637
  %2639 = vrot.lane.b32.xlu0 %v2592, 16
  %v2640 = vpop.permute.xlu0 %2639
  %2641 = vrot.lane.b32.xlu0 %v2594, 16
  %v2642 = vpop.permute.xlu0 %2641
  %2643 = vrot.lane.b32.xlu0 %v2596, 16
  %v2644 = vpop.permute.xlu0 %2643
  %2645 = vrot.lane.b32.xlu0 %v2598, 16
  %v2646 = vpop.permute.xlu0 %2645
  %2647 = vrot.lane.b32.xlu0 %v2600, 16
  %v2648 = vpop.permute.xlu0 %2647
  %v2673 = vsel %vm90, %v2457, %v2602
  %v2674 = vsel %vm90, %v2458, %v2604
  %v2675 = vsel %vm90, %v2459, %v2606
  %v2676 = vsel %vm90, %v2460, %v2608
  %v2677 = vsel %vm90, %v2461, %v2610
  %v2678 = vsel %vm90, %v2462, %v2612
  %v2679 = vsel %vm90, %v2463, %v2614
  %v2680 = vsel %vm90, %v2464, %v2616
  %v2681 = vsel %vm90, %v2474, %v2618
  %v2682 = vsel %vm90, %v2476, %v2620
  %v2683 = vsel %vm90, %v2478, %v2622
  %v2684 = vsel %vm90, %v2480, %v2624
  %v2685 = vsel %vm90, %v2482, %v2626
  %v2686 = vsel %vm90, %v2484, %v2628
  %v2687 = vsel %vm90, %v2486, %v2630
  %v2688 = vsel %vm90, %v2488, %v2632
  %v2689 = vsel %vm90, %v2498, %v2634
  %v2690 = vsel %vm90, %v2500, %v2636
  %v2691 = vsel %vm90, %v2502, %v2638
  %v2692 = vsel %vm90, %v2504, %v2640
  %v2693 = vsel %vm90, %v2506, %v2642
  %v2694 = vsel %vm90, %v2508, %v2644
  %v2695 = vsel %vm90, %v2510, %v2646
  %v2696 = vsel %vm90, %v2512, %v2648
  %v2697 = vld [vmem:[%s16] sm:$0xff]
  %v2698 = vld [vmem:[%s16 + $0x8] sm:$0xff]
  %v2699 = vld [vmem:[%s16 + $0x10] sm:$0xff]
  %v2700 = vld [vmem:[%s16 + $0x18] sm:$0xff]
  %v2702 = vsel %vm884, %v2698, 0
  %v2705 = vsel %vm884, %v2700, 0
  %2707 = vmatprep.subr.mxu0 0.0
  %2708 = vmatpush1.msra.mxu0 %v2673
  %2709 = vmatprep.subr.mxu0 0.0
  %2710 = vmatpush1.msra.mxu0 %v2674
  %2711 = vmatprep.subr.mxu0 0.0
  %2712 = vmatpush1.msra.mxu0 %v2675
  %2713 = vmatprep.subr.mxu0 0.0
  %2714 = vmatpush1.msra.mxu0 %v2676
  %2715 = vmatprep.subr.mxu0 0.0
  %2716 = vmatpush1.msra.mxu0 %v2677
  %2717 = vmatprep.subr.mxu0 0.0
  %2718 = vmatpush1.msra.mxu0 %v2678
  %2719 = vmatprep.subr.mxu0 0.0
  %2720 = vmatpush1.msra.mxu0 %v2679
  %2721 = vmatprep.subr.mxu0 0.0
  %2722 = vmatpush1.msra.mxu0 %v2680
  %2723 = vmatprep.subr.mxu0 0.0
  %2724 = vmatpush1.msra.mxu0 %v2681
  %2725 = vmatprep.subr.mxu0 0.0
  %2726 = vmatpush1.msra.mxu0 %v2682
  %2727 = vmatprep.subr.mxu0 0.0
  %2728 = vmatpush1.msra.mxu0 %v2683
  %2729 = vmatprep.subr.mxu0 0.0
  %2730 = vmatpush1.msra.mxu0 %v2684
  %2731 = vmatprep.subr.mxu0 0.0
  %2732 = vmatpush1.msra.mxu0 %v2685
  %2733 = vmatprep.subr.mxu0 0.0
  %2734 = vmatpush1.msra.mxu0 %v2686
  %2735 = vmatprep.subr.mxu0 0.0
  %2736 = vmatpush1.msra.mxu0 %v2687
  %2737 = vmatprep.subr.mxu0 0.0
  %2738 = vmatpush1.msra.mxu0 %v2688
  %2739 = vmatprep.subr.mxu0 0.0
  %2740 = vmatpush1.msra.mxu0 %v2689
  %2741 = vmatprep.subr.mxu0 0.0
  %2742 = vmatpush1.msra.mxu0 %v2690
  %2743 = vmatprep.subr.mxu0 0.0
  %2744 = vmatpush1.msra.mxu0 %v2691
  %2745 = vmatprep.subr.mxu0 0.0
  %2746 = vmatpush1.msra.mxu0 %v2692
  %2747 = vmatprep.subr.mxu0 0.0
  %2748 = vmatpush1.msra.mxu0 %v2693
  %2749 = vmatprep.subr.mxu0 0.0
  %2750 = vmatpush1.msra.mxu0 %v2694
  %2751 = vmatprep.subr.mxu0 0.0
  %2752 = vmatpush1.msra.mxu0 %v2695
  %2753 = vmatprep.subr.mxu0 0.0
  %2754 = vmatpush1.msra.mxu0 %v2696
  %2755 = vmatprep.subr.mxu0 0.0
  %2756 = vmatpush1.msra.mxu0 0.0
  %2757 = vmatprep.subr.mxu0 0.0
  %2758 = vmatpush1.msra.mxu0 0.0
  %2759 = vmatprep.subr.mxu0 0.0
  %2760 = vmatpush1.msra.mxu0 0.0
  %2761 = vmatprep.subr.mxu0 0.0
  %2762 = vmatpush1.msra.mxu0 0.0
  %2763 = vmatprep.subr.mxu0 0.0
  %2764 = vmatpush1.msra.mxu0 0.0
  %2765 = vmatprep.subr.mxu0 0.0
  %2766 = vmatpush1.msra.mxu0 0.0
  %2767 = vmatprep.subr.mxu0 0.0
  %2768 = vmatpush1.msra.mxu0 0.0
  %2769 = vmatprep.subr.mxu0 0.0
  %2770 = vmatpush1.msra.mxu0 0.0
  %2771 = vmatprep.mubr.f32.mxu0 %v2702
  %2772 = vmatmul.mubr.f32.gmra.mrb[0].mxu0 %v2697
  %v2773 = vpop.f32.mrb[0].mxu0
  %v2774 = vadd.f32 0.0, %v2773
  %v2775 = vpop.f32.mrb[0].mxu0
  %2776 = vmatprep.mubr.f32.mxu0 %v2705
  %2777 = vmatmul.mubr.f32.gmra.mrb[0].mxu0 %v2699
  %v2778 = vpop.f32.mrb[0].mxu0
  %v2779 = vadd.f32 0.0, %v2778
  %v2780 = vpop.f32.mrb[0].mxu0
  %2781 = vdwg.mxu0
  %v2782 = vld [vmem:[%s17] sm:$0xff]
  %v2783 = vld [vmem:[%s17 + $0x8] sm:$0xff]
  %v2784 = vld [vmem:[%s18] sm:$0xff]
  %v2785 = vld [vmem:[%s18 + $0x8] sm:$0xff]
  %v2786 = vsel %vm194, %v2774, 0.0
  %2787 = vadd.xlane.f32.xlu0 %v2786
  %v2788 = vpop.xlane.xlu0 %2787
  %v2789 = vsel %vm194, %v2779, 0.0
  %2790 = vadd.xlane.f32.xlu0 %v2789
  %v2791 = vpop.xlane.xlu0 %2790
  %v2792 = vmul.f32 %v2774, %v2774
  %v2793 = vmul.f32 %v2779, %v2779
  %v2794 = vsel %vm194, %v2792, 0.0
  %2795 = vadd.xlane.f32.xlu0 %v2794
  %v2796 = vpop.xlane.xlu0 %2795
  %v2797 = vsel %vm194, %v2793, 0.0
  %2798 = vadd.xlane.f32.xlu0 %v2797
  %v2799 = vpop.xlane.xlu0 %2798
  %v2800 = vmul.f32 %v2788, %v223
  %v2801 = vmul.f32 %v2791, %v223
  %v2802 = vmul.f32 %v2796, %v223
  %v2803 = vmul.f32 %v2799, %v223
  %v2804 = vmul.f32 %v2800, %v2800
  %v2805 = vmul.f32 %v2801, %v2801
  %v2806 = vsub.f32 %v2802, %v2804
  %v2807 = vsub.f32 %v2803, %v2805
  %v2808 = vmax.f32 %v2806, 0.0
  %v2809 = vmax.f32 %v2807, 0.0
  %v2810 = vsub.f32 %v2774, %v2800
  %v2811 = vsub.f32 %v2779, %v2801
  %v2812 = vadd.f32 %v2808, 1e-05
  %v2813 = vadd.f32 %v2809, 1e-05
  %v2814 = vrsqrt.pop %v2812
  %v2815 = vrsqrt.pop %v2813
  %v2816 = vmul.f32 %v2810, %v2814
  %v2817 = vmul.f32 %v2811, %v2815
  %2819 = vset.pattern.permute.xlu0 0
  %2820 = vperm.xlu0 %2819, %v2782
  %v2821 = vpop.permute.xlu0 %2820
  %2824 = vset.pattern.permute.xlu0 0
  %2825 = vperm.xlu0 %2824, %v2783
  %v2826 = vpop.permute.xlu0 %2825
  %v2828 = vmul.f32 %v2816, %v2821
  %v2829 = vmul.f32 %v2817, %v2826
  %2831 = vset.pattern.permute.xlu0 0
  %2832 = vperm.xlu0 %2831, %v2784
  %v2833 = vpop.permute.xlu0 %2832
  %2836 = vset.pattern.permute.xlu0 0
  %2837 = vperm.xlu0 %2836, %v2785
  %v2838 = vpop.permute.xlu0 %2837
  %v2840 = vadd.f32 %v2828, %v2833
  %v2841 = vadd.f32 %v2829, %v2838
  %v2842 = vadd.f32 %v2840, %v91
  %v2843 = vadd.f32 %v2841, %v92
  %2844 = vst.msk [vmem:[%s19] sm:$0xff] %vm194, %v2842
  %2845 = vst.msk [vmem:[%s19 + $0x8] sm:$0xff] %vm194, %v2843
  // Predicated region
  $region78: #{cbhg_forward.3} parent=0 // pred_check
    _
  $region79: #{cbhg_forward.3} parent=0 // pred_check_branch
    %2847 = sbr.rel (0) target = $region81
  $region80: #{cbhg_forward.3} parent=0 // pred_region
    _
  $region81: #{cbhg_forward.3} parent=0 // pred_fallthru
    _
  // Predicated region
  $region82: #{cbhg_forward.3} parent=0 // pred_check
    _
  $region83: #{cbhg_forward.3} parent=0 // pred_check_branch
    %2849 = sbr.rel (0) target = $region85
  $region84: #{cbhg_forward.3} parent=0 // pred_region
    _
  $region85: #{cbhg_forward.3} parent=0 // pred_fallthru
    _

</llo_original>
